<compile_context>
chip_gen: v7x
topology: tpu7x:2x2x1
jax: 0.10.0
libtpu: 0.0.40
codegen_flags: <defaults>
</compile_context>

<pallas_src>
import math
import functools

import jax
import jax.numpy as jnp
from jax.experimental import pallas as pl
from jax.experimental.pallas import tpu as pltpu

_VMEM_LIMIT = 64 * 1024 * 1024   # scoped-VMEM ceiling (plenty of headroom at these tiles)


# ----------------------------- small helpers ---------------------------------

def _layer_norm(x, eps=1e-6):
    mu = jnp.mean(x, axis=-1, keepdims=True)
    var = jnp.mean(jnp.square(x - mu), axis=-1, keepdims=True)
    return (x - mu) * jax.lax.rsqrt(var + eps)


def _gelu_tanh(x):
    c = math.sqrt(2.0 / math.pi)
    return 0.5 * x * (1.0 + jnp.tanh(c * (x + 0.044715 * x * x * x)))


def _compiler_params(dimension_semantics):
    return pltpu.CompilerParams(dimension_semantics=dimension_semantics,
                                vmem_limit_bytes=_VMEM_LIMIT)


def _pick_tile(total, target, quantum):
    if total <= target:
        return total
    t = (target // quantum) * quantum
    while t >= quantum:
        if total % t == 0:
            return t
        t -= quantum
    return total


def _split_heads(x, H, hd):                     # (B, L, D) -> (B, H, L, hd)
    B, L, _ = x.shape
    return x.reshape(B, L, H, hd).transpose(0, 2, 1, 3)


# --------------------- kernel 1: AdaLN modulation from temb -------------------

def _modulation_kernel(temb_ref, w1a_ref, b1a_ref, w1b_ref, b1b_ref,
                       moda_ref, modb_ref):
    t = temb_ref[0]                                              # (1, D) f32
    silu = (t * jax.nn.sigmoid(t)).astype(jnp.bfloat16)
    moda_ref[0] = jnp.dot(silu, w1a_ref[...],
                          preferred_element_type=jnp.float32) + b1a_ref[...]
    modb_ref[0] = jnp.dot(silu, w1b_ref[...],
                          preferred_element_type=jnp.float32) + b1b_ref[...]


def _modulation(temb3, w1a, b1a, w1b, b1b):
    B, _, D = temb3.shape
    return pl.pallas_call(
        _modulation_kernel,
        out_shape=(jax.ShapeDtypeStruct((B, 1, 6 * D), jnp.float32),
                   jax.ShapeDtypeStruct((B, 1, 2 * D), jnp.float32)),
        grid=(B,),
        in_specs=[
            pl.BlockSpec((1, 1, D), lambda b: (b, 0, 0)),
            pl.BlockSpec((D, 6 * D), lambda b: (0, 0)),
            pl.BlockSpec((1, 6 * D), lambda b: (0, 0)),
            pl.BlockSpec((D, 2 * D), lambda b: (0, 0)),
            pl.BlockSpec((1, 2 * D), lambda b: (0, 0)),
        ],
        out_specs=(pl.BlockSpec((1, 1, 6 * D), lambda b: (b, 0, 0)),
                   pl.BlockSpec((1, 1, 2 * D), lambda b: (b, 0, 0))),
        compiler_params=_compiler_params(("parallel",)),
    )(temb3, w1a, b1a, w1b, b1b)


# ---------------- kernel 2: modulated LayerNorm + linear projection -----------

def _adaln_linear_kernel(x_ref, shift_ref, scale_ref, w_ref, b_ref, o_ref):
    x = x_ref[0]                                                 # (TQ, D) f32
    xn = _layer_norm(x) * (1.0 + scale_ref[0]) + shift_ref[0]    # f32 elementwise
    o_ref[0] = (jnp.dot(xn.astype(jnp.bfloat16), w_ref[...],
                        preferred_element_type=jnp.float32)
                + b_ref[...]).astype(o_ref.dtype)


def _adaln_linear(x, shift, scale, w, b, tq):
    B, L, D = x.shape
    dout = w.shape[1]
    assert L % tq == 0
    return pl.pallas_call(
        _adaln_linear_kernel,
        out_shape=jax.ShapeDtypeStruct((B, L, dout), jnp.bfloat16),
        grid=(B, L // tq),
        in_specs=[
            pl.BlockSpec((1, tq, D), lambda b, i: (b, i, 0)),
            pl.BlockSpec((1, 1, D), lambda b, i: (b, 0, 0)),
            pl.BlockSpec((1, 1, D), lambda b, i: (b, 0, 0)),
            pl.BlockSpec((D, dout), lambda b, i: (0, 0)),
            pl.BlockSpec((1, dout), lambda b, i: (0, 0)),
        ],
        out_specs=pl.BlockSpec((1, tq, dout), lambda b, i: (b, i, 0)),
        compiler_params=_compiler_params(("parallel", "parallel")),
    )(x, shift, scale, w, b)


# --------------------- kernel 3: flash joint attention ------------------------

def _make_flash_kernel(H, hd, scale):
    def kernel(q_ref, k_ref, v_ref, o_ref, m_sc, l_sc, acc_sc):
        j = pl.program_id(2)

        @pl.when(j == 0)
        def _():
            m_sc[...] = jnp.full_like(m_sc, -jnp.inf)
            l_sc[...] = jnp.zeros_like(l_sc)
            acc_sc[...] = jnp.zeros_like(acc_sc)

        # 1/sqrt(hd) folded into q; heads batched in a single einsum, so there is no
        # per-head Python matmul loop and no q/k/v concatenates inside the kernel.
        q = q_ref[0] * scale                                     # (H, TQ, hd) bf16
        k = k_ref[0]                                             # (H, TK, hd) bf16
        v = v_ref[0]                                             # (H, TK, hd) bf16
        s = jnp.einsum("hqd,hkd->hqk", q, k,
                       preferred_element_type=jnp.float32)       # (H, TQ, TK) f32

        m_prev = m_sc[...]
        m_new = jnp.maximum(m_prev, jnp.max(s, axis=-1, keepdims=True))
        alpha = jnp.exp(m_prev - m_new)
        p = jnp.exp(s - m_new)                                   # f32 softmax stats
        l_sc[...] = alpha * l_sc[...] + jnp.sum(p, axis=-1, keepdims=True)
        acc_sc[...] = alpha * acc_sc[...] + jnp.einsum(
            "hqk,hkd->hqd", p.astype(jnp.bfloat16), v,
            preferred_element_type=jnp.float32)
        m_sc[...] = m_new

        @pl.when(j == pl.num_programs(2) - 1)
        def _():
            out = acc_sc[...] * pl.reciprocal(l_sc[...], approx=True)   # (H, TQ, hd)
            for h in range(H):   # store-only head assembly straight into the output slab
                o_ref[0, :, h * hd:(h + 1) * hd] = out[h].astype(o_ref.dtype)

    return kernel


def _flash_attention(q, k, v, tq, tk):
    B, H, lq, hd = q.shape
    lk = k.shape[2]
    D = H * hd
    assert lq % tq == 0 and lk % tk == 0
    kernel = _make_flash_kernel(H, hd, 1.0 / math.sqrt(hd))
    return pl.pallas_call(
        kernel,
        out_shape=jax.ShapeDtypeStruct((B, lq, D), jnp.bfloat16),
        grid=(B, lq // tq, lk // tk),
        in_specs=[
            pl.BlockSpec((1, H, tq, hd), lambda b, i, j: (b, 0, i, 0)),
            pl.BlockSpec((1, H, tk, hd), lambda b, i, j: (b, 0, j, 0)),
            pl.BlockSpec((1, H, tk, hd), lambda b, i, j: (b, 0, j, 0)),
        ],
        out_specs=pl.BlockSpec((1, tq, D), lambda b, i, j: (b, i, 0)),
        scratch_shapes=[pltpu.VMEM((H, tq, 1), jnp.float32),
                        pltpu.VMEM((H, tq, 1), jnp.float32),
                        pltpu.VMEM((H, tq, hd), jnp.float32)],
        compiler_params=_compiler_params(("parallel", "parallel", "arbitrary")),
    )(q, k, v)


# ------- kernel 4: out-proj + residual + LayerNorm + MLP (4D axis tiled) ------

def _outproj_mlp_kernel(attn_ref, ha_ref, gmsa_ref, smlp_ref, cmlp_ref, gmlp_ref,
                        wo_ref, bo_ref, wf1_ref, bf1_ref, wf2_ref, bf2_ref,
                        o_ref, hres_sc, na2_sc, acc_sc):
    kt = pl.program_id(2)

    @pl.when(kt == 0)
    def _():
        proj = jnp.dot(attn_ref[0], wo_ref[...],
                       preferred_element_type=jnp.float32) + bo_ref[...]
        h = ha_ref[0] + gmsa_ref[0] * proj                       # first residual, f32
        hres_sc[...] = h
        na2 = _layer_norm(h) * (1.0 + cmlp_ref[0]) + smlp_ref[0]
        na2_sc[...] = na2.astype(jnp.bfloat16)
        acc_sc[...] = jnp.zeros_like(acc_sc)

    # MLP hidden (4D) axis tiled over the grid: only a (TQ, TH) slab is live at a time;
    # wf1/wf2 tiles stream (double-buffered) while the accumulator stays in f32 VMEM.
    h1 = jnp.dot(na2_sc[...], wf1_ref[...],
                 preferred_element_type=jnp.float32) + bf1_ref[...]
    acc_sc[...] += jnp.dot(_gelu_tanh(h1).astype(jnp.bfloat16), wf2_ref[...],
                           preferred_element_type=jnp.float32)

    @pl.when(kt == pl.num_programs(2) - 1)
    def _():
        ff = acc_sc[...] + bf2_ref[...]
        o_ref[0] = (hres_sc[...] + gmlp_ref[0] * ff).astype(o_ref.dtype)


def _outproj_mlp(attn_a, ha, gate_msa, shift_mlp, scale_mlp, gate_mlp,
                 wo, bo, wf1, bf1, wf2, bf2, tq, th):
    B, La, D = ha.shape
    dh = wf1.shape[1]
    assert La % tq == 0 and dh % th == 0
    return pl.pallas_call(
        _outproj_mlp_kernel,
        out_shape=jax.ShapeDtypeStruct((B, La, D), jnp.float32),
        grid=(B, La // tq, dh // th),
        in_specs=[
            pl.BlockSpec((1, tq, D), lambda b, i, kt: (b, i, 0)),       # attn_a (bf16)
            pl.BlockSpec((1, tq, D), lambda b, i, kt: (b, i, 0)),       # ha residual (f32)
            pl.BlockSpec((1, 1, D), lambda b, i, kt: (b, 0, 0)),        # gate_msa
            pl.BlockSpec((1, 1, D), lambda b, i, kt: (b, 0, 0)),        # shift_mlp
            pl.BlockSpec((1, 1, D), lambda b, i, kt: (b, 0, 0)),        # scale_mlp
            pl.BlockSpec((1, 1, D), lambda b, i, kt: (b, 0, 0)),        # gate_mlp
            pl.BlockSpec((D, D), lambda b, i, kt: (0, 0)),              # a_to_out W
            pl.BlockSpec((1, D), lambda b, i, kt: (0, 0)),              # a_to_out b
            pl.BlockSpec((D, th), lambda b, i, kt: (0, kt)),            # ff W1 tile (stream)
            pl.BlockSpec((1, th), lambda b, i, kt: (0, kt)),            # ff b1 tile
            pl.BlockSpec((th, D), lambda b, i, kt: (kt, 0)),            # ff W2 tile (stream)
            pl.BlockSpec((1, D), lambda b, i, kt: (0, 0)),              # ff b2
        ],
        out_specs=pl.BlockSpec((1, tq, D), lambda b, i, kt: (b, i, 0)),
        scratch_shapes=[pltpu.VMEM((tq, D), jnp.float32),
                        pltpu.VMEM((tq, D), jnp.bfloat16),
                        pltpu.VMEM((tq, D), jnp.float32)],
        compiler_params=_compiler_params(("parallel", "parallel", "arbitrary")),
    )(attn_a, ha, gate_msa, shift_mlp, scale_mlp, gate_mlp,
      wo, bo, wf1, bf1, wf2, bf2)


# ------------------------------ full forward ----------------------------------

def joint_transformer_final_block(ha, hb, temb, params, num_heads,
                                  tq=None, tk=None, th=None):
    """ha: (B, La, D) f32, hb: (B, Lb, D) f32, temb: (B, D) f32 -> (out_a f32, hb)."""
    B, La, D = ha.shape
    Lb = hb.shape[1]
    H = num_heads
    hd = D // H
    L = La + Lb

    tq = tq if tq is not None else _pick_tile(La, 256, 8)
    tk = tk if tk is not None else _pick_tile(L, 256, 8)
    th = th if th is not None else _pick_tile(4 * D, 512, 128)
    tq_b = tq if Lb % tq == 0 else _pick_tile(Lb, tq, 8)

    temb3 = temb.reshape(B, 1, D)
    mod_a, mod_b = _modulation(temb3, params["w1a"], params["b1a"],
                               params["w1b"], params["b1b"])
    shift_msa = mod_a[:, :, 0 * D:1 * D]
    scale_msa = mod_a[:, :, 1 * D:2 * D]
    gate_msa = mod_a[:, :, 2 * D:3 * D]
    shift_mlp = mod_a[:, :, 3 * D:4 * D]
    scale_mlp = mod_a[:, :, 4 * D:5 * D]
    gate_mlp = mod_a[:, :, 5 * D:6 * D]
    scale_b = mod_b[:, :, 0:D]
    shift_b = mod_b[:, :, D:2 * D]

    # Branch a: full QKV.  Branch b: only the K,V columns of b_to_qkv are used, since
    # only_out_a=True means q_b never contributes to the kept output rows.
    qkv_a = _adaln_linear(ha, shift_msa, scale_msa,
                          params["waqkv"], params["baqkv"], tq)
    kv_b = _adaln_linear(hb, shift_b, scale_b,
                         params["wbqkv"][:, D:3 * D], params["bbqkv"][:, D:3 * D],
                         tq_b)

    # HBM-level layout glue (plain XLA): joint K/V assembly + head split.
    q = _split_heads(qkv_a[:, :, 0:D], H, hd)
    k = _split_heads(jnp.concatenate(
        [qkv_a[:, :, D:2 * D], kv_b[:, :, 0:D]], axis=1), H, hd)
    v = _split_heads(jnp.concatenate(
        [qkv_a[:, :, 2 * D:3 * D], kv_b[:, :, D:2 * D]], axis=1), H, hd)

    attn_a = _flash_attention(q, k, v, tq, tk)

    out_a = _outproj_mlp(attn_a, ha, gate_msa, shift_mlp, scale_mlp, gate_mlp,
                         params["waout"], params["baout"],
                         params["wf1"], params["bf1"],
                         params["wf2"], params["bf2"], tq, th)
    return out_a, hb


# --------------------------- params & reference --------------------------------

def init_params(key, D):
    ks = jax.random.split(key, 14)

    def w(k, fi, fo):   # weights stored in bf16 (MXU inputs)
        return (jax.random.normal(k, (fi, fo), jnp.float32) / math.sqrt(fi)
                ).astype(jnp.bfloat16)

    def b(k, fo):       # biases stay f32 (added after f32 accumulation)
        return jax.random.normal(k, (1, fo), jnp.float32) * 0.02

    return {
        "w1a": w(ks[0], D, 6 * D), "b1a": b(ks[1], 6 * D),      # norm1_a.linear
        "w1b": w(ks[2], D, 2 * D), "b1b": b(ks[3], 2 * D),      # norm1_b.linear
        "waqkv": w(ks[4], D, 3 * D), "baqkv": b(ks[5], 3 * D),  # attn.a_to_qkv
        "wbqkv": w(ks[6], D, 3 * D), "bbqkv": b(ks[7], 3 * D),  # attn.b_to_qkv
        "waout": w(ks[8], D, D), "baout": b(ks[9], D),          # attn.a_to_out
        "wf1": w(ks[10], D, 4 * D), "bf1": b(ks[11], 4 * D),    # ff_a[0]
        "wf2": w(ks[12], 4 * D, D), "bf2": b(ks[13], D),        # ff_a[2]
    }


def reference(ha, hb, temb, params, H):
    """Pure-JAX reference with the same reduced-precision semantics as the kernel
    (bf16 matmul inputs, f32 accumulation; the PyTorch module runs in fp16)."""
    B, La, D = ha.shape
    hd = D // H
    bf, f32 = jnp.bfloat16, jnp.float32

    def mm(x, w, b):
        return jnp.dot(x.astype(bf), w.astype(bf), preferred_element_type=f32) + b

    silu = temb * jax.nn.sigmoid(temb)
    emb_a = mm(silu, params["w1a"], params["b1a"][0])
    shift_msa, scale_msa, gate_msa, shift_mlp, scale_mlp, gate_mlp = jnp.split(
        emb_a, 6, axis=-1)
    emb_b = mm(silu, params["w1b"], params["b1b"][0])
    scale_b, shift_b = jnp.split(emb_b, 2, axis=-1)

    na = _layer_norm(ha) * (1.0 + scale_msa[:, None]) + shift_msa[:, None]
    nb = _layer_norm(hb) * (1.0 + scale_b[:, None]) + shift_b[:, None]

    qkv_a = mm(na, params["waqkv"], params["baqkv"][0]).astype(bf)
    qkv_b = mm(nb, params["wbqkv"], params["bbqkv"][0]).astype(bf)
    qkv = jnp.concatenate([qkv_a, qkv_b], axis=1)                # (B, L, 3D) bf16
    L = qkv.shape[1]
    qkv = qkv.reshape(B, L, 3, H, hd)
    q, k, v = qkv[:, :, 0], qkv[:, :, 1], qkv[:, :, 2]           # (B, L, H, hd) bf16
    q = q * (1.0 / math.sqrt(hd))                                # scale folded into q
    s = jnp.einsum("blhd,bmhd->bhlm", q, k, preferred_element_type=f32)
    p = jax.nn.softmax(s, axis=-1)
    o = jnp.einsum("bhlm,bmhd->blhd", p.astype(bf), v,
                   preferred_element_type=f32).reshape(B, L, D)
    attn_a = mm(o[:, :La], params["waout"], params["baout"][0])

    ha1 = ha + gate_msa[:, None] * attn_a
    na2 = _layer_norm(ha1) * (1.0 + scale_mlp[:, None]) + shift_mlp[:, None]
    h1 = mm(na2, params["wf1"], params["bf1"][0])
    ff = mm(_gelu_tanh(h1), params["wf2"], params["bf2"][0])
    ha2 = ha1 + gate_mlp[:, None] * ff
    return ha2, hb


if __name__ == "__main__":
    B, La, Lb, D, H = 2, 16, 16, 64, 2   # dim=64, num_attention_heads=2 -> head_dim=32

    key = jax.random.PRNGKey(0)
    k1, k2, k3, kp = jax.random.split(key, 4)
    hidden_a = jax.random.normal(k1, (B, La, D), jnp.float32)
    hidden_b = jax.random.normal(k2, (B, Lb, D), jnp.float32)
    temb = jax.random.normal(k3, (B, D), jnp.float32)
    params = init_params(kp, D)

    # Small tiles so the test actually exercises the seq / KV / MLP-hidden grid axes.
    fwd = jax.jit(functools.partial(joint_transformer_final_block,
                                    num_heads=H, tq=8, tk=16, th=128))
    out_a, out_b = fwd(hidden_a, hidden_b, temb, params)
    out_a = jax.block_until_ready(out_a)

    ref_a, ref_b = reference(hidden_a, hidden_b, temb, params, H)
    max_diff = float(jnp.max(jnp.abs(out_a - ref_a)))
    assert jnp.allclose(out_a, ref_a, rtol=2e-2, atol=2e-2), (
        f"mismatch vs reference, max abs diff = {max_diff}")
    assert jnp.array_equal(out_b, hidden_b), "hidden_states_b must pass through unchanged"

    print("KERNEL_OK")
</pallas_src>

<mosaic_0001>
module attributes {stable_mosaic.version = 11 : i64} {
  func.func @_adaln_linear_kernel(%arg0: i32, %arg1: i32, %arg2: memref<1x8x64xf32, #tpu.memory_space<vmem>>, %arg3: memref<1x1x64xf32, #tpu.memory_space<vmem>>, %arg4: memref<1x1x64xf32, #tpu.memory_space<vmem>>, %arg5: memref<64x192xbf16, #tpu.memory_space<vmem>>, %arg6: memref<1x192xf32, #tpu.memory_space<vmem>>, %arg7: memref<1x8x192xbf16, #tpu.memory_space<vmem>>) attributes {dimension_semantics = [#tpu.dimension_semantics<parallel>, #tpu.dimension_semantics<parallel>], iteration_bounds = array<i64: 2, 2>, scalar_prefetch = 0 : i64, scratch_operands = 0 : i64, tpu.core_type = #tpu.core_type<tc>, window_params = [{transform_indices = @transform_0, window_bounds = array<i64: 1, 8, 64>}, {transform_indices = @transform_1, window_bounds = array<i64: 1, 1, 64>}, {transform_indices = @transform_2, window_bounds = array<i64: 1, 1, 64>}, {pipeline_mode = #tpu.pipeline_mode<synchronous>, transform_indices = @transform_3, window_bounds = array<i64: 64, 192>}, {pipeline_mode = #tpu.pipeline_mode<synchronous>, transform_indices = @transform_4, window_bounds = array<i64: 1, 192>}, {transform_indices = @transform_5, window_bounds = array<i64: 1, 8, 192>}]} {
    %c0 = arith.constant 0 : index
    %c0_0 = arith.constant 0 : index
    %c0_1 = arith.constant 0 : index
    %0 = vector.load %arg2[%c0, %c0_0, %c0_1] : memref<1x8x64xf32, #tpu.memory_space<vmem>>, vector<1x8x64xf32>
    %1 = vector.shape_cast %0 : vector<1x8x64xf32> to vector<8x64xf32>
    %cst = arith.constant dense<0.000000e+00> : vector<8xf32>
    %2 = vector.multi_reduction <add>, %1, %cst [1] : vector<8x64xf32> to vector<8xf32>
    %3 = vector.shape_cast %2 : vector<8xf32> to vector<8x1xf32>
    %cst_2 = arith.constant 6.400000e+01 : f32
    %4 = vector.broadcast %cst_2 : f32 to vector<8x1xf32>
    %5 = arith.divf %3, %4 : vector<8x1xf32>
    %6 = vector.broadcast %5 : vector<8x1xf32> to vector<8x64xf32>
    %7 = arith.subf %1, %6 : vector<8x64xf32>
    %8 = arith.mulf %7, %7 : vector<8x64xf32>
    %cst_3 = arith.constant dense<0.000000e+00> : vector<8xf32>
    %9 = vector.multi_reduction <add>, %8, %cst_3 [1] : vector<8x64xf32> to vector<8xf32>
    %10 = vector.shape_cast %9 : vector<8xf32> to vector<8x1xf32>
    %cst_4 = arith.constant 6.400000e+01 : f32
    %11 = vector.broadcast %cst_4 : f32 to vector<8x1xf32>
    %12 = arith.divf %10, %11 : vector<8x1xf32>
    %13 = vector.broadcast %5 : vector<8x1xf32> to vector<8x64xf32>
    %14 = arith.subf %1, %13 : vector<8x64xf32>
    %cst_5 = arith.constant 9.99999997E-7 : f32
    %15 = vector.broadcast %cst_5 : f32 to vector<8x1xf32>
    %16 = arith.addf %12, %15 : vector<8x1xf32>
    %17 = math.rsqrt %16 : vector<8x1xf32>
    %18 = vector.broadcast %17 : vector<8x1xf32> to vector<8x64xf32>
    %19 = arith.mulf %14, %18 : vector<8x64xf32>
    %c0_6 = arith.constant 0 : index
    %c0_7 = arith.constant 0 : index
    %c0_8 = arith.constant 0 : index
    %20 = vector.load %arg4[%c0_6, %c0_7, %c0_8] : memref<1x1x64xf32, #tpu.memory_space<vmem>>, vector<1x1x64xf32>
    %21 = vector.shape_cast %20 : vector<1x1x64xf32> to vector<1x64xf32>
    %cst_9 = arith.constant 1.000000e+00 : f32
    %22 = vector.broadcast %cst_9 : f32 to vector<1x64xf32>
    %23 = arith.addf %22, %21 : vector<1x64xf32>
    %24 = vector.broadcast %23 : vector<1x64xf32> to vector<8x64xf32>
    %25 = arith.mulf %19, %24 : vector<8x64xf32>
    %c0_10 = arith.constant 0 : index
    %c0_11 = arith.constant 0 : index
    %c0_12 = arith.constant 0 : index
    %26 = vector.load %arg3[%c0_10, %c0_11, %c0_12] : memref<1x1x64xf32, #tpu.memory_space<vmem>>, vector<1x1x64xf32>
    %27 = vector.shape_cast %26 : vector<1x1x64xf32> to vector<1x64xf32>
    %28 = vector.broadcast %27 : vector<1x64xf32> to vector<8x64xf32>
    %29 = arith.addf %25, %28 : vector<8x64xf32>
    %30 = arith.truncf %29 : vector<8x64xf32> to vector<8x64xbf16>
    %c0_13 = arith.constant 0 : index
    %c0_14 = arith.constant 0 : index
    %31 = vector.load %arg5[%c0_13, %c0_14] : memref<64x192xbf16, #tpu.memory_space<vmem>>, vector<64x192xbf16>
    %cst_15 = arith.constant dense<0.000000e+00> : vector<8x192xf32>
    %32 = tpu.matmul %30, %31, %cst_15 {dimension_numbers = #tpu.dot_dimension_numbers<[1], [0], [0], [1], [0, 0, 1, 1], [], []>} : vector<8x64xbf16>, vector<64x192xbf16>, vector<8x192xf32> -> vector<8x192xf32>
    %c0_16 = arith.constant 0 : index
    %c0_17 = arith.constant 0 : index
    %33 = vector.load %arg6[%c0_16, %c0_17] : memref<1x192xf32, #tpu.memory_space<vmem>>, vector<1x192xf32>
    %34 = vector.broadcast %33 : vector<1x192xf32> to vector<8x192xf32>
    %35 = arith.addf %32, %34 : vector<8x192xf32>
    %36 = arith.truncf %35 : vector<8x192xf32> to vector<8x192xbf16>
    %c0_18 = arith.constant 0 : index
    %c0_19 = arith.constant 0 : index
    %c0_20 = arith.constant 0 : index
    %37 = vector.load %arg7[%c0_18, %c0_19, %c0_20] : memref<1x8x192xbf16, #tpu.memory_space<vmem>>, vector<1x8x192xbf16>
    %38 = vector.shape_cast %37 : vector<1x8x192xbf16> to vector<8x192xbf16>
    %39 = vector.shape_cast %36 : vector<8x192xbf16> to vector<1x8x192xbf16>
    tpu.vector_store %arg7[%c0_18, %c0_19, %c0_20], %39 {strides = array<i32>} : memref<1x8x192xbf16, #tpu.memory_space<vmem>>, vector<1x8x192xbf16>,
    return
  }
  func.func @transform_0(%arg0: i32, %arg1: i32) -> (i32, i32, i32) {
    %c0_i32 = arith.constant 0 : i32
    %c0_i32_0 = arith.constant 0 : i32
    return %arg0, %arg1, %c0_i32 : i32, i32, i32
  }
  func.func @transform_1(%arg0: i32, %arg1: i32) -> (i32, i32, i32) {
    %c0_i32 = arith.constant 0 : i32
    %c0_i32_0 = arith.constant 0 : i32
    %c0_i32_1 = arith.constant 0 : i32
    return %arg0, %c0_i32, %c0_i32_0 : i32, i32, i32
  }
  func.func @transform_2(%arg0: i32, %arg1: i32) -> (i32, i32, i32) {
    %c0_i32 = arith.constant 0 : i32
    %c0_i32_0 = arith.constant 0 : i32
    %c0_i32_1 = arith.constant 0 : i32
    return %arg0, %c0_i32, %c0_i32_0 : i32, i32, i32
  }
  func.func @transform_3(%arg0: i32, %arg1: i32) -> (i32, i32) {
    %c0_i32 = arith.constant 0 : i32
    %c0_i32_0 = arith.constant 0 : i32
    %c0_i32_1 = arith.constant 0 : i32
    return %c0_i32, %c0_i32_0 : i32, i32
  }
  func.func @transform_4(%arg0: i32, %arg1: i32) -> (i32, i32) {
    %c0_i32 = arith.constant 0 : i32
    %c0_i32_0 = arith.constant 0 : i32
    %c0_i32_1 = arith.constant 0 : i32
    return %c0_i32, %c0_i32_0 : i32, i32
  }
  func.func @transform_5(%arg0: i32, %arg1: i32) -> (i32, i32, i32) {
    %c0_i32 = arith.constant 0 : i32
    %c0_i32_0 = arith.constant 0 : i32
    return %arg0, %arg1, %c0_i32 : i32, i32, i32
  }
}

module attributes {stable_mosaic.version = 11 : i64} {
  func.func @_modulation_kernel(%arg0: i32, %arg1: memref<1x1x64xf32, #tpu.memory_space<vmem>>, %arg2: memref<64x384xbf16, #tpu.memory_space<vmem>>, %arg3: memref<1x384xf32, #tpu.memory_space<vmem>>, %arg4: memref<64x128xbf16, #tpu.memory_space<vmem>>, %arg5: memref<1x128xf32, #tpu.memory_space<vmem>>, %arg6: memref<1x1x384xf32, #tpu.memory_space<vmem>>, %arg7: memref<1x1x128xf32, #tpu.memory_space<vmem>>) attributes {dimension_semantics = [#tpu.dimension_semantics<parallel>], iteration_bounds = array<i64: 2>, scalar_prefetch = 0 : i64, scratch_operands = 0 : i64, tpu.core_type = #tpu.core_type<tc>, window_params = [{transform_indices = @transform_0, window_bounds = array<i64: 1, 1, 64>}, {pipeline_mode = #tpu.pipeline_mode<synchronous>, transform_indices = @transform_1, window_bounds = array<i64: 64, 384>}, {pipeline_mode = #tpu.pipeline_mode<synchronous>, transform_indices = @transform_2, window_bounds = array<i64: 1, 384>}, {pipeline_mode = #tpu.pipeline_mode<synchronous>, transform_indices = @transform_3, window_bounds = array<i64: 64, 128>}, {pipeline_mode = #tpu.pipeline_mode<synchronous>, transform_indices = @transform_4, window_bounds = array<i64: 1, 128>}, {transform_indices = @transform_5, window_bounds = array<i64: 1, 1, 384>}, {transform_indices = @transform_6, window_bounds = array<i64: 1, 1, 128>}]} {
    %c0 = arith.constant 0 : index
    %c0_0 = arith.constant 0 : index
    %c0_1 = arith.constant 0 : index
    %0 = vector.load %arg1[%c0, %c0_0, %c0_1] : memref<1x1x64xf32, #tpu.memory_space<vmem>>, vector<1x1x64xf32>
    %1 = vector.shape_cast %0 : vector<1x1x64xf32> to vector<1x64xf32>
    %2 = arith.negf %1 : vector<1x64xf32>
    %3 = math.exp %2 : vector<1x64xf32>
    %cst = arith.constant 1.000000e+00 : f32
    %4 = vector.broadcast %cst : f32 to vector<1x64xf32>
    %5 = arith.addf %4, %3 : vector<1x64xf32>
    %6 = arith.divf %4, %5 : vector<1x64xf32>
    %7 = arith.mulf %1, %6 : vector<1x64xf32>
    %8 = arith.truncf %7 : vector<1x64xf32> to vector<1x64xbf16>
    %c0_2 = arith.constant 0 : index
    %c0_3 = arith.constant 0 : index
    %9 = vector.load %arg2[%c0_2, %c0_3] : memref<64x384xbf16, #tpu.memory_space<vmem>>, vector<64x384xbf16>
    %cst_4 = arith.constant dense<0.000000e+00> : vector<1x384xf32>
    %10 = tpu.matmul %8, %9, %cst_4 {dimension_numbers = #tpu.dot_dimension_numbers<[1], [0], [0], [1], [0, 0, 1, 1], [], []>} : vector<1x64xbf16>, vector<64x384xbf16>, vector<1x384xf32> -> vector<1x384xf32>
    %c0_5 = arith.constant 0 : index
    %c0_6 = arith.constant 0 : index
    %11 = vector.load %arg3[%c0_5, %c0_6] : memref<1x384xf32, #tpu.memory_space<vmem>>, vector<1x384xf32>
    %12 = arith.addf %10, %11 : vector<1x384xf32>
    %c0_7 = arith.constant 0 : index
    %c0_8 = arith.constant 0 : index
    %c0_9 = arith.constant 0 : index
    %13 = vector.load %arg6[%c0_7, %c0_8, %c0_9] : memref<1x1x384xf32, #tpu.memory_space<vmem>>, vector<1x1x384xf32>
    %14 = vector.shape_cast %13 : vector<1x1x384xf32> to vector<1x384xf32>
    %15 = vector.shape_cast %12 : vector<1x384xf32> to vector<1x1x384xf32>
    tpu.vector_store %arg6[%c0_7, %c0_8, %c0_9], %15 {strides = array<i32>} : memref<1x1x384xf32, #tpu.memory_space<vmem>>, vector<1x1x384xf32>,
    %c0_10 = arith.constant 0 : index
    %c0_11 = arith.constant 0 : index
    %16 = vector.load %arg4[%c0_10, %c0_11] : memref<64x128xbf16, #tpu.memory_space<vmem>>, vector<64x128xbf16>
    %cst_12 = arith.constant dense<0.000000e+00> : vector<1x128xf32>
    %17 = tpu.matmul %8, %16, %cst_12 {dimension_numbers = #tpu.dot_dimension_numbers<[1], [0], [0], [1], [0, 0, 1, 1], [], []>} : vector<1x64xbf16>, vector<64x128xbf16>, vector<1x128xf32> -> vector<1x128xf32>
    %c0_13 = arith.constant 0 : index
    %c0_14 = arith.constant 0 : index
    %18 = vector.load %arg5[%c0_13, %c0_14] : memref<1x128xf32, #tpu.memory_space<vmem>>, vector<1x128xf32>
    %19 = arith.addf %17, %18 : vector<1x128xf32>
    %c0_15 = arith.constant 0 : index
    %c0_16 = arith.constant 0 : index
    %c0_17 = arith.constant 0 : index
    %20 = vector.load %arg7[%c0_15, %c0_16, %c0_17] : memref<1x1x128xf32, #tpu.memory_space<vmem>>, vector<1x1x128xf32>
    %21 = vector.shape_cast %20 : vector<1x1x128xf32> to vector<1x128xf32>
    %22 = vector.shape_cast %19 : vector<1x128xf32> to vector<1x1x128xf32>
    tpu.vector_store %arg7[%c0_15, %c0_16, %c0_17], %22 {strides = array<i32>} : memref<1x1x128xf32, #tpu.memory_space<vmem>>, vector<1x1x128xf32>,
    return
  }
  func.func @transform_0(%arg0: i32) -> (i32, i32, i32) {
    %c0_i32 = arith.constant 0 : i32
    %c0_i32_0 = arith.constant 0 : i32
    %c0_i32_1 = arith.constant 0 : i32
    return %arg0, %c0_i32, %c0_i32_0 : i32, i32, i32
  }
  func.func @transform_1(%arg0: i32) -> (i32, i32) {
    %c0_i32 = arith.constant 0 : i32
    %c0_i32_0 = arith.constant 0 : i32
    %c0_i32_1 = arith.constant 0 : i32
    return %c0_i32, %c0_i32_0 : i32, i32
  }
  func.func @transform_2(%arg0: i32) -> (i32, i32) {
    %c0_i32 = arith.constant 0 : i32
    %c0_i32_0 = arith.constant 0 : i32
    %c0_i32_1 = arith.constant 0 : i32
    return %c0_i32, %c0_i32_0 : i32, i32
  }
  func.func @transform_3(%arg0: i32) -> (i32, i32) {
    %c0_i32 = arith.constant 0 : i32
    %c0_i32_0 = arith.constant 0 : i32
    %c0_i32_1 = arith.constant 0 : i32
    return %c0_i32, %c0_i32_0 : i32, i32
  }
  func.func @transform_4(%arg0: i32) -> (i32, i32) {
    %c0_i32 = arith.constant 0 : i32
    %c0_i32_0 = arith.constant 0 : i32
    %c0_i32_1 = arith.constant 0 : i32
    return %c0_i32, %c0_i32_0 : i32, i32
  }
  func.func @transform_5(%arg0: i32) -> (i32, i32, i32) {
    %c0_i32 = arith.constant 0 : i32
    %c0_i32_0 = arith.constant 0 : i32
    %c0_i32_1 = arith.constant 0 : i32
    return %arg0, %c0_i32, %c0_i32_0 : i32, i32, i32
  }
  func.func @transform_6(%arg0: i32) -> (i32, i32, i32) {
    %c0_i32 = arith.constant 0 : i32
    %c0_i32_0 = arith.constant 0 : i32
    %c0_i32_1 = arith.constant 0 : i32
    return %arg0, %c0_i32, %c0_i32_0 : i32, i32, i32
  }
}

module attributes {stable_mosaic.version = 11 : i64} {
  func.func @_adaln_linear_kernel(%arg0: i32, %arg1: i32, %arg2: memref<1x8x64xf32, #tpu.memory_space<vmem>>, %arg3: memref<1x1x64xf32, #tpu.memory_space<vmem>>, %arg4: memref<1x1x64xf32, #tpu.memory_space<vmem>>, %arg5: memref<64x128xbf16, #tpu.memory_space<vmem>>, %arg6: memref<1x128xf32, #tpu.memory_space<vmem>>, %arg7: memref<1x8x128xbf16, #tpu.memory_space<vmem>>) attributes {dimension_semantics = [#tpu.dimension_semantics<parallel>, #tpu.dimension_semantics<parallel>], iteration_bounds = array<i64: 2, 2>, scalar_prefetch = 0 : i64, scratch_operands = 0 : i64, tpu.core_type = #tpu.core_type<tc>, window_params = [{transform_indices = @transform_0, window_bounds = array<i64: 1, 8, 64>}, {transform_indices = @transform_1, window_bounds = array<i64: 1, 1, 64>}, {transform_indices = @transform_2, window_bounds = array<i64: 1, 1, 64>}, {pipeline_mode = #tpu.pipeline_mode<synchronous>, transform_indices = @transform_3, window_bounds = array<i64: 64, 128>}, {pipeline_mode = #tpu.pipeline_mode<synchronous>, transform_indices = @transform_4, window_bounds = array<i64: 1, 128>}, {transform_indices = @transform_5, window_bounds = array<i64: 1, 8, 128>}]} {
    %c0 = arith.constant 0 : index
    %c0_0 = arith.constant 0 : index
    %c0_1 = arith.constant 0 : index
    %0 = vector.load %arg2[%c0, %c0_0, %c0_1] : memref<1x8x64xf32, #tpu.memory_space<vmem>>, vector<1x8x64xf32>
    %1 = vector.shape_cast %0 : vector<1x8x64xf32> to vector<8x64xf32>
    %cst = arith.constant dense<0.000000e+00> : vector<8xf32>
    %2 = vector.multi_reduction <add>, %1, %cst [1] : vector<8x64xf32> to vector<8xf32>
    %3 = vector.shape_cast %2 : vector<8xf32> to vector<8x1xf32>
    %cst_2 = arith.constant 6.400000e+01 : f32
    %4 = vector.broadcast %cst_2 : f32 to vector<8x1xf32>
    %5 = arith.divf %3, %4 : vector<8x1xf32>
    %6 = vector.broadcast %5 : vector<8x1xf32> to vector<8x64xf32>
    %7 = arith.subf %1, %6 : vector<8x64xf32>
    %8 = arith.mulf %7, %7 : vector<8x64xf32>
    %cst_3 = arith.constant dense<0.000000e+00> : vector<8xf32>
    %9 = vector.multi_reduction <add>, %8, %cst_3 [1] : vector<8x64xf32> to vector<8xf32>
    %10 = vector.shape_cast %9 : vector<8xf32> to vector<8x1xf32>
    %cst_4 = arith.constant 6.400000e+01 : f32
    %11 = vector.broadcast %cst_4 : f32 to vector<8x1xf32>
    %12 = arith.divf %10, %11 : vector<8x1xf32>
    %13 = vector.broadcast %5 : vector<8x1xf32> to vector<8x64xf32>
    %14 = arith.subf %1, %13 : vector<8x64xf32>
    %cst_5 = arith.constant 9.99999997E-7 : f32
    %15 = vector.broadcast %cst_5 : f32 to vector<8x1xf32>
    %16 = arith.addf %12, %15 : vector<8x1xf32>
    %17 = math.rsqrt %16 : vector<8x1xf32>
    %18 = vector.broadcast %17 : vector<8x1xf32> to vector<8x64xf32>
    %19 = arith.mulf %14, %18 : vector<8x64xf32>
    %c0_6 = arith.constant 0 : index
    %c0_7 = arith.constant 0 : index
    %c0_8 = arith.constant 0 : index
    %20 = vector.load %arg4[%c0_6, %c0_7, %c0_8] : memref<1x1x64xf32, #tpu.memory_space<vmem>>, vector<1x1x64xf32>
    %21 = vector.shape_cast %20 : vector<1x1x64xf32> to vector<1x64xf32>
    %cst_9 = arith.constant 1.000000e+00 : f32
    %22 = vector.broadcast %cst_9 : f32 to vector<1x64xf32>
    %23 = arith.addf %22, %21 : vector<1x64xf32>
    %24 = vector.broadcast %23 : vector<1x64xf32> to vector<8x64xf32>
    %25 = arith.mulf %19, %24 : vector<8x64xf32>
    %c0_10 = arith.constant 0 : index
    %c0_11 = arith.constant 0 : index
    %c0_12 = arith.constant 0 : index
    %26 = vector.load %arg3[%c0_10, %c0_11, %c0_12] : memref<1x1x64xf32, #tpu.memory_space<vmem>>, vector<1x1x64xf32>
    %27 = vector.shape_cast %26 : vector<1x1x64xf32> to vector<1x64xf32>
    %28 = vector.broadcast %27 : vector<1x64xf32> to vector<8x64xf32>
    %29 = arith.addf %25, %28 : vector<8x64xf32>
    %30 = arith.truncf %29 : vector<8x64xf32> to vector<8x64xbf16>
    %c0_13 = arith.constant 0 : index
    %c0_14 = arith.constant 0 : index
    %31 = vector.load %arg5[%c0_13, %c0_14] : memref<64x128xbf16, #tpu.memory_space<vmem>>, vector<64x128xbf16>
    %cst_15 = arith.constant dense<0.000000e+00> : vector<8x128xf32>
    %32 = tpu.matmul %30, %31, %cst_15 {dimension_numbers = #tpu.dot_dimension_numbers<[1], [0], [0], [1], [0, 0, 1, 1], [], []>} : vector<8x64xbf16>, vector<64x128xbf16>, vector<8x128xf32> -> vector<8x128xf32>
    %c0_16 = arith.constant 0 : index
    %c0_17 = arith.constant 0 : index
    %33 = vector.load %arg6[%c0_16, %c0_17] : memref<1x128xf32, #tpu.memory_space<vmem>>, vector<1x128xf32>
    %34 = vector.broadcast %33 : vector<1x128xf32> to vector<8x128xf32>
    %35 = arith.addf %32, %34 : vector<8x128xf32>
    %36 = arith.truncf %35 : vector<8x128xf32> to vector<8x128xbf16>
    %c0_18 = arith.constant 0 : index
    %c0_19 = arith.constant 0 : index
    %c0_20 = arith.constant 0 : index
    %37 = vector.load %arg7[%c0_18, %c0_19, %c0_20] : memref<1x8x128xbf16, #tpu.memory_space<vmem>>, vector<1x8x128xbf16>
    %38 = vector.shape_cast %37 : vector<1x8x128xbf16> to vector<8x128xbf16>
    %39 = vector.shape_cast %36 : vector<8x128xbf16> to vector<1x8x128xbf16>
    tpu.vector_store %arg7[%c0_18, %c0_19, %c0_20], %39 {strides = array<i32>} : memref<1x8x128xbf16, #tpu.memory_space<vmem>>, vector<1x8x128xbf16>,
    return
  }
  func.func @transform_0(%arg0: i32, %arg1: i32) -> (i32, i32, i32) {
    %c0_i32 = arith.constant 0 : i32
    %c0_i32_0 = arith.constant 0 : i32
    return %arg0, %arg1, %c0_i32 : i32, i32, i32
  }
  func.func @transform_1(%arg0: i32, %arg1: i32) -> (i32, i32, i32) {
    %c0_i32 = arith.constant 0 : i32
    %c0_i32_0 = arith.constant 0 : i32
    %c0_i32_1 = arith.constant 0 : i32
    return %arg0, %c0_i32, %c0_i32_0 : i32, i32, i32
  }
  func.func @transform_2(%arg0: i32, %arg1: i32) -> (i32, i32, i32) {
    %c0_i32 = arith.constant 0 : i32
    %c0_i32_0 = arith.constant 0 : i32
    %c0_i32_1 = arith.constant 0 : i32
    return %arg0, %c0_i32, %c0_i32_0 : i32, i32, i32
  }
  func.func @transform_3(%arg0: i32, %arg1: i32) -> (i32, i32) {
    %c0_i32 = arith.constant 0 : i32
    %c0_i32_0 = arith.constant 0 : i32
    %c0_i32_1 = arith.constant 0 : i32
    return %c0_i32, %c0_i32_0 : i32, i32
  }
  func.func @transform_4(%arg0: i32, %arg1: i32) -> (i32, i32) {
    %c0_i32 = arith.constant 0 : i32
    %c0_i32_0 = arith.constant 0 : i32
    %c0_i32_1 = arith.constant 0 : i32
    return %c0_i32, %c0_i32_0 : i32, i32
  }
  func.func @transform_5(%arg0: i32, %arg1: i32) -> (i32, i32, i32) {
    %c0_i32 = arith.constant 0 : i32
    %c0_i32_0 = arith.constant 0 : i32
    return %arg0, %arg1, %c0_i32 : i32, i32, i32
  }
}

module attributes {stable_mosaic.version = 11 : i64} {
  func.func @_outproj_mlp_kernel(%arg0: i32, %arg1: i32, %arg2: i32, %arg3: memref<1x8x64xbf16, #tpu.memory_space<vmem>>, %arg4: memref<1x8x64xf32, #tpu.memory_space<vmem>>, %arg5: memref<1x1x64xf32, #tpu.memory_space<vmem>>, %arg6: memref<1x1x64xf32, #tpu.memory_space<vmem>>, %arg7: memref<1x1x64xf32, #tpu.memory_space<vmem>>, %arg8: memref<1x1x64xf32, #tpu.memory_space<vmem>>, %arg9: memref<64x64xbf16, #tpu.memory_space<vmem>>, %arg10: memref<1x64xf32, #tpu.memory_space<vmem>>, %arg11: memref<64x128xbf16, #tpu.memory_space<vmem>>, %arg12: memref<1x128xf32, #tpu.memory_space<vmem>>, %arg13: memref<128x64xbf16, #tpu.memory_space<vmem>>, %arg14: memref<1x64xf32, #tpu.memory_space<vmem>>, %arg15: memref<1x8x64xf32, #tpu.memory_space<vmem>>, %arg16: memref<8x64xf32, #tpu.memory_space<vmem>>, %arg17: memref<8x64xbf16, #tpu.memory_space<vmem>>, %arg18: memref<8x64xf32, #tpu.memory_space<vmem>>) attributes {dimension_semantics = [#tpu.dimension_semantics<parallel>, #tpu.dimension_semantics<parallel>, #tpu.dimension_semantics<arbitrary>], iteration_bounds = array<i64: 2, 2, 2>, scalar_prefetch = 0 : i64, scratch_operands = 3 : i64, tpu.core_type = #tpu.core_type<tc>, window_params = [{transform_indices = @transform_0, window_bounds = array<i64: 1, 8, 64>}, {transform_indices = @transform_1, window_bounds = array<i64: 1, 8, 64>}, {transform_indices = @transform_2, window_bounds = array<i64: 1, 1, 64>}, {transform_indices = @transform_3, window_bounds = array<i64: 1, 1, 64>}, {transform_indices = @transform_4, window_bounds = array<i64: 1, 1, 64>}, {transform_indices = @transform_5, window_bounds = array<i64: 1, 1, 64>}, {pipeline_mode = #tpu.pipeline_mode<synchronous>, transform_indices = @transform_6, window_bounds = array<i64: 64, 64>}, {pipeline_mode = #tpu.pipeline_mode<synchronous>, transform_indices = @transform_7, window_bounds = array<i64: 1, 64>}, {transform_indices = @transform_8, window_bounds = array<i64: 64, 128>}, {transform_indices = @transform_9, window_bounds = array<i64: 1, 128>}, {transform_indices = @transform_10, window_bounds = array<i64: 128, 64>}, {pipeline_mode = #tpu.pipeline_mode<synchronous>, transform_indices = @transform_11, window_bounds = array<i64: 1, 64>}, {transform_indices = @transform_12, window_bounds = array<i64: 1, 8, 64>}]} {
    %c0_i32 = arith.constant 0 : i32
    %0 = arith.cmpi eq, %arg2, %c0_i32 : i32
    %1 = arith.extui %0 : i1 to i32
    %c0_i32_0 = arith.constant 0 : i32
    %2 = arith.cmpi ne, %1, %c0_i32_0 : i32
    scf.if %2 {
      %c0_18 = arith.constant 0 : index
      %c0_19 = arith.constant 0 : index
      %c0_20 = arith.constant 0 : index
      %31 = vector.load %arg3[%c0_18, %c0_19, %c0_20] : memref<1x8x64xbf16, #tpu.memory_space<vmem>>, vector<1x8x64xbf16>
      %32 = vector.shape_cast %31 : vector<1x8x64xbf16> to vector<8x64xbf16>
      %c0_21 = arith.constant 0 : index
      %c0_22 = arith.constant 0 : index
      %33 = vector.load %arg9[%c0_21, %c0_22] : memref<64x64xbf16, #tpu.memory_space<vmem>>, vector<64x64xbf16>
      %cst_23 = arith.constant dense<0.000000e+00> : vector<8x64xf32>
      %34 = tpu.matmul %32, %33, %cst_23 {dimension_numbers = #tpu.dot_dimension_numbers<[1], [0], [0], [1], [0, 0, 1, 1], [], []>} : vector<8x64xbf16>, vector<64x64xbf16>, vector<8x64xf32> -> vector<8x64xf32>
      %c0_24 = arith.constant 0 : index
      %c0_25 = arith.constant 0 : index
      %35 = vector.load %arg10[%c0_24, %c0_25] : memref<1x64xf32, #tpu.memory_space<vmem>>, vector<1x64xf32>
      %36 = vector.broadcast %35 : vector<1x64xf32> to vector<8x64xf32>
      %37 = arith.addf %34, %36 : vector<8x64xf32>
      %c0_26 = arith.constant 0 : index
      %c0_27 = arith.constant 0 : index
      %c0_28 = arith.constant 0 : index
      %38 = vector.load %arg4[%c0_26, %c0_27, %c0_28] : memref<1x8x64xf32, #tpu.memory_space<vmem>>, vector<1x8x64xf32>
      %39 = vector.shape_cast %38 : vector<1x8x64xf32> to vector<8x64xf32>
      %c0_29 = arith.constant 0 : index
      %c0_30 = arith.constant 0 : index
      %c0_31 = arith.constant 0 : index
      %40 = vector.load %arg5[%c0_29, %c0_30, %c0_31] : memref<1x1x64xf32, #tpu.memory_space<vmem>>, vector<1x1x64xf32>
      %41 = vector.shape_cast %40 : vector<1x1x64xf32> to vector<1x64xf32>
      %42 = vector.broadcast %41 : vector<1x64xf32> to vector<8x64xf32>
      %43 = arith.mulf %42, %37 : vector<8x64xf32>
      %44 = arith.addf %39, %43 : vector<8x64xf32>
      %c0_32 = arith.constant 0 : index
      %c0_33 = arith.constant 0 : index
      %45 = vector.load %arg16[%c0_32, %c0_33] : memref<8x64xf32, #tpu.memory_space<vmem>>, vector<8x64xf32>
      tpu.vector_store %arg16[%c0_32, %c0_33], %44 {strides = array<i32>} : memref<8x64xf32, #tpu.memory_space<vmem>>, vector<8x64xf32>,
      %cst_34 = arith.constant dense<0.000000e+00> : vector<8xf32>
      %46 = vector.multi_reduction <add>, %44, %cst_34 [1] : vector<8x64xf32> to vector<8xf32>
      %47 = vector.shape_cast %46 : vector<8xf32> to vector<8x1xf32>
      %cst_35 = arith.constant 6.400000e+01 : f32
      %48 = vector.broadcast %cst_35 : f32 to vector<8x1xf32>
      %49 = arith.divf %47, %48 : vector<8x1xf32>
      %50 = vector.broadcast %49 : vector<8x1xf32> to vector<8x64xf32>
      %51 = arith.subf %44, %50 : vector<8x64xf32>
      %52 = arith.mulf %51, %51 : vector<8x64xf32>
      %cst_36 = arith.constant dense<0.000000e+00> : vector<8xf32>
      %53 = vector.multi_reduction <add>, %52, %cst_36 [1] : vector<8x64xf32> to vector<8xf32>
      %54 = vector.shape_cast %53 : vector<8xf32> to vector<8x1xf32>
      %cst_37 = arith.constant 6.400000e+01 : f32
      %55 = vector.broadcast %cst_37 : f32 to vector<8x1xf32>
      %56 = arith.divf %54, %55 : vector<8x1xf32>
      %57 = vector.broadcast %49 : vector<8x1xf32> to vector<8x64xf32>
      %58 = arith.subf %44, %57 : vector<8x64xf32>
      %cst_38 = arith.constant 9.99999997E-7 : f32
      %59 = vector.broadcast %cst_38 : f32 to vector<8x1xf32>
      %60 = arith.addf %56, %59 : vector<8x1xf32>
      %61 = math.rsqrt %60 : vector<8x1xf32>
      %62 = vector.broadcast %61 : vector<8x1xf32> to vector<8x64xf32>
      %63 = arith.mulf %58, %62 : vector<8x64xf32>
      %c0_39 = arith.constant 0 : index
      %c0_40 = arith.constant 0 : index
      %c0_41 = arith.constant 0 : index
      %64 = vector.load %arg7[%c0_39, %c0_40, %c0_41] : memref<1x1x64xf32, #tpu.memory_space<vmem>>, vector<1x1x64xf32>
      %65 = vector.shape_cast %64 : vector<1x1x64xf32> to vector<1x64xf32>
      %cst_42 = arith.constant 1.000000e+00 : f32
      %66 = vector.broadcast %cst_42 : f32 to vector<1x64xf32>
      %67 = arith.addf %66, %65 : vector<1x64xf32>
      %68 = vector.broadcast %67 : vector<1x64xf32> to vector<8x64xf32>
      %69 = arith.mulf %63, %68 : vector<8x64xf32>
      %c0_43 = arith.constant 0 : index
      %c0_44 = arith.constant 0 : index
      %c0_45 = arith.constant 0 : index
      %70 = vector.load %arg6[%c0_43, %c0_44, %c0_45] : memref<1x1x64xf32, #tpu.memory_space<vmem>>, vector<1x1x64xf32>
      %71 = vector.shape_cast %70 : vector<1x1x64xf32> to vector<1x64xf32>
      %72 = vector.broadcast %71 : vector<1x64xf32> to vector<8x64xf32>
      %73 = arith.addf %69, %72 : vector<8x64xf32>
      %74 = arith.truncf %73 : vector<8x64xf32> to vector<8x64xbf16>
      %c0_46 = arith.constant 0 : index
      %c0_47 = arith.constant 0 : index
      %75 = vector.load %arg17[%c0_46, %c0_47] : memref<8x64xbf16, #tpu.memory_space<vmem>>, vector<8x64xbf16>
      tpu.vector_store %arg17[%c0_46, %c0_47], %74 {strides = array<i32>} : memref<8x64xbf16, #tpu.memory_space<vmem>>, vector<8x64xbf16>,
      %cst_48 = arith.constant 0.000000e+00 : f32
      %76 = vector.broadcast %cst_48 : f32 to vector<8x64xf32>
      %c0_49 = arith.constant 0 : index
      %c0_50 = arith.constant 0 : index
      %77 = vector.load %arg18[%c0_49, %c0_50] : memref<8x64xf32, #tpu.memory_space<vmem>>, vector<8x64xf32>
      tpu.vector_store %arg18[%c0_49, %c0_50], %76 {strides = array<i32>} : memref<8x64xf32, #tpu.memory_space<vmem>>, vector<8x64xf32>,
    } else {
    }
    %c0 = arith.constant 0 : index
    %c0_1 = arith.constant 0 : index
    %3 = vector.load %arg17[%c0, %c0_1] : memref<8x64xbf16, #tpu.memory_space<vmem>>, vector<8x64xbf16>
    %c0_2 = arith.constant 0 : index
    %c0_3 = arith.constant 0 : index
    %4 = vector.load %arg11[%c0_2, %c0_3] : memref<64x128xbf16, #tpu.memory_space<vmem>>, vector<64x128xbf16>
    %cst = arith.constant dense<0.000000e+00> : vector<8x128xf32>
    %5 = tpu.matmul %3, %4, %cst {dimension_numbers = #tpu.dot_dimension_numbers<[1], [0], [0], [1], [0, 0, 1, 1], [], []>} : vector<8x64xbf16>, vector<64x128xbf16>, vector<8x128xf32> -> vector<8x128xf32>
    %c0_4 = arith.constant 0 : index
    %c0_5 = arith.constant 0 : index
    %6 = vector.load %arg12[%c0_4, %c0_5] : memref<1x128xf32, #tpu.memory_space<vmem>>, vector<1x128xf32>
    %7 = vector.broadcast %6 : vector<1x128xf32> to vector<8x128xf32>
    %8 = arith.addf %5, %7 : vector<8x128xf32>
    %c0_6 = arith.constant 0 : index
    %c0_7 = arith.constant 0 : index
    %9 = vector.load %arg18[%c0_6, %c0_7] : memref<8x64xf32, #tpu.memory_space<vmem>>, vector<8x64xf32>
    %cst_8 = arith.constant 5.000000e-01 : f32
    %10 = vector.broadcast %cst_8 : f32 to vector<8x128xf32>
    %11 = arith.mulf %10, %8 : vector<8x128xf32>
    %cst_9 = arith.constant 4.471500e-02 : f32
    %12 = vector.broadcast %cst_9 : f32 to vector<8x128xf32>
    %13 = arith.mulf %12, %8 : vector<8x128xf32>
    %14 = arith.mulf %13, %8 : vector<8x128xf32>
    %15 = arith.mulf %14, %8 : vector<8x128xf32>
    %16 = arith.addf %8, %15 : vector<8x128xf32>
    %cst_10 = arith.constant 0.797884583 : f32
    %17 = vector.broadcast %cst_10 : f32 to vector<8x128xf32>
    %18 = arith.mulf %17, %16 : vector<8x128xf32>
    %19 = math.tanh %18 : vector<8x128xf32>
    %cst_11 = arith.constant 1.000000e+00 : f32
    %20 = vector.broadcast %cst_11 : f32 to vector<8x128xf32>
    %21 = arith.addf %20, %19 : vector<8x128xf32>
    %22 = arith.mulf %11, %21 : vector<8x128xf32>
    %23 = arith.truncf %22 : vector<8x128xf32> to vector<8x128xbf16>
    %c0_12 = arith.constant 0 : index
    %c0_13 = arith.constant 0 : index
    %24 = vector.load %arg13[%c0_12, %c0_13] : memref<128x64xbf16, #tpu.memory_space<vmem>>, vector<128x64xbf16>
    %cst_14 = arith.constant dense<0.000000e+00> : vector<8x64xf32>
    %25 = tpu.matmul %23, %24, %cst_14 {dimension_numbers = #tpu.dot_dimension_numbers<[1], [0], [0], [1], [0, 0, 1, 1], [], []>} : vector<8x128xbf16>, vector<128x64xbf16>, vector<8x64xf32> -> vector<8x64xf32>
    %26 = arith.addf %9, %25 : vector<8x64xf32>
    %c0_15 = arith.constant 0 : index
    %c0_16 = arith.constant 0 : index
    %27 = vector.load %arg18[%c0_15, %c0_16] : memref<8x64xf32, #tpu.memory_space<vmem>>, vector<8x64xf32>
    tpu.vector_store %arg18[%c0_15, %c0_16], %26 {strides = array<i32>} : memref<8x64xf32, #tpu.memory_space<vmem>>, vector<8x64xf32>,
    %c1_i32 = arith.constant 1 : i32
    %28 = arith.cmpi eq, %arg2, %c1_i32 : i32
    %29 = arith.extui %28 : i1 to i32
    %c0_i32_17 = arith.constant 0 : i32
    %30 = arith.cmpi ne, %29, %c0_i32_17 : i32
    scf.if %30 {
      %c0_18 = arith.constant 0 : index
      %c0_19 = arith.constant 0 : index
      %31 = vector.load %arg18[%c0_18, %c0_19] : memref<8x64xf32, #tpu.memory_space<vmem>>, vector<8x64xf32>
      %c0_20 = arith.constant 0 : index
      %c0_21 = arith.constant 0 : index
      %32 = vector.load %arg14[%c0_20, %c0_21] : memref<1x64xf32, #tpu.memory_space<vmem>>, vector<1x64xf32>
      %33 = vector.broadcast %32 : vector<1x64xf32> to vector<8x64xf32>
      %34 = arith.addf %31, %33 : vector<8x64xf32>
      %c0_22 = arith.constant 0 : index
      %c0_23 = arith.constant 0 : index
      %35 = vector.load %arg16[%c0_22, %c0_23] : memref<8x64xf32, #tpu.memory_space<vmem>>, vector<8x64xf32>
      %c0_24 = arith.constant 0 : index
      %c0_25 = arith.constant 0 : index
      %c0_26 = arith.constant 0 : index
      %36 = vector.load %arg8[%c0_24, %c0_25, %c0_26] : memref<1x1x64xf32, #tpu.memory_space<vmem>>, vector<1x1x64xf32>
      %37 = vector.shape_cast %36 : vector<1x1x64xf32> to vector<1x64xf32>
      %38 = vector.broadcast %37 : vector<1x64xf32> to vector<8x64xf32>
      %39 = arith.mulf %38, %34 : vector<8x64xf32>
      %40 = arith.addf %35, %39 : vector<8x64xf32>
      %c0_27 = arith.constant 0 : index
      %c0_28 = arith.constant 0 : index
      %c0_29 = arith.constant 0 : index
      %41 = vector.load %arg15[%c0_27, %c0_28, %c0_29] : memref<1x8x64xf32, #tpu.memory_space<vmem>>, vector<1x8x64xf32>
      %42 = vector.shape_cast %41 : vector<1x8x64xf32> to vector<8x64xf32>
      %43 = vector.shape_cast %40 : vector<8x64xf32> to vector<1x8x64xf32>
      tpu.vector_store %arg15[%c0_27, %c0_28, %c0_29], %43 {strides = array<i32>} : memref<1x8x64xf32, #tpu.memory_space<vmem>>, vector<1x8x64xf32>,
    } else {
    }
    return
  }
  func.func @transform_0(%arg0: i32, %arg1: i32, %arg2: i32) -> (i32, i32, i32) {
    %c0_i32 = arith.constant 0 : i32
    %c0_i32_0 = arith.constant 0 : i32
    return %arg0, %arg1, %c0_i32 : i32, i32, i32
  }
  func.func @transform_1(%arg0: i32, %arg1: i32, %arg2: i32) -> (i32, i32, i32) {
    %c0_i32 = arith.constant 0 : i32
    %c0_i32_0 = arith.constant 0 : i32
    return %arg0, %arg1, %c0_i32 : i32, i32, i32
  }
  func.func @transform_2(%arg0: i32, %arg1: i32, %arg2: i32) -> (i32, i32, i32) {
    %c0_i32 = arith.constant 0 : i32
    %c0_i32_0 = arith.constant 0 : i32
    %c0_i32_1 = arith.constant 0 : i32
    return %arg0, %c0_i32, %c0_i32_0 : i32, i32, i32
  }
  func.func @transform_3(%arg0: i32, %arg1: i32, %arg2: i32) -> (i32, i32, i32) {
    %c0_i32 = arith.constant 0 : i32
    %c0_i32_0 = arith.constant 0 : i32
    %c0_i32_1 = arith.constant 0 : i32
    return %arg0, %c0_i32, %c0_i32_0 : i32, i32, i32
  }
  func.func @transform_4(%arg0: i32, %arg1: i32, %arg2: i32) -> (i32, i32, i32) {
    %c0_i32 = arith.constant 0 : i32
    %c0_i32_0 = arith.constant 0 : i32
    %c0_i32_1 = arith.constant 0 : i32
    return %arg0, %c0_i32, %c0_i32_0 : i32, i32, i32
  }
  func.func @transform_5(%arg0: i32, %arg1: i32, %arg2: i32) -> (i32, i32, i32) {
    %c0_i32 = arith.constant 0 : i32
    %c0_i32_0 = arith.constant 0 : i32
    %c0_i32_1 = arith.constant 0 : i32
    return %arg0, %c0_i32, %c0_i32_0 : i32, i32, i32
  }
  func.func @transform_6(%arg0: i32, %arg1: i32, %arg2: i32) -> (i32, i32) {
    %c0_i32 = arith.constant 0 : i32
    %c0_i32_0 = arith.constant 0 : i32
    %c0_i32_1 = arith.constant 0 : i32
    return %c0_i32, %c0_i32_0 : i32, i32
  }
  func.func @transform_7(%arg0: i32, %arg1: i32, %arg2: i32) -> (i32, i32) {
    %c0_i32 = arith.constant 0 : i32
    %c0_i32_0 = arith.constant 0 : i32
    %c0_i32_1 = arith.constant 0 : i32
    return %c0_i32, %c0_i32_0 : i32, i32
  }
  func.func @transform_8(%arg0: i32, %arg1: i32, %arg2: i32) -> (i32, i32) {
    %c0_i32 = arith.constant 0 : i32
    %c0_i32_0 = arith.constant 0 : i32
    return %c0_i32, %arg2 : i32, i32
  }
  func.func @transform_9(%arg0: i32, %arg1: i32, %arg2: i32) -> (i32, i32) {
    %c0_i32 = arith.constant 0 : i32
    %c0_i32_0 = arith.constant 0 : i32
    return %c0_i32, %arg2 : i32, i32
  }
  func.func @transform_10(%arg0: i32, %arg1: i32, %arg2: i32) -> (i32, i32) {
    %c0_i32 = arith.constant 0 : i32
    %c0_i32_0 = arith.constant 0 : i32
    return %arg2, %c0_i32 : i32, i32
  }
  func.func @transform_11(%arg0: i32, %arg1: i32, %arg2: i32) -> (i32, i32) {
    %c0_i32 = arith.constant 0 : i32
    %c0_i32_0 = arith.constant 0 : i32
    %c0_i32_1 = arith.constant 0 : i32
    return %c0_i32, %c0_i32_0 : i32, i32
  }
  func.func @transform_12(%arg0: i32, %arg1: i32, %arg2: i32) -> (i32, i32, i32) {
    %c0_i32 = arith.constant 0 : i32
    %c0_i32_0 = arith.constant 0 : i32
    return %arg0, %arg1, %c0_i32 : i32, i32, i32
  }
}

module attributes {stable_mosaic.version = 11 : i64} {
  func.func @kernel(%arg0: i32, %arg1: i32, %arg2: i32, %arg3: memref<1x2x8x32xbf16, #tpu.memory_space<vmem>>, %arg4: memref<1x2x16x32xbf16, #tpu.memory_space<vmem>>, %arg5: memref<1x2x16x32xbf16, #tpu.memory_space<vmem>>, %arg6: memref<1x8x64xbf16, #tpu.memory_space<vmem>>, %arg7: memref<2x8x1xf32, #tpu.memory_space<vmem>>, %arg8: memref<2x8x1xf32, #tpu.memory_space<vmem>>, %arg9: memref<2x8x32xf32, #tpu.memory_space<vmem>>) attributes {dimension_semantics = [#tpu.dimension_semantics<parallel>, #tpu.dimension_semantics<parallel>, #tpu.dimension_semantics<arbitrary>], iteration_bounds = array<i64: 2, 2, 2>, scalar_prefetch = 0 : i64, scratch_operands = 3 : i64, tpu.core_type = #tpu.core_type<tc>, window_params = [{transform_indices = @transform_0, window_bounds = array<i64: 1, 2, 8, 32>}, {transform_indices = @transform_1, window_bounds = array<i64: 1, 2, 16, 32>}, {transform_indices = @transform_2, window_bounds = array<i64: 1, 2, 16, 32>}, {transform_indices = @transform_3, window_bounds = array<i64: 1, 8, 64>}]} {
    %c0_i32 = arith.constant 0 : i32
    %0 = arith.cmpi eq, %arg2, %c0_i32 : i32
    %1 = arith.extui %0 : i1 to i32
    %c0_i32_0 = arith.constant 0 : i32
    %2 = arith.cmpi ne, %1, %c0_i32_0 : i32
    scf.if %2 {
      %cst_35 = arith.constant 0xFF800000 : f32
      %38 = vector.broadcast %cst_35 : f32 to vector<2x8x1xf32>
      %c0_36 = arith.constant 0 : index
      %c0_37 = arith.constant 0 : index
      %c0_38 = arith.constant 0 : index
      %39 = vector.load %arg7[%c0_36, %c0_37, %c0_38] : memref<2x8x1xf32, #tpu.memory_space<vmem>>, vector<2x8x1xf32>
      tpu.vector_store %arg7[%c0_36, %c0_37, %c0_38], %38 {strides = array<i32>} : memref<2x8x1xf32, #tpu.memory_space<vmem>>, vector<2x8x1xf32>,
      %cst_39 = arith.constant 0.000000e+00 : f32
      %40 = vector.broadcast %cst_39 : f32 to vector<2x8x1xf32>
      %c0_40 = arith.constant 0 : index
      %c0_41 = arith.constant 0 : index
      %c0_42 = arith.constant 0 : index
      %41 = vector.load %arg8[%c0_40, %c0_41, %c0_42] : memref<2x8x1xf32, #tpu.memory_space<vmem>>, vector<2x8x1xf32>
      tpu.vector_store %arg8[%c0_40, %c0_41, %c0_42], %40 {strides = array<i32>} : memref<2x8x1xf32, #tpu.memory_space<vmem>>, vector<2x8x1xf32>,
      %cst_43 = arith.constant 0.000000e+00 : f32
      %42 = vector.broadcast %cst_43 : f32 to vector<2x8x32xf32>
      %c0_44 = arith.constant 0 : index
      %c0_45 = arith.constant 0 : index
      %c0_46 = arith.constant 0 : index
      %43 = vector.load %arg9[%c0_44, %c0_45, %c0_46] : memref<2x8x32xf32, #tpu.memory_space<vmem>>, vector<2x8x32xf32>
      tpu.vector_store %arg9[%c0_44, %c0_45, %c0_46], %42 {strides = array<i32>} : memref<2x8x32xf32, #tpu.memory_space<vmem>>, vector<2x8x32xf32>,
    } else {
    }
    %c0 = arith.constant 0 : index
    %c0_1 = arith.constant 0 : index
    %c0_2 = arith.constant 0 : index
    %c0_3 = arith.constant 0 : index
    %3 = vector.load %arg3[%c0, %c0_1, %c0_2, %c0_3] : memref<1x2x8x32xbf16, #tpu.memory_space<vmem>>, vector<1x2x8x32xbf16>
    %4 = vector.shape_cast %3 : vector<1x2x8x32xbf16> to vector<2x8x32xbf16>
    %cst = arith.constant 1.767580e-01 : bf16
    %5 = vector.broadcast %cst : bf16 to vector<2x8x32xbf16>
    %6 = arith.mulf %4, %5 : vector<2x8x32xbf16>
    %c0_4 = arith.constant 0 : index
    %c0_5 = arith.constant 0 : index
    %c0_6 = arith.constant 0 : index
    %c0_7 = arith.constant 0 : index
    %7 = vector.load %arg4[%c0_4, %c0_5, %c0_6, %c0_7] : memref<1x2x16x32xbf16, #tpu.memory_space<vmem>>, vector<1x2x16x32xbf16>
    %8 = vector.shape_cast %7 : vector<1x2x16x32xbf16> to vector<2x16x32xbf16>
    %c0_8 = arith.constant 0 : index
    %c0_9 = arith.constant 0 : index
    %c0_10 = arith.constant 0 : index
    %c0_11 = arith.constant 0 : index
    %9 = vector.load %arg5[%c0_8, %c0_9, %c0_10, %c0_11] : memref<1x2x16x32xbf16, #tpu.memory_space<vmem>>, vector<1x2x16x32xbf16>
    %10 = vector.shape_cast %9 : vector<1x2x16x32xbf16> to vector<2x16x32xbf16>
    "tpu.trace_start"() <{level = 10 : i32, message = "hqd,hkd->hqk"}> : () -> ()
    %cst_12 = arith.constant dense<0.000000e+00> : vector<2x8x16xf32>
    %11 = tpu.matmul %6, %8, %cst_12 {dimension_numbers = #tpu.dot_dimension_numbers<[2], [2], [1], [1], [0, 0, 0, 1, 1, 1], [0], [0]>} : vector<2x8x32xbf16>, vector<2x16x32xbf16>, vector<2x8x16xf32> -> vector<2x8x16xf32>
    "tpu.trace_stop"() : () -> ()
    %c0_13 = arith.constant 0 : index
    %c0_14 = arith.constant 0 : index
    %c0_15 = arith.constant 0 : index
    %12 = vector.load %arg7[%c0_13, %c0_14, %c0_15] : memref<2x8x1xf32, #tpu.memory_space<vmem>>, vector<2x8x1xf32>
    %cst_16 = arith.constant dense<0xFF800000> : vector<2x8xf32>
    %13 = vector.multi_reduction <maximumf>, %11, %cst_16 [2] : vector<2x8x16xf32> to vector<2x8xf32>
    %14 = vector.shape_cast %13 : vector<2x8xf32> to vector<2x8x1xf32>
    %15 = arith.maximumf %12, %14 : vector<2x8x1xf32>
    %16 = arith.subf %12, %15 : vector<2x8x1xf32>
    %17 = math.exp %16 : vector<2x8x1xf32>
    %18 = vector.broadcast %15 : vector<2x8x1xf32> to vector<2x8x16xf32>
    %19 = arith.subf %11, %18 : vector<2x8x16xf32>
    %20 = math.exp %19 : vector<2x8x16xf32>
    %c0_17 = arith.constant 0 : index
    %c0_18 = arith.constant 0 : index
    %c0_19 = arith.constant 0 : index
    %21 = vector.load %arg8[%c0_17, %c0_18, %c0_19] : memref<2x8x1xf32, #tpu.memory_space<vmem>>, vector<2x8x1xf32>
    %22 = arith.mulf %17, %21 : vector<2x8x1xf32>
    %cst_20 = arith.constant dense<0.000000e+00> : vector<2x8xf32>
    %23 = vector.multi_reduction <add>, %20, %cst_20 [2] : vector<2x8x16xf32> to vector<2x8xf32>
    %24 = vector.shape_cast %23 : vector<2x8xf32> to vector<2x8x1xf32>
    %25 = arith.addf %22, %24 : vector<2x8x1xf32>
    %c0_21 = arith.constant 0 : index
    %c0_22 = arith.constant 0 : index
    %c0_23 = arith.constant 0 : index
    %26 = vector.load %arg8[%c0_21, %c0_22, %c0_23] : memref<2x8x1xf32, #tpu.memory_space<vmem>>, vector<2x8x1xf32>
    tpu.vector_store %arg8[%c0_21, %c0_22, %c0_23], %25 {strides = array<i32>} : memref<2x8x1xf32, #tpu.memory_space<vmem>>, vector<2x8x1xf32>,
    %c0_24 = arith.constant 0 : index
    %c0_25 = arith.constant 0 : index
    %c0_26 = arith.constant 0 : index
    %27 = vector.load %arg9[%c0_24, %c0_25, %c0_26] : memref<2x8x32xf32, #tpu.memory_space<vmem>>, vector<2x8x32xf32>
    %28 = vector.broadcast %17 : vector<2x8x1xf32> to vector<2x8x32xf32>
    %29 = arith.mulf %28, %27 : vector<2x8x32xf32>
    %30 = arith.truncf %20 : vector<2x8x16xf32> to vector<2x8x16xbf16>
    "tpu.trace_start"() <{level = 10 : i32, message = "hqk,hkd->hqd"}> : () -> ()
    %cst_27 = arith.constant dense<0.000000e+00> : vector<2x8x32xf32>
    %31 = tpu.matmul %30, %10, %cst_27 {dimension_numbers = #tpu.dot_dimension_numbers<[2], [1], [1], [2], [0, 0, 0, 1, 1, 2], [0], [0]>} : vector<2x8x16xbf16>, vector<2x16x32xbf16>, vector<2x8x32xf32> -> vector<2x8x32xf32>
    "tpu.trace_stop"() : () -> ()
    %32 = arith.addf %29, %31 : vector<2x8x32xf32>
    %c0_28 = arith.constant 0 : index
    %c0_29 = arith.constant 0 : index
    %c0_30 = arith.constant 0 : index
    %33 = vector.load %arg9[%c0_28, %c0_29, %c0_30] : memref<2x8x32xf32, #tpu.memory_space<vmem>>, vector<2x8x32xf32>
    tpu.vector_store %arg9[%c0_28, %c0_29, %c0_30], %32 {strides = array<i32>} : memref<2x8x32xf32, #tpu.memory_space<vmem>>, vector<2x8x32xf32>,
    %c0_31 = arith.constant 0 : index
    %c0_32 = arith.constant 0 : index
    %c0_33 = arith.constant 0 : index
    %34 = vector.load %arg7[%c0_31, %c0_32, %c0_33] : memref<2x8x1xf32, #tpu.memory_space<vmem>>, vector<2x8x1xf32>
    tpu.vector_store %arg7[%c0_31, %c0_32, %c0_33], %15 {strides = array<i32>} : memref<2x8x1xf32, #tpu.memory_space<vmem>>, vector<2x8x1xf32>,
    %c1_i32 = arith.constant 1 : i32
    %35 = arith.cmpi eq, %arg2, %c1_i32 : i32
    %36 = arith.extui %35 : i1 to i32
    %c0_i32_34 = arith.constant 0 : i32
    %37 = arith.cmpi ne, %36, %c0_i32_34 : i32
    scf.if %37 {
      %c0_35 = arith.constant 0 : index
      %c0_36 = arith.constant 0 : index
      %c0_37 = arith.constant 0 : index
      %38 = vector.load %arg9[%c0_35, %c0_36, %c0_37] : memref<2x8x32xf32, #tpu.memory_space<vmem>>, vector<2x8x32xf32>
      %c0_38 = arith.constant 0 : index
      %c0_39 = arith.constant 0 : index
      %c0_40 = arith.constant 0 : index
      %39 = vector.load %arg8[%c0_38, %c0_39, %c0_40] : memref<2x8x1xf32, #tpu.memory_space<vmem>>, vector<2x8x1xf32>
      %40 = tpu.reciprocal %39 {approx = true} : vector<2x8x1xf32> -> vector<2x8x1xf32>
      %41 = vector.broadcast %40 : vector<2x8x1xf32> to vector<2x8x32xf32>
      %42 = arith.mulf %38, %41 : vector<2x8x32xf32>
      %43 = vector.extract_strided_slice %42 {offsets = [0, 0, 0], sizes = [1, 8, 32], strides = [1, 1, 1]} : vector<2x8x32xf32> to vector<1x8x32xf32>
      %44 = vector.shape_cast %43 : vector<1x8x32xf32> to vector<8x32xf32>
      %45 = arith.truncf %44 : vector<8x32xf32> to vector<8x32xbf16>
      %c0_41 = arith.constant 0 : index
      %c0_42 = arith.constant 0 : index
      %c0_43 = arith.constant 0 : index
      %46 = vector.load %arg6[%c0_41, %c0_42, %c0_43] : memref<1x8x64xbf16, #tpu.memory_space<vmem>>, vector<1x8x32xbf16>
      %47 = vector.shape_cast %46 : vector<1x8x32xbf16> to vector<8x32xbf16>
      %48 = vector.shape_cast %45 : vector<8x32xbf16> to vector<1x8x32xbf16>
      tpu.vector_store %arg6[%c0_41, %c0_42, %c0_43], %48 {strides = array<i32>} : memref<1x8x64xbf16, #tpu.memory_space<vmem>>, vector<1x8x32xbf16>,
      %49 = vector.extract_strided_slice %42 {offsets = [1, 0, 0], sizes = [1, 8, 32], strides = [1, 1, 1]} : vector<2x8x32xf32> to vector<1x8x32xf32>
      %50 = vector.shape_cast %49 : vector<1x8x32xf32> to vector<8x32xf32>
      %51 = arith.truncf %50 : vector<8x32xf32> to vector<8x32xbf16>
      %c0_44 = arith.constant 0 : index
      %c0_45 = arith.constant 0 : index
      %c32 = arith.constant 32 : index
      %52 = vector.load %arg6[%c0_44, %c0_45, %c32] : memref<1x8x64xbf16, #tpu.memory_space<vmem>>, vector<1x8x32xbf16>
      %53 = vector.shape_cast %52 : vector<1x8x32xbf16> to vector<8x32xbf16>
      %54 = vector.shape_cast %51 : vector<8x32xbf16> to vector<1x8x32xbf16>
      tpu.vector_store %arg6[%c0_44, %c0_45, %c32], %54 {strides = array<i32>} : memref<1x8x64xbf16, #tpu.memory_space<vmem>>, vector<1x8x32xbf16>,
    } else {
    }
    return
  }
  func.func @transform_0(%arg0: i32, %arg1: i32, %arg2: i32) -> (i32, i32, i32, i32) {
    %c0_i32 = arith.constant 0 : i32
    %c0_i32_0 = arith.constant 0 : i32
    %c0_i32_1 = arith.constant 0 : i32
    return %arg0, %c0_i32, %arg1, %c0_i32_0 : i32, i32, i32, i32
  }
  func.func @transform_1(%arg0: i32, %arg1: i32, %arg2: i32) -> (i32, i32, i32, i32) {
    %c0_i32 = arith.constant 0 : i32
    %c0_i32_0 = arith.constant 0 : i32
    %c0_i32_1 = arith.constant 0 : i32
    return %arg0, %c0_i32, %arg2, %c0_i32_0 : i32, i32, i32, i32
  }
  func.func @transform_2(%arg0: i32, %arg1: i32, %arg2: i32) -> (i32, i32, i32, i32) {
    %c0_i32 = arith.constant 0 : i32
    %c0_i32_0 = arith.constant 0 : i32
    %c0_i32_1 = arith.constant 0 : i32
    return %arg0, %c0_i32, %arg2, %c0_i32_0 : i32, i32, i32, i32
  }
  func.func @transform_3(%arg0: i32, %arg1: i32, %arg2: i32) -> (i32, i32, i32) {
    %c0_i32 = arith.constant 0 : i32
    %c0_i32_0 = arith.constant 0 : i32
    return %arg0, %arg1, %c0_i32 : i32, i32, i32
  }
}

</mosaic_0001>

<llo_original>
// kernel: joint_transformer_final_block.6
$region0: #{joint_transformer_final_block.6}
  #allocation0 [shape = 'u32[]', space=smem, size = 0x4, offset = 0x4, fixed_abs, tag = 'smem constant byte address 0x4 - core index']
  #allocation1 [shape = 'u32[144,128]{1,0:T(1,128)}', space=vmem, size = 0x12000, scoped, tag = 'internal scratch']
  %s0 = inlined_call_operand.hbm [shape: f32[2,16,64], index: 0, kind: input, shape index: {}]
  %s1 = inlined_call_operand.hbm [shape: f32[2,1,64], index: 1, kind: input, shape index: {}]
  %s2 = inlined_call_operand.hbm [shape: f32[2,1,64], index: 2, kind: input, shape index: {}]
  %s3 = inlined_call_operand.hbm [shape: bf16[64,192], index: 3, kind: input, shape index: {}]
  %s4 = inlined_call_operand.hbm [shape: f32[1,192], index: 4, kind: input, shape index: {}]
  %s5 = inlined_call_operand.hbm [shape: bf16[2,16,192], index: 5, kind: output, shape index: {}]
  %s6 = sld [smem:[#allocation0]]
  $region73: #{joint_transformer_final_block.6} parent=0
    _
  %s8 = ssub.s32 1, %s6
  %s9 = scalar_select 0, %s8, %s6
  $region1: #{joint_transformer_final_block.6} parent=0
    #allocation2 [shape = 'u8[8192]{0}', space=vmem, size = 0x2000, scoped, tag = 'input window, operand 0']
    #allocation3 [shape = 's32[2]{0}', space=sflag, size = 0x8, scoped, tag = 'scoped memory for joint_transformer_final_block.6']
    #allocation4 [shape = 's32[2]{0}', space=sflag, size = 0x8, scoped, tag = 'scoped memory for joint_transformer_final_block.6']
    #allocation5 [shape = 'u8[1024]{0}', space=vmem, size = 0x400, scoped, tag = 'input window, operand 1']
    #allocation6 [shape = 's32[2]{0}', space=sflag, size = 0x8, scoped, tag = 'scoped memory for joint_transformer_final_block.6']
    #allocation7 [shape = 'u8[1024]{0}', space=vmem, size = 0x400, scoped, tag = 'input window, operand 2']
    #allocation8 [shape = 'u8[32768]{0}', space=vmem, size = 0x8000, scoped, tag = 'input window, operand 3, single buffered']
    #allocation9 [shape = 's32[1]{0}', space=sflag, size = 0x4, scoped, tag = 'scoped memory for joint_transformer_final_block.6']
    #allocation10 [shape = 'u8[1024]{0}', space=vmem, size = 0x400, scoped, tag = 'input window, operand 4, single buffered']
    #allocation11 [shape = 'u8[8192]{0}', space=vmem, size = 0x2000, scoped, tag = 'output window, operand 0']
    %10 = vsyncpa [#allocation3], 0
    %s11 = scalar_lea.sflag [#allocation3], 1
    %12 = vsyncpa %s11, 0
    %13 = vsyncpa [#allocation6], 0
    %s14 = scalar_lea.sflag [#allocation6], 1
    %15 = vsyncpa %s14, 0
    %16 = vsyncpa [#allocation9], 0
    %17 = vsyncpa [#allocation4], 0
    %s18 = scalar_lea.sflag [#allocation4], 1
    %19 = vsyncpa %s18, 0
    loop: start=0, step=1, limit=6
    $region2: #{joint_transformer_final_block.6} parent=1 // loop_pre_header
      _
    $region3: #{joint_transformer_final_block.6} parent=1 // loop_header
      %s21 = sphi 0, %s25
      %p22 = scmp.ge.s32.totalorder %s21, 6
      %s28 = sphi 0, %s40
      %s29 = sphi 0, %s36
      %s30 = sphi 0, %s28
      %s31 = sphi 0, %s29
      %s32 = sphi 0, %s30
      %s33 = sphi 0, %s31
      %s45 = sphi 0, %s47
      %s48 = sphi 0, %s45
      %s49 = sphi 0, %s48
      %s65 = sphi 0, %s49
      %s71 = sphi 0, %s73
      %s74 = sphi 0, %s71
      %s75 = sphi 0, %s74
      %s91 = sphi 0, %s75
      %s97 = sphi 0, %s99
      %s100 = sphi 0, %s97
      %s101 = sphi 0, %s100
      %s117 = sphi 0, %s101
      %s121 = sphi 0, %s121
      %s123 = sphi 0, %s121
      %s124 = sphi 0, %s123
      %s138 = sphi 0, %s124
      %s142 = sphi 0, %s142
      %s144 = sphi 0, %s142
      %s145 = sphi 0, %s144
      %s159 = sphi 0, %s145
      %s167 = sphi 0, %s169
      %s170 = sphi 0, %s167
      %s171 = sphi 0, %s170
      %s187 = sphi 0, %s171
    $region4: #{joint_transformer_final_block.6} parent=1 // loop_header_branch
      %24 = sbr.rel (%p22) target = $region8
    $region5: #{joint_transformer_final_block.6} parent=1 // loop_body
      %s26 = ssub.s32 %s21, 1
      %s27 = ssub.s32 %s21, 2
      %s34 = sadd.s32 1, %s29
      %p35 = scmp.ge.s32.totalorder %s34, 2
      %s36 = scalar_select %p35, 0, %s34
      %s37 = sadd.s32 1, %s28
      %s38 = scalar_select %p35, %s37, %s28
      %p39 = scmp.ge.s32.totalorder %s38, 2
      %s40 = scalar_select %p39, 0, %s38
      %s41 = ssub.s32 %s28, %s40
      %s42 = ssub.s32 %s29, %s36
      %s43 = sor.u32 %s41, %s42
      %p44 = scmp.eq.s32.totalorder %s43, 0
      %s46 = sadd.s32 %s45, 1
      %s47 = scalar_select %p44, %s45, %s46
      %p50 = pneg %p44
      %p51 = scmp.eq.s32.totalorder %s21, 3
      %p52 = por %p50, %p51
      %p53 = scmp.ne.s32.totalorder %s45, %s48
      %p54 = scmp.eq.s32.totalorder %s21, 0
      %p55 = por %p53, %p54
      %p56 = scmp.ne.s32.totalorder %s45, %s48
      %p57 = scmp.eq.s32.totalorder %s26, 3
      %p58 = por %p56, %p57
      %p59 = scmp.ne.s32.totalorder %s48, %s49
      %p60 = scmp.eq.s32.totalorder %s26, 0
      %p61 = por %p59, %p60
      %p62 = scmp.ne.s32.totalorder %s48, %s49
      %p63 = scmp.eq.s32.totalorder %s27, 3
      %p64 = por %p62, %p63
      %p66 = scmp.ne.s32.totalorder %s49, %s65
      %p67 = scmp.eq.s32.totalorder %s27, 0
      %p68 = por %p66, %p67
      %s69 = ssub.s32 %s28, %s40
      %p70 = scmp.eq.s32.totalorder %s69, 0
      %s72 = sadd.s32 %s71, 1
      %s73 = scalar_select %p70, %s71, %s72
      %p76 = pneg %p70
      %p77 = scmp.eq.s32.totalorder %s21, 3
      %p78 = por %p76, %p77
      %p79 = scmp.ne.s32.totalorder %s71, %s74
      %p80 = scmp.eq.s32.totalorder %s21, 0
      %p81 = por %p79, %p80
      %p82 = scmp.ne.s32.totalorder %s71, %s74
      %p83 = scmp.eq.s32.totalorder %s26, 3
      %p84 = por %p82, %p83
      %p85 = scmp.ne.s32.totalorder %s74, %s75
      %p86 = scmp.eq.s32.totalorder %s26, 0
      %p87 = por %p85, %p86
      %p88 = scmp.ne.s32.totalorder %s74, %s75
      %p89 = scmp.eq.s32.totalorder %s27, 3
      %p90 = por %p88, %p89
      %p92 = scmp.ne.s32.totalorder %s75, %s91
      %p93 = scmp.eq.s32.totalorder %s27, 0
      %p94 = por %p92, %p93
      %s95 = ssub.s32 %s28, %s40
      %p96 = scmp.eq.s32.totalorder %s95, 0
      %s98 = sadd.s32 %s97, 1
      %s99 = scalar_select %p96, %s97, %s98
      %p102 = pneg %p96
      %p103 = scmp.eq.s32.totalorder %s21, 3
      %p104 = por %p102, %p103
      %p105 = scmp.ne.s32.totalorder %s97, %s100
      %p106 = scmp.eq.s32.totalorder %s21, 0
      %p107 = por %p105, %p106
      %p108 = scmp.ne.s32.totalorder %s97, %s100
      %p109 = scmp.eq.s32.totalorder %s26, 3
      %p110 = por %p108, %p109
      %p111 = scmp.ne.s32.totalorder %s100, %s101
      %p112 = scmp.eq.s32.totalorder %s26, 0
      %p113 = por %p111, %p112
      %p114 = scmp.ne.s32.totalorder %s100, %s101
      %p115 = scmp.eq.s32.totalorder %s27, 3
      %p116 = por %p114, %p115
      %p118 = scmp.ne.s32.totalorder %s101, %s117
      %p119 = scmp.eq.s32.totalorder %s27, 0
      %p120 = por %p118, %p119
      %s122 = sadd.s32 %s121, 1
      %p125 = scmp.eq.s32.totalorder %s21, 3
      %p126 = scmp.ne.s32.totalorder %s121, %s123
      %p127 = scmp.eq.s32.totalorder %s21, 0
      %p128 = por %p126, %p127
      %p129 = scmp.ne.s32.totalorder %s121, %s123
      %p130 = scmp.eq.s32.totalorder %s26, 3
      %p131 = por %p129, %p130
      %p132 = scmp.ne.s32.totalorder %s123, %s124
      %p133 = scmp.eq.s32.totalorder %s26, 0
      %p134 = por %p132, %p133
      %p135 = scmp.ne.s32.totalorder %s123, %s124
      %p136 = scmp.eq.s32.totalorder %s27, 3
      %p137 = por %p135, %p136
      %p139 = scmp.ne.s32.totalorder %s124, %s138
      %p140 = scmp.eq.s32.totalorder %s27, 0
      %p141 = por %p139, %p140
      %s143 = sadd.s32 %s142, 1
      %p146 = scmp.eq.s32.totalorder %s21, 3
      %p147 = scmp.ne.s32.totalorder %s142, %s144
      %p148 = scmp.eq.s32.totalorder %s21, 0
      %p149 = por %p147, %p148
      %p150 = scmp.ne.s32.totalorder %s142, %s144
      %p151 = scmp.eq.s32.totalorder %s26, 3
      %p152 = por %p150, %p151
      %p153 = scmp.ne.s32.totalorder %s144, %s145
      %p154 = scmp.eq.s32.totalorder %s26, 0
      %p155 = por %p153, %p154
      %p156 = scmp.ne.s32.totalorder %s144, %s145
      %p157 = scmp.eq.s32.totalorder %s27, 3
      %p158 = por %p156, %p157
      %p160 = scmp.ne.s32.totalorder %s145, %s159
      %p161 = scmp.eq.s32.totalorder %s27, 0
      %p162 = por %p160, %p161
      %s163 = ssub.s32 %s28, %s40
      %s164 = ssub.s32 %s29, %s36
      %s165 = sor.u32 %s163, %s164
      %p166 = scmp.eq.s32.totalorder %s165, 0
      %s168 = sadd.s32 %s167, 1
      %s169 = scalar_select %p166, %s167, %s168
      %p172 = pneg %p166
      %p173 = scmp.eq.s32.totalorder %s21, 3
      %p174 = por %p172, %p173
      %p175 = scmp.ne.s32.totalorder %s167, %s170
      %p176 = scmp.eq.s32.totalorder %s21, 0
      %p177 = por %p175, %p176
      %p178 = scmp.ne.s32.totalorder %s167, %s170
      %p179 = scmp.eq.s32.totalorder %s26, 3
      %p180 = por %p178, %p179
      %p181 = scmp.ne.s32.totalorder %s170, %s171
      %p182 = scmp.eq.s32.totalorder %s26, 0
      %p183 = por %p181, %p182
      %p184 = scmp.ne.s32.totalorder %s170, %s171
      %p185 = scmp.eq.s32.totalorder %s27, 3
      %p186 = por %p184, %p185
      %p188 = scmp.ne.s32.totalorder %s171, %s187
      %p189 = scmp.eq.s32.totalorder %s27, 0
      %p190 = por %p188, %p189
      %p191 = scmp.le.s32.totalorder 1, %s21
      %p192 = scmp.lt.s32.totalorder %s21, 5
      %p193 = pnand %p191, %p192
      %p194 = pneg %p193
      // Predicated region
      $region9: #{joint_transformer_final_block.6} parent=5 // pred_check
        _
      $region10: #{joint_transformer_final_block.6} parent=5 // pred_check_branch
        %196 = sbr.rel (%p193) target = $region12
      $region11: #{joint_transformer_final_block.6} parent=5 // pred_region
        %s197 = ssub.s32 %s21, 1
        // Predicated region
        $region13: #{joint_transformer_final_block.6} parent=11 // pred_check
          %p198 = pneg %p134
        $region14: #{joint_transformer_final_block.6} parent=11 // pred_check_branch
          %200 = sbr.rel (%p198) target = $region16
        $region15: #{joint_transformer_final_block.6} parent=11 // pred_region
          %s202 = ssub.s32 1024, 1024
          %203 = vsyncadd [#allocation9], %s202
          %s204 = sshll.u32 [#allocation8], 4
          %s205 = int_to_ptr.vmem [resolvable:$true] %s204
          %210 = dma.hbm_to_vmem [thread:$0]  %s3, 1024, %s205, [#allocation9], 128, 128, 8
        $region16: #{joint_transformer_final_block.6} parent=11 // pred_fallthru
          _
        // Predicated region
        $region17: #{joint_transformer_final_block.6} parent=11 // pred_check
          %p211 = pneg %p155
        $region18: #{joint_transformer_final_block.6} parent=11 // pred_check_branch
          %213 = sbr.rel (%p211) target = $region20
        $region19: #{joint_transformer_final_block.6} parent=11 // pred_region
          %s215 = ssub.s32 32, 32
          %216 = vsyncadd [#allocation9], %s215
          %s218 = sshll.u32 [#allocation10], 4
          %s219 = int_to_ptr.vmem [resolvable:$true] %s218
          %221 = dma.hbm_to_vmem [thread:$0]  %s4, 32, %s219, [#allocation9]
        $region20: #{joint_transformer_final_block.6} parent=11 // pred_fallthru
          _
      $region12: #{joint_transformer_final_block.6} parent=5 // pred_fallthru
        _
      %p222 = scmp.lt.s32.totalorder %s21, 4
      // Predicated region
      $region21: #{joint_transformer_final_block.6} parent=5 // pred_check
        %p223 = pneg %p222
      $region22: #{joint_transformer_final_block.6} parent=5 // pred_check_branch
        %225 = sbr.rel (%p223) target = $region24
      $region23: #{joint_transformer_final_block.6} parent=5 // pred_region
        // Predicated region
        $region25: #{joint_transformer_final_block.6} parent=23 // pred_check
          %p226 = pneg %p55
        $region26: #{joint_transformer_final_block.6} parent=23 // pred_check_branch
          %228 = sbr.rel (%p226) target = $region28
        $region27: #{joint_transformer_final_block.6} parent=23 // pred_region
          %s229 = sand.u32 %s45, 1
          %s230 = scalar_lea.sflag [#allocation3], %s229
          %s231 = sand.u32 %s45, 1
          %s232 = smul.addr %s231, 8
          %s233 = scalar_lea.vmem [#allocation2], %s232
          %s235 = ssub.s32 128, 128
          %236 = vsyncadd %s230, %s235
          %s237 = smul.addr %s28, 2
          %s238 = sadd.s32 %s29, %s237
          %s239 = smul.addr %s238, 128
          %s240 = scalar_lea.hbm %s0, %s239
          %s242 = sshll.u32 %s233, 4
          %s243 = int_to_ptr.vmem [resolvable:$true] %s242
          %245 = dma.hbm_to_vmem [thread:$0]  %s240, 128, %s243, %s230
        $region28: #{joint_transformer_final_block.6} parent=23 // pred_fallthru
          _
        // Predicated region
        $region29: #{joint_transformer_final_block.6} parent=23 // pred_check
          %p246 = pneg %p81
        $region30: #{joint_transformer_final_block.6} parent=23 // pred_check_branch
          %248 = sbr.rel (%p246) target = $region32
        $region31: #{joint_transformer_final_block.6} parent=23 // pred_region
          %s249 = sand.u32 %s21, 1
          %s250 = scalar_lea.sflag [#allocation6], %s249
          %s251 = sand.u32 %s71, 1
          %s252 = scalar_lea.vmem [#allocation5], %s251
          %s254 = ssub.s32 16, 16
          %255 = vsyncadd %s250, %s254
          %s256 = smul.addr %s28, 16
          %s257 = scalar_lea.hbm %s1, %s256
          %s259 = sshll.u32 %s252, 4
          %s260 = int_to_ptr.vmem [resolvable:$true] %s259
          %262 = dma.hbm_to_vmem [thread:$0]  %s257, 16, %s260, %s250
        $region32: #{joint_transformer_final_block.6} parent=23 // pred_fallthru
          _
        // Predicated region
        $region33: #{joint_transformer_final_block.6} parent=23 // pred_check
          %p263 = pneg %p107
        $region34: #{joint_transformer_final_block.6} parent=23 // pred_check_branch
          %265 = sbr.rel (%p263) target = $region36
        $region35: #{joint_transformer_final_block.6} parent=23 // pred_region
          %s266 = sand.u32 %s21, 1
          %s267 = scalar_lea.sflag [#allocation6], %s266
          %s268 = sand.u32 %s97, 1
          %s269 = scalar_lea.vmem [#allocation7], %s268
          %s271 = ssub.s32 16, 16
          %272 = vsyncadd %s267, %s271
          %s273 = smul.addr %s28, 16
          %s274 = scalar_lea.hbm %s2, %s273
          %s276 = sshll.u32 %s269, 4
          %s277 = int_to_ptr.vmem [resolvable:$true] %s276
          %279 = dma.hbm_to_vmem [thread:$0]  %s274, 16, %s277, %s267
        $region36: #{joint_transformer_final_block.6} parent=23 // pred_fallthru
          _
      $region24: #{joint_transformer_final_block.6} parent=5 // pred_fallthru
        _
      %p280 = scmp.le.s32.totalorder 1, %s21
      %p281 = scmp.lt.s32.totalorder %s21, 5
      %p282 = pnand %p280, %p281
      %p283 = pneg %p282
      // Predicated region
      $region37: #{joint_transformer_final_block.6} parent=5 // pred_check
        _
      $region38: #{joint_transformer_final_block.6} parent=5 // pred_check_branch
        %285 = sbr.rel (%p282) target = $region40
      $region39: #{joint_transformer_final_block.6} parent=5 // pred_region
        %s286 = ssub.s32 %s21, 1
        %s287 = sand.u32 %s48, 1
        %s288 = scalar_lea.sflag [#allocation3], %s287
        %s289 = sand.u32 %s48, 1
        %s290 = smul.addr %s289, 8
        %s291 = scalar_lea.vmem [#allocation2], %s290
        // Predicated region
        $region41: #{joint_transformer_final_block.6} parent=39 // pred_check
          %p292 = pneg %p61
        $region42: #{joint_transformer_final_block.6} parent=39 // pred_check_branch
          %294 = sbr.rel (%p292) target = $region44
        $region43: #{joint_transformer_final_block.6} parent=39 // pred_region
          %295 = dma.done %s288, 128
        $region44: #{joint_transformer_final_block.6} parent=39 // pred_fallthru
          _
        %s296 = sand.u32 %s26, 1
        %s297 = scalar_lea.sflag [#allocation6], %s296
        %s298 = sand.u32 %s74, 1
        %s299 = scalar_lea.vmem [#allocation5], %s298
        // Predicated region
        $region45: #{joint_transformer_final_block.6} parent=39 // pred_check
          %p300 = pneg %p87
        $region46: #{joint_transformer_final_block.6} parent=39 // pred_check_branch
          %302 = sbr.rel (%p300) target = $region48
        $region47: #{joint_transformer_final_block.6} parent=39 // pred_region
          %303 = dma.done %s297, 16
        $region48: #{joint_transformer_final_block.6} parent=39 // pred_fallthru
          _
        %s304 = sand.u32 %s26, 1
        %s305 = scalar_lea.sflag [#allocation6], %s304
        %s306 = sand.u32 %s100, 1
        %s307 = scalar_lea.vmem [#allocation7], %s306
        // Predicated region
        $region49: #{joint_transformer_final_block.6} parent=39 // pred_check
          %p308 = pneg %p113
        $region50: #{joint_transformer_final_block.6} parent=39 // pred_check_branch
          %310 = sbr.rel (%p308) target = $region52
        $region51: #{joint_transformer_final_block.6} parent=39 // pred_region
          %311 = dma.done %s305, 16
        $region52: #{joint_transformer_final_block.6} parent=39 // pred_fallthru
          _
        // Predicated region
        $region53: #{joint_transformer_final_block.6} parent=39 // pred_check
          %p312 = pneg %p134
        $region54: #{joint_transformer_final_block.6} parent=39 // pred_check_branch
          %314 = sbr.rel (%p312) target = $region56
        $region55: #{joint_transformer_final_block.6} parent=39 // pred_region
          %315 = dma.done [#allocation9], 1024
        $region56: #{joint_transformer_final_block.6} parent=39 // pred_fallthru
          _
        // Predicated region
        $region57: #{joint_transformer_final_block.6} parent=39 // pred_check
          %p316 = pneg %p155
        $region58: #{joint_transformer_final_block.6} parent=39 // pred_check_branch
          %318 = sbr.rel (%p316) target = $region60
        $region59: #{joint_transformer_final_block.6} parent=39 // pred_region
          %319 = dma.done [#allocation9], 32
        $region60: #{joint_transformer_final_block.6} parent=39 // pred_fallthru
          _
        %s320 = sand.u32 %s48, 1
        %s321 = scalar_lea.sflag [#allocation3], %s320
        %s322 = sand.u32 %s48, 1
        %s323 = smul.addr %s322, 8
        %s324 = scalar_lea.vmem [#allocation2], %s323
        %p325 = pneg %p61
        %p326 = pneg %p58
        %s327 = sand.u32 %s26, 1
        %s328 = scalar_lea.sflag [#allocation6], %s327
        %s329 = sand.u32 %s74, 1
        %s330 = scalar_lea.vmem [#allocation5], %s329
        %p331 = pneg %p87
        %p332 = pneg %p84
        %s333 = sand.u32 %s26, 1
        %s334 = scalar_lea.sflag [#allocation6], %s333
        %s335 = sand.u32 %s100, 1
        %s336 = scalar_lea.vmem [#allocation7], %s335
        %p337 = pneg %p113
        %p338 = pneg %p110
        %p339 = pneg %p134
        %p340 = pneg %p131
        %p341 = pneg %p155
        %p342 = pneg %p152
        %p343 = pneg %p183
        %p344 = pneg %p180
        %s345 = sand.u32 %s170, 1
        %s346 = scalar_lea.sflag [#allocation4], %s345
        %s347 = sand.u32 %s170, 1
        %s348 = smul.addr %s347, 8
        %s349 = scalar_lea.vmem [#allocation11], %s348
        %v351 = vld [vmem:[%s291] sm:$0xff]
        %vm352 = vcmask 523264
        %v353 = vsel %vm352, %v351, 0.0
        %354 = vadd.xlane.f32.xlu0 %v353
        %v355 = vpop.xlane.xlu0 %354
        %v356 = vrcp.pop 64.0
        %v357 = vmul.f32 %v355, %v356
        %v358 = vsub.f32 %v351, %v357
        %v359 = vmul.f32 %v358, %v358
        %v360 = vsel %vm352, %v359, 0.0
        %361 = vadd.xlane.f32.xlu0 %v360
        %v362 = vpop.xlane.xlu0 %361
        %v363 = vmul.f32 %v362, %v356
        %v364 = vadd.f32 %v363, 1e-06
        %v365 = vrsqrt.pop %v364
        %v366 = vmul.f32 %v358, %v365
        %v367 = vld [vmem:[%s307] sm:$0x1]
        %v368 = vadd.f32 %v367, 1.0
        %v370 = vlaneseq
        %v371 = vshrl.u32 %v370, 7
        %v372 = vsub.s32 0, %v371
        %v373 = vrot.slane %v368, %v372
        %v375 = vmul.f32 %v366, %v373
        %v376 = vld [vmem:[%s299] sm:$0x1]
        %v378 = vlaneseq
        %v379 = vshrl.u32 %v378, 7
        %v380 = vsub.s32 0, %v379
        %v381 = vrot.slane %v376, %v380
        %v383 = vadd.f32 %v375, %v381
        %v384 = vpack.c.bf16 %v383, %v383
        %v385 = vld [vmem:[#allocation8] sm:$0xff]
        %v386 = vld [vmem:[#allocation8 + $0x8] sm:$0xff]
        %v387 = vld [vmem:[#allocation8 + $0x10] sm:$0xff]
        %v388 = vld [vmem:[#allocation8 + $0x18] sm:$0xff]
        %v389 = vld [vmem:[#allocation8 + $0x20] sm:$0xff]
        %v390 = vld [vmem:[#allocation8 + $0x28] sm:$0xff]
        %v391 = vld [vmem:[#allocation8 + $0x30] sm:$0xff]
        %v392 = vld [vmem:[#allocation8 + $0x38] sm:$0xff]
        %v393 = vld [vmem:[#allocation10] sm:$0x3]
        %v395 = vlaneseq
        %v396 = vshrl.u32 %v395, 7
        %v397 = vsub.s32 0, %v396
        %v398 = vrot.slane %v393, %v397
        %v399 = vlaneseq
        %v400 = vshrl.u32 %v399, 7
        %v401 = vsub.s32 1, %v400
        %v402 = vrot.slane %v393, %v401
        %v413 = vunpack.c.l.b16 %v385
        %v414 = vunpack.c.h.b16 %v385
        %v415 = vunpack.c.l.b16 %v386
        %v416 = vunpack.c.h.b16 %v386
        %v417 = vunpack.c.l.b16 %v387
        %v418 = vunpack.c.h.b16 %v387
        %v419 = vunpack.c.l.b16 %v388
        %v420 = vunpack.c.h.b16 %v388
        %v421 = vunpack.c.l.b16 %v389
        %v422 = vunpack.c.h.b16 %v389
        %v423 = vunpack.c.l.b16 %v390
        %v424 = vunpack.c.h.b16 %v390
        %v425 = vunpack.c.l.b16 %v391
        %v426 = vunpack.c.h.b16 %v391
        %v427 = vunpack.c.l.b16 %v392
        %v428 = vunpack.c.h.b16 %v392
        %v429 = vpack.c.b16 %v415, %v413
        %v430 = vpack.c.b16 %v416, %v414
        %v431 = vpack.c.b16 %v419, %v417
        %v432 = vpack.c.b16 %v420, %v418
        %v433 = vpack.c.b16 %v423, %v421
        %v434 = vpack.c.b16 %v424, %v422
        %v435 = vpack.c.b16 %v427, %v425
        %v436 = vpack.c.b16 %v428, %v426
        %v446 = vsel %vm352, %v384, 0
        %448 = vmatprep.subr.bf16.mxu0 %v430
        %449 = vmatpush1.bf16.msra.mxu0 %v429
        %450 = vmatprep.subr.bf16.mxu0 %v432
        %451 = vmatpush1.bf16.msra.mxu0 %v431
        %452 = vmatprep.subr.bf16.mxu0 %v434
        %453 = vmatpush1.bf16.msra.mxu0 %v433
        %454 = vmatprep.subr.bf16.mxu0 %v436
        %455 = vmatpush1.bf16.msra.mxu0 %v435
        %456 = vmatprep.subr.bf16.mxu0 0
        %457 = vmatpush1.bf16.msra.mxu0 0
        %458 = vmatprep.subr.bf16.mxu0 0
        %459 = vmatpush1.bf16.msra.mxu0 0
        %460 = vmatprep.subr.bf16.mxu0 0
        %461 = vmatpush1.bf16.msra.mxu0 0
        %462 = vmatprep.subr.bf16.mxu0 0
        %463 = vmatpush1.bf16.msra.mxu0 0
        %464 = vmatprep.subr.bf16.mxu0 0
        %465 = vmatpush1.bf16.msra.mxu0 0
        %466 = vmatprep.subr.bf16.mxu0 0
        %467 = vmatpush1.bf16.msra.mxu0 0
        %468 = vmatprep.subr.bf16.mxu0 0
        %469 = vmatpush1.bf16.msra.mxu0 0
        %470 = vmatprep.subr.bf16.mxu0 0
        %471 = vmatpush1.bf16.msra.mxu0 0
        %472 = vmatprep.subr.bf16.mxu0 0
        %473 = vmatpush1.bf16.msra.mxu0 0
        %474 = vmatprep.subr.bf16.mxu0 0
        %475 = vmatpush1.bf16.msra.mxu0 0
        %476 = vmatprep.subr.bf16.mxu0 0
        %477 = vmatpush1.bf16.msra.mxu0 0
        %478 = vmatprep.subr.bf16.mxu0 0
        %479 = vmatpush1.bf16.msra.mxu0 0
        %480 = vmatprep.mubr.bf16.mxu0 0
        %481 = vmatmul.mubr.bf16.gmra.mrb[0].mxu0 %v446
        %v482 = vpop.f32.mrb[0].mxu0
        %v483 = vadd.f32 %v398, %v482
        %v484 = vpop.f32.mrb[0].mxu0
        %v485 = vadd.f32 %v402, %v484
        %v486 = vpop.f32.mrb[0].mxu0
        %v487 = vpop.f32.mrb[0].mxu0
        %488 = vdwg.mxu0
        %v489 = vpack.c.bf16 %v483, %v483
        %v490 = vpack.c.bf16 %v485, %v485
        %v493 = vunpack.c.l.b16 %v489
        %v494 = vunpack.c.l.b16 %v490
        %v495 = vpack.c.b16 %v494, %v493
        %vm497 = vcmask 1043456
        %vm498 = vcmask 523268
        %vm499 = vmor %vm498, %vm497
        %500 = vst.msk [vmem:[%s349] sm:$0xff] %vm499, %v495
        %s501 = sand.u32 %s170, 1
        %s502 = scalar_lea.sflag [#allocation4], %s501
        %s503 = sand.u32 %s170, 1
        %s504 = smul.addr %s503, 8
        %s505 = scalar_lea.vmem [#allocation11], %s504
        // Predicated region
        $region61: #{joint_transformer_final_block.6} parent=39 // pred_check
          %p506 = pneg %p180
        $region62: #{joint_transformer_final_block.6} parent=39 // pred_check_branch
          %508 = sbr.rel (%p506) target = $region64
        $region63: #{joint_transformer_final_block.6} parent=39 // pred_region
          %s510 = ssub.s32 128, 128
          %511 = vsyncadd %s502, %s510
          %s512 = smul.addr %s31, 2
          %s513 = smul.addr %s30, 4
          %s514 = sadd.s32 %s512, %s513
          %s515 = smul.addr %s514, 64
          %s516 = scalar_lea.hbm %s5, %s515
          %s518 = sshll.u32 %s505, 4
          %s519 = int_to_ptr.vmem [resolvable:$true] %s518
          %521 = dma.vmem_to_hbm [thread:$0]  %s519, 128, %s516, %s502
        $region64: #{joint_transformer_final_block.6} parent=39 // pred_fallthru
          _
      $region40: #{joint_transformer_final_block.6} parent=5 // pred_fallthru
        _
      %p522 = scmp.le.s32.totalorder 2, %s21
      // Predicated region
      $region65: #{joint_transformer_final_block.6} parent=5 // pred_check
        %p523 = pneg %p522
      $region66: #{joint_transformer_final_block.6} parent=5 // pred_check_branch
        %525 = sbr.rel (%p523) target = $region68
      $region67: #{joint_transformer_final_block.6} parent=5 // pred_region
        %s526 = ssub.s32 %s21, 2
        // Predicated region
        $region69: #{joint_transformer_final_block.6} parent=67 // pred_check
          %p527 = pneg %p186
        $region70: #{joint_transformer_final_block.6} parent=67 // pred_check_branch
          %529 = sbr.rel (%p527) target = $region72
        $region71: #{joint_transformer_final_block.6} parent=67 // pred_region
          %s530 = sand.u32 %s171, 1
          %s531 = scalar_lea.sflag [#allocation4], %s530
          %s532 = sand.u32 %s171, 1
          %s533 = smul.addr %s532, 8
          %s534 = scalar_lea.vmem [#allocation11], %s533
          %535 = dma.done %s531, 128
        $region72: #{joint_transformer_final_block.6} parent=67 // pred_fallthru
          _
      $region68: #{joint_transformer_final_block.6} parent=5 // pred_fallthru
        _
    $region6: #{joint_transformer_final_block.6} parent=1 // loop_footer
      %s25 = sadd.s32 1, %s21
    $region7: #{joint_transformer_final_block.6} parent=1 // loop_footer_branch
      %20 = sbr.rel target = $region3
    $region8: #{joint_transformer_final_block.6} parent=1 // loop_exit
      _
    %536 = vsyncpa [#allocation3], 1
    %s537 = scalar_lea.sflag [#allocation3], 1
    %538 = vsyncpa %s537, 1
    %539 = vsyncpa [#allocation6], 1
    %s540 = scalar_lea.sflag [#allocation6], 1
    %541 = vsyncpa %s540, 1
    %542 = vsyncpa [#allocation9], 1
    %543 = vsyncpa [#allocation4], 1
    %s544 = scalar_lea.sflag [#allocation4], 1
    %545 = vsyncpa %s544, 1

// kernel: joint_transformer_final_block.5
$region0: #{joint_transformer_final_block.5}
  #allocation0 [shape = 'u32[]', space=smem, size = 0x4, offset = 0x4, fixed_abs, tag = 'smem constant byte address 0x4 - core index']
  #allocation1 [shape = 'u32[144,128]{1,0:T(1,128)}', space=vmem, size = 0x12000, scoped, tag = 'internal scratch']
  %s0 = inlined_call_operand.hbm [shape: f32[2,1,64], index: 0, kind: input, shape index: {}]
  %s1 = inlined_call_operand.hbm [shape: bf16[64,384], index: 1, kind: input, shape index: {}]
  %s2 = inlined_call_operand.hbm [shape: f32[1,384], index: 2, kind: input, shape index: {}]
  %s3 = inlined_call_operand.hbm [shape: bf16[64,128], index: 3, kind: input, shape index: {}]
  %s4 = inlined_call_operand.hbm [shape: f32[1,128], index: 4, kind: input, shape index: {}]
  %s5 = inlined_call_operand.hbm [shape: f32[2,1,384], index: 5, kind: output, shape index: {0}]
  %s6 = inlined_call_operand.hbm [shape: f32[2,1,128], index: 6, kind: output, shape index: {1}]
  %7 = xla_tuple %s5, %s6
  %s8 = sld [smem:[#allocation0]]
  $region81: #{joint_transformer_final_block.5} parent=0
    _
  %s10 = ssub.s32 1, %s8
  %s11 = scalar_select 0, %s10, %s8
  $region1: #{joint_transformer_final_block.5} parent=0
    #allocation2 [shape = 'u8[1024]{0}', space=vmem, size = 0x400, scoped, tag = 'input window, operand 0']
    #allocation3 [shape = 's32[2]{0}', space=sflag, size = 0x8, scoped, tag = 'scoped memory for joint_transformer_final_block.5']
    #allocation4 [shape = 's32[2]{0}', space=sflag, size = 0x8, scoped, tag = 'scoped memory for joint_transformer_final_block.5']
    #allocation5 [shape = 'u8[49152]{0}', space=vmem, size = 0xc000, scoped, tag = 'input window, operand 1, single buffered']
    #allocation6 [shape = 's32[1]{0}', space=sflag, size = 0x4, scoped, tag = 'scoped memory for joint_transformer_final_block.5']
    #allocation7 [shape = 'u8[1536]{0}', space=vmem, size = 0x800, scoped, tag = 'input window, operand 2, single buffered']
    #allocation8 [shape = 'u8[16384]{0}', space=vmem, size = 0x4000, scoped, tag = 'input window, operand 3, single buffered']
    #allocation9 [shape = 's32[1]{0}', space=sflag, size = 0x4, scoped, tag = 'scoped memory for joint_transformer_final_block.5']
    #allocation10 [shape = 'u8[512]{0}', space=vmem, size = 0x400, scoped, tag = 'input window, operand 4, single buffered']
    #allocation11 [shape = 'u8[3072]{0}', space=vmem, size = 0xc00, scoped, tag = 'output window, operand 0']
    #allocation12 [shape = 'u8[1024]{0}', space=vmem, size = 0x400, scoped, tag = 'output window, operand 1']
    #allocation13 [shape = 's32[2]{0}', space=sflag, size = 0x8, scoped, tag = 'scoped memory for joint_transformer_final_block.5']
    %12 = vsyncpa [#allocation3], 0
    %s13 = scalar_lea.sflag [#allocation3], 1
    %14 = vsyncpa %s13, 0
    %15 = vsyncpa [#allocation6], 0
    %16 = vsyncpa [#allocation9], 0
    %17 = vsyncpa [#allocation4], 0
    %s18 = scalar_lea.sflag [#allocation4], 1
    %19 = vsyncpa %s18, 0
    %20 = vsyncpa [#allocation13], 0
    %s21 = scalar_lea.sflag [#allocation13], 1
    %22 = vsyncpa %s21, 0
    loop: start=0, step=1, limit=4
    $region2: #{joint_transformer_final_block.5} parent=1 // loop_pre_header
      _
    $region3: #{joint_transformer_final_block.5} parent=1 // loop_header
      %s24 = sphi 0, %s28
      %p25 = scmp.ge.s32.totalorder %s24, 4
      %s34 = sphi 0, %s36
      %s37 = sphi 0, %s34
      %s38 = sphi 0, %s37
      %s54 = sphi 0, %s38
      %s58 = sphi 0, %s58
      %s60 = sphi 0, %s58
      %s61 = sphi 0, %s60
      %s75 = sphi 0, %s61
      %s79 = sphi 0, %s79
      %s81 = sphi 0, %s79
      %s82 = sphi 0, %s81
      %s96 = sphi 0, %s82
      %s100 = sphi 0, %s100
      %s102 = sphi 0, %s100
      %s103 = sphi 0, %s102
      %s117 = sphi 0, %s103
      %s121 = sphi 0, %s121
      %s123 = sphi 0, %s121
      %s124 = sphi 0, %s123
      %s138 = sphi 0, %s124
      %s144 = sphi 0, %s146
      %s147 = sphi 0, %s144
      %s148 = sphi 0, %s147
      %s164 = sphi 0, %s148
      %s170 = sphi 0, %s172
      %s173 = sphi 0, %s170
      %s174 = sphi 0, %s173
      %s190 = sphi 0, %s174
    $region4: #{joint_transformer_final_block.5} parent=1 // loop_header_branch
      %27 = sbr.rel (%p25) target = $region8
    $region5: #{joint_transformer_final_block.5} parent=1 // loop_body
      %s29 = ssub.s32 %s24, 1
      %s30 = ssub.s32 %s24, 2
      %s31 = sadd.s32 %s24, 1
      %s32 = ssub.s32 %s24, %s31
      %p33 = scmp.eq.s32.totalorder %s32, 0
      %s35 = sadd.s32 %s34, 1
      %s36 = scalar_select %p33, %s34, %s35
      %p39 = pneg %p33
      %p40 = scmp.eq.s32.totalorder %s24, 1
      %p41 = por %p39, %p40
      %p42 = scmp.ne.s32.totalorder %s34, %s37
      %p43 = scmp.eq.s32.totalorder %s24, 0
      %p44 = por %p42, %p43
      %p45 = scmp.ne.s32.totalorder %s34, %s37
      %p46 = scmp.eq.s32.totalorder %s29, 1
      %p47 = por %p45, %p46
      %p48 = scmp.ne.s32.totalorder %s37, %s38
      %p49 = scmp.eq.s32.totalorder %s29, 0
      %p50 = por %p48, %p49
      %p51 = scmp.ne.s32.totalorder %s37, %s38
      %p52 = scmp.eq.s32.totalorder %s30, 1
      %p53 = por %p51, %p52
      %p55 = scmp.ne.s32.totalorder %s38, %s54
      %p56 = scmp.eq.s32.totalorder %s30, 0
      %p57 = por %p55, %p56
      %s59 = sadd.s32 %s58, 1
      %p62 = scmp.eq.s32.totalorder %s24, 1
      %p63 = scmp.ne.s32.totalorder %s58, %s60
      %p64 = scmp.eq.s32.totalorder %s24, 0
      %p65 = por %p63, %p64
      %p66 = scmp.ne.s32.totalorder %s58, %s60
      %p67 = scmp.eq.s32.totalorder %s29, 1
      %p68 = por %p66, %p67
      %p69 = scmp.ne.s32.totalorder %s60, %s61
      %p70 = scmp.eq.s32.totalorder %s29, 0
      %p71 = por %p69, %p70
      %p72 = scmp.ne.s32.totalorder %s60, %s61
      %p73 = scmp.eq.s32.totalorder %s30, 1
      %p74 = por %p72, %p73
      %p76 = scmp.ne.s32.totalorder %s61, %s75
      %p77 = scmp.eq.s32.totalorder %s30, 0
      %p78 = por %p76, %p77
      %s80 = sadd.s32 %s79, 1
      %p83 = scmp.eq.s32.totalorder %s24, 1
      %p84 = scmp.ne.s32.totalorder %s79, %s81
      %p85 = scmp.eq.s32.totalorder %s24, 0
      %p86 = por %p84, %p85
      %p87 = scmp.ne.s32.totalorder %s79, %s81
      %p88 = scmp.eq.s32.totalorder %s29, 1
      %p89 = por %p87, %p88
      %p90 = scmp.ne.s32.totalorder %s81, %s82
      %p91 = scmp.eq.s32.totalorder %s29, 0
      %p92 = por %p90, %p91
      %p93 = scmp.ne.s32.totalorder %s81, %s82
      %p94 = scmp.eq.s32.totalorder %s30, 1
      %p95 = por %p93, %p94
      %p97 = scmp.ne.s32.totalorder %s82, %s96
      %p98 = scmp.eq.s32.totalorder %s30, 0
      %p99 = por %p97, %p98
      %s101 = sadd.s32 %s100, 1
      %p104 = scmp.eq.s32.totalorder %s24, 1
      %p105 = scmp.ne.s32.totalorder %s100, %s102
      %p106 = scmp.eq.s32.totalorder %s24, 0
      %p107 = por %p105, %p106
      %p108 = scmp.ne.s32.totalorder %s100, %s102
      %p109 = scmp.eq.s32.totalorder %s29, 1
      %p110 = por %p108, %p109
      %p111 = scmp.ne.s32.totalorder %s102, %s103
      %p112 = scmp.eq.s32.totalorder %s29, 0
      %p113 = por %p111, %p112
      %p114 = scmp.ne.s32.totalorder %s102, %s103
      %p115 = scmp.eq.s32.totalorder %s30, 1
      %p116 = por %p114, %p115
      %p118 = scmp.ne.s32.totalorder %s103, %s117
      %p119 = scmp.eq.s32.totalorder %s30, 0
      %p120 = por %p118, %p119
      %s122 = sadd.s32 %s121, 1
      %p125 = scmp.eq.s32.totalorder %s24, 1
      %p126 = scmp.ne.s32.totalorder %s121, %s123
      %p127 = scmp.eq.s32.totalorder %s24, 0
      %p128 = por %p126, %p127
      %p129 = scmp.ne.s32.totalorder %s121, %s123
      %p130 = scmp.eq.s32.totalorder %s29, 1
      %p131 = por %p129, %p130
      %p132 = scmp.ne.s32.totalorder %s123, %s124
      %p133 = scmp.eq.s32.totalorder %s29, 0
      %p134 = por %p132, %p133
      %p135 = scmp.ne.s32.totalorder %s123, %s124
      %p136 = scmp.eq.s32.totalorder %s30, 1
      %p137 = por %p135, %p136
      %p139 = scmp.ne.s32.totalorder %s124, %s138
      %p140 = scmp.eq.s32.totalorder %s30, 0
      %p141 = por %p139, %p140
      %s142 = ssub.s32 %s24, %s31
      %p143 = scmp.eq.s32.totalorder %s142, 0
      %s145 = sadd.s32 %s144, 1
      %s146 = scalar_select %p143, %s144, %s145
      %p149 = pneg %p143
      %p150 = scmp.eq.s32.totalorder %s24, 1
      %p151 = por %p149, %p150
      %p152 = scmp.ne.s32.totalorder %s144, %s147
      %p153 = scmp.eq.s32.totalorder %s24, 0
      %p154 = por %p152, %p153
      %p155 = scmp.ne.s32.totalorder %s144, %s147
      %p156 = scmp.eq.s32.totalorder %s29, 1
      %p157 = por %p155, %p156
      %p158 = scmp.ne.s32.totalorder %s147, %s148
      %p159 = scmp.eq.s32.totalorder %s29, 0
      %p160 = por %p158, %p159
      %p161 = scmp.ne.s32.totalorder %s147, %s148
      %p162 = scmp.eq.s32.totalorder %s30, 1
      %p163 = por %p161, %p162
      %p165 = scmp.ne.s32.totalorder %s148, %s164
      %p166 = scmp.eq.s32.totalorder %s30, 0
      %p167 = por %p165, %p166
      %s168 = ssub.s32 %s24, %s31
      %p169 = scmp.eq.s32.totalorder %s168, 0
      %s171 = sadd.s32 %s170, 1
      %s172 = scalar_select %p169, %s170, %s171
      %p175 = pneg %p169
      %p176 = scmp.eq.s32.totalorder %s24, 1
      %p177 = por %p175, %p176
      %p178 = scmp.ne.s32.totalorder %s170, %s173
      %p179 = scmp.eq.s32.totalorder %s24, 0
      %p180 = por %p178, %p179
      %p181 = scmp.ne.s32.totalorder %s170, %s173
      %p182 = scmp.eq.s32.totalorder %s29, 1
      %p183 = por %p181, %p182
      %p184 = scmp.ne.s32.totalorder %s173, %s174
      %p185 = scmp.eq.s32.totalorder %s29, 0
      %p186 = por %p184, %p185
      %p187 = scmp.ne.s32.totalorder %s173, %s174
      %p188 = scmp.eq.s32.totalorder %s30, 1
      %p189 = por %p187, %p188
      %p191 = scmp.ne.s32.totalorder %s174, %s190
      %p192 = scmp.eq.s32.totalorder %s30, 0
      %p193 = por %p191, %p192
      %p194 = scmp.le.s32.totalorder 1, %s24
      %p195 = scmp.lt.s32.totalorder %s24, 3
      %p196 = pnand %p194, %p195
      %p197 = pneg %p196
      // Predicated region
      $region9: #{joint_transformer_final_block.5} parent=5 // pred_check
        _
      $region10: #{joint_transformer_final_block.5} parent=5 // pred_check_branch
        %199 = sbr.rel (%p196) target = $region12
      $region11: #{joint_transformer_final_block.5} parent=5 // pred_region
        %s200 = ssub.s32 %s24, 1
        // Predicated region
        $region13: #{joint_transformer_final_block.5} parent=11 // pred_check
          %p201 = pneg %p71
        $region14: #{joint_transformer_final_block.5} parent=11 // pred_check_branch
          %203 = sbr.rel (%p201) target = $region16
        $region15: #{joint_transformer_final_block.5} parent=11 // pred_region
          %s205 = ssub.s32 1536, 1536
          %206 = vsyncadd [#allocation6], %s205
          %s207 = sshll.u32 [#allocation5], 4
          %s208 = int_to_ptr.vmem [resolvable:$true] %s207
          %213 = dma.hbm_to_vmem [thread:$0]  %s1, 1536, %s208, [#allocation6], 192, 192, 12
        $region16: #{joint_transformer_final_block.5} parent=11 // pred_fallthru
          _
        // Predicated region
        $region17: #{joint_transformer_final_block.5} parent=11 // pred_check
          %p214 = pneg %p92
        $region18: #{joint_transformer_final_block.5} parent=11 // pred_check_branch
          %216 = sbr.rel (%p214) target = $region20
        $region19: #{joint_transformer_final_block.5} parent=11 // pred_region
          %s218 = ssub.s32 48, 48
          %219 = vsyncadd [#allocation6], %s218
          %s221 = sshll.u32 [#allocation7], 4
          %s222 = int_to_ptr.vmem [resolvable:$true] %s221
          %224 = dma.hbm_to_vmem [thread:$0]  %s2, 48, %s222, [#allocation6]
        $region20: #{joint_transformer_final_block.5} parent=11 // pred_fallthru
          _
        // Predicated region
        $region21: #{joint_transformer_final_block.5} parent=11 // pred_check
          %p225 = pneg %p113
        $region22: #{joint_transformer_final_block.5} parent=11 // pred_check_branch
          %227 = sbr.rel (%p225) target = $region24
        $region23: #{joint_transformer_final_block.5} parent=11 // pred_region
          %s229 = ssub.s32 512, 512
          %230 = vsyncadd [#allocation9], %s229
          %s231 = sshll.u32 [#allocation8], 4
          %s232 = int_to_ptr.vmem [resolvable:$true] %s231
          %237 = dma.hbm_to_vmem [thread:$0]  %s3, 512, %s232, [#allocation9], 64, 64, 4
        $region24: #{joint_transformer_final_block.5} parent=11 // pred_fallthru
          _
        // Predicated region
        $region25: #{joint_transformer_final_block.5} parent=11 // pred_check
          %p238 = pneg %p134
        $region26: #{joint_transformer_final_block.5} parent=11 // pred_check_branch
          %240 = sbr.rel (%p238) target = $region28
        $region27: #{joint_transformer_final_block.5} parent=11 // pred_region
          %s242 = ssub.s32 16, 16
          %243 = vsyncadd [#allocation9], %s242
          %s245 = sshll.u32 [#allocation10], 4
          %s246 = int_to_ptr.vmem [resolvable:$true] %s245
          %248 = dma.hbm_to_vmem [thread:$0]  %s4, 16, %s246, [#allocation9]
        $region28: #{joint_transformer_final_block.5} parent=11 // pred_fallthru
          _
      $region12: #{joint_transformer_final_block.5} parent=5 // pred_fallthru
        _
      %p249 = scmp.lt.s32.totalorder %s24, 2
      // Predicated region
      $region29: #{joint_transformer_final_block.5} parent=5 // pred_check
        %p250 = pneg %p249
      $region30: #{joint_transformer_final_block.5} parent=5 // pred_check_branch
        %252 = sbr.rel (%p250) target = $region32
      $region31: #{joint_transformer_final_block.5} parent=5 // pred_region
        // Predicated region
        $region33: #{joint_transformer_final_block.5} parent=31 // pred_check
          %p253 = pneg %p44
        $region34: #{joint_transformer_final_block.5} parent=31 // pred_check_branch
          %255 = sbr.rel (%p253) target = $region36
        $region35: #{joint_transformer_final_block.5} parent=31 // pred_region
          %s256 = sand.u32 %s34, 1
          %s257 = scalar_lea.sflag [#allocation3], %s256
          %s258 = sand.u32 %s34, 1
          %s259 = scalar_lea.vmem [#allocation2], %s258
          %s261 = ssub.s32 16, 16
          %262 = vsyncadd %s257, %s261
          %s263 = smul.addr %s24, 16
          %s264 = scalar_lea.hbm %s0, %s263
          %s266 = sshll.u32 %s259, 4
          %s267 = int_to_ptr.vmem [resolvable:$true] %s266
          %269 = dma.hbm_to_vmem [thread:$0]  %s264, 16, %s267, %s257
        $region36: #{joint_transformer_final_block.5} parent=31 // pred_fallthru
          _
      $region32: #{joint_transformer_final_block.5} parent=5 // pred_fallthru
        _
      %p270 = scmp.le.s32.totalorder 1, %s24
      %p271 = scmp.lt.s32.totalorder %s24, 3
      %p272 = pnand %p270, %p271
      %p273 = pneg %p272
      // Predicated region
      $region37: #{joint_transformer_final_block.5} parent=5 // pred_check
        _
      $region38: #{joint_transformer_final_block.5} parent=5 // pred_check_branch
        %275 = sbr.rel (%p272) target = $region40
      $region39: #{joint_transformer_final_block.5} parent=5 // pred_region
        %s276 = ssub.s32 %s24, 1
        %s277 = sand.u32 %s37, 1
        %s278 = scalar_lea.sflag [#allocation3], %s277
        %s279 = sand.u32 %s37, 1
        %s280 = scalar_lea.vmem [#allocation2], %s279
        // Predicated region
        $region41: #{joint_transformer_final_block.5} parent=39 // pred_check
          %p281 = pneg %p50
        $region42: #{joint_transformer_final_block.5} parent=39 // pred_check_branch
          %283 = sbr.rel (%p281) target = $region44
        $region43: #{joint_transformer_final_block.5} parent=39 // pred_region
          %284 = dma.done %s278, 16
        $region44: #{joint_transformer_final_block.5} parent=39 // pred_fallthru
          _
        // Predicated region
        $region45: #{joint_transformer_final_block.5} parent=39 // pred_check
          %p285 = pneg %p71
        $region46: #{joint_transformer_final_block.5} parent=39 // pred_check_branch
          %287 = sbr.rel (%p285) target = $region48
        $region47: #{joint_transformer_final_block.5} parent=39 // pred_region
          %288 = dma.done [#allocation6], 1536
        $region48: #{joint_transformer_final_block.5} parent=39 // pred_fallthru
          _
        // Predicated region
        $region49: #{joint_transformer_final_block.5} parent=39 // pred_check
          %p289 = pneg %p92
        $region50: #{joint_transformer_final_block.5} parent=39 // pred_check_branch
          %291 = sbr.rel (%p289) target = $region52
        $region51: #{joint_transformer_final_block.5} parent=39 // pred_region
          %292 = dma.done [#allocation6], 48
        $region52: #{joint_transformer_final_block.5} parent=39 // pred_fallthru
          _
        // Predicated region
        $region53: #{joint_transformer_final_block.5} parent=39 // pred_check
          %p293 = pneg %p113
        $region54: #{joint_transformer_final_block.5} parent=39 // pred_check_branch
          %295 = sbr.rel (%p293) target = $region56
        $region55: #{joint_transformer_final_block.5} parent=39 // pred_region
          %296 = dma.done [#allocation9], 512
        $region56: #{joint_transformer_final_block.5} parent=39 // pred_fallthru
          _
        // Predicated region
        $region57: #{joint_transformer_final_block.5} parent=39 // pred_check
          %p297 = pneg %p134
        $region58: #{joint_transformer_final_block.5} parent=39 // pred_check_branch
          %299 = sbr.rel (%p297) target = $region60
        $region59: #{joint_transformer_final_block.5} parent=39 // pred_region
          %300 = dma.done [#allocation9], 16
        $region60: #{joint_transformer_final_block.5} parent=39 // pred_fallthru
          _
        %s301 = sand.u32 %s37, 1
        %s302 = scalar_lea.sflag [#allocation3], %s301
        %s303 = sand.u32 %s37, 1
        %s304 = scalar_lea.vmem [#allocation2], %s303
        %p305 = pneg %p50
        %p306 = pneg %p47
        %p307 = pneg %p71
        %p308 = pneg %p68
        %p309 = pneg %p92
        %p310 = pneg %p89
        %p311 = pneg %p113
        %p312 = pneg %p110
        %p313 = pneg %p134
        %p314 = pneg %p131
        %p315 = pneg %p160
        %p316 = pneg %p157
        %s317 = sand.u32 %s147, 1
        %s318 = scalar_lea.sflag [#allocation4], %s317
        %s319 = sand.u32 %s147, 1
        %s320 = smul.addr %s319, 3
        %s321 = scalar_lea.vmem [#allocation11], %s320
        %p322 = pneg %p186
        %p323 = pneg %p183
        %s324 = sand.u32 %s173, 1
        %s325 = scalar_lea.sflag [#allocation13], %s324
        %s326 = sand.u32 %s173, 1
        %s327 = scalar_lea.vmem [#allocation12], %s326
        %v329 = vld [vmem:[%s280] sm:$0x1]
        %v330 = vxor.u32 %v329, 2147483648
        %v331 = vmul.f32 %v330, 1.442695
        %v332 = vpow.pop %v331
        %v333 = vadd.f32 %v332, 1.0
        %v334 = vrcp.pop %v333
        %v335 = vmul.f32 1.0, %v334
        %v336 = vmul.f32 %v329, %v335
        %v337 = vpack.c.bf16 %v336, %v336
        %v338 = vld [vmem:[#allocation5] sm:$0xff]
        %v339 = vld [vmem:[#allocation5 + $0x8] sm:$0xf]
        %v340 = vld [vmem:[#allocation5 + $0xc] sm:$0xff]
        %v341 = vld [vmem:[#allocation5 + $0x14] sm:$0xf]
        %v342 = vld [vmem:[#allocation5 + $0x18] sm:$0xff]
        %v343 = vld [vmem:[#allocation5 + $0x20] sm:$0xf]
        %v344 = vld [vmem:[#allocation5 + $0x24] sm:$0xff]
        %v345 = vld [vmem:[#allocation5 + $0x2c] sm:$0xf]
        %v346 = vld [vmem:[#allocation5 + $0x30] sm:$0xff]
        %v347 = vld [vmem:[#allocation5 + $0x38] sm:$0xf]
        %v348 = vld [vmem:[#allocation5 + $0x3c] sm:$0xff]
        %v349 = vld [vmem:[#allocation5 + $0x44] sm:$0xf]
        %v350 = vld [vmem:[#allocation5 + $0x48] sm:$0xff]
        %v351 = vld [vmem:[#allocation5 + $0x50] sm:$0xf]
        %v352 = vld [vmem:[#allocation5 + $0x54] sm:$0xff]
        %v353 = vld [vmem:[#allocation5 + $0x5c] sm:$0xf]
        %v354 = vld [vmem:[#allocation7] sm:$0x7]
        %v371 = vunpack.c.l.b16 %v338
        %v372 = vunpack.c.h.b16 %v338
        %v373 = vunpack.c.l.b16 %v339
        %v374 = vunpack.c.l.b16 %v340
        %v375 = vunpack.c.h.b16 %v340
        %v376 = vunpack.c.l.b16 %v341
        %v377 = vunpack.c.l.b16 %v342
        %v378 = vunpack.c.h.b16 %v342
        %v379 = vunpack.c.l.b16 %v343
        %v380 = vunpack.c.l.b16 %v344
        %v381 = vunpack.c.h.b16 %v344
        %v382 = vunpack.c.l.b16 %v345
        %v383 = vunpack.c.l.b16 %v346
        %v384 = vunpack.c.h.b16 %v346
        %v385 = vunpack.c.l.b16 %v347
        %v386 = vunpack.c.l.b16 %v348
        %v387 = vunpack.c.h.b16 %v348
        %v388 = vunpack.c.l.b16 %v349
        %v389 = vunpack.c.l.b16 %v350
        %v390 = vunpack.c.h.b16 %v350
        %v391 = vunpack.c.l.b16 %v351
        %v392 = vunpack.c.l.b16 %v352
        %v393 = vunpack.c.h.b16 %v352
        %v394 = vunpack.c.l.b16 %v353
        %v395 = vpack.c.b16 %v374, %v371
        %v396 = vpack.c.b16 %v375, %v372
        %v397 = vpack.c.b16 %v376, %v373
        %v398 = vpack.c.b16 %v380, %v377
        %v399 = vpack.c.b16 %v381, %v378
        %v400 = vpack.c.b16 %v382, %v379
        %v401 = vpack.c.b16 %v386, %v383
        %v402 = vpack.c.b16 %v387, %v384
        %v403 = vpack.c.b16 %v388, %v385
        %v404 = vpack.c.b16 %v392, %v389
        %v405 = vpack.c.b16 %v393, %v390
        %v406 = vpack.c.b16 %v394, %v391
        %v420 = vlaneseq
        %v421 = vshrl.u32 %v420, 7
        %v422 = vsub.s32 0, %v421
        %v423 = vrot.slane %v354, %v422
        %v424 = vlaneseq
        %v425 = vshrl.u32 %v424, 7
        %v426 = vsub.s32 1, %v425
        %v427 = vrot.slane %v354, %v426
        %v428 = vlaneseq
        %v429 = vshrl.u32 %v428, 7
        %v430 = vsub.s32 2, %v429
        %v431 = vrot.slane %v354, %v430
        %vm435 = vcmask 523264
        %v437 = vsel %vm435, %v337, 0
        %439 = vmatprep.subr.bf16.mxu0 %v396
        %440 = vmatpush1.bf16.msra.mxu0 %v395
        %441 = vmatprep.subr.bf16.mxu0 %v399
        %442 = vmatpush1.bf16.msra.mxu0 %v398
        %443 = vmatprep.subr.bf16.mxu0 %v402
        %444 = vmatpush1.bf16.msra.mxu0 %v401
        %445 = vmatprep.subr.bf16.mxu0 %v405
        %446 = vmatpush1.bf16.msra.mxu0 %v404
        %447 = vmatprep.subr.bf16.mxu0 0
        %448 = vmatpush1.bf16.msra.mxu0 0
        %449 = vmatprep.subr.bf16.mxu0 0
        %450 = vmatpush1.bf16.msra.mxu0 0
        %451 = vmatprep.subr.bf16.mxu0 0
        %452 = vmatpush1.bf16.msra.mxu0 0
        %453 = vmatprep.subr.bf16.mxu0 0
        %454 = vmatpush1.bf16.msra.mxu0 0
        %455 = vmatprep.subr.bf16.mxu0 0
        %456 = vmatpush1.bf16.msra.mxu0 0
        %457 = vmatprep.subr.bf16.mxu0 0
        %458 = vmatpush1.bf16.msra.mxu0 0
        %459 = vmatprep.subr.bf16.mxu0 0
        %460 = vmatpush1.bf16.msra.mxu0 0
        %461 = vmatprep.subr.bf16.mxu0 0
        %462 = vmatpush1.bf16.msra.mxu0 0
        %463 = vmatprep.subr.bf16.mxu0 0
        %464 = vmatpush1.bf16.msra.mxu0 0
        %465 = vmatprep.subr.bf16.mxu0 0
        %466 = vmatpush1.bf16.msra.mxu0 0
        %467 = vmatprep.subr.bf16.mxu0 0
        %468 = vmatpush1.bf16.msra.mxu0 0
        %469 = vmatprep.subr.bf16.mxu0 0
        %470 = vmatpush1.bf16.msra.mxu0 0
        %471 = vmatprep.mubr.bf16.mxu0 0
        %472 = vmatmul.mubr.bf16.gmra.mrb[0].mxu0 %v437
        %v473 = vpop.f32.mrb[0].mxu0
        %v474 = vadd.f32 %v423, %v473
        %v475 = vpop.f32.mrb[0].mxu0
        %v476 = vadd.f32 %v427, %v475
        %v477 = vpop.f32.mrb[0].mxu0
        %v478 = vpop.f32.mrb[0].mxu0
        %479 = vdwg.mxu0
        %480 = vmatprep.subr.bf16.mxu0 0
        %481 = vmatpush1.bf16.msra.mxu0 %v397
        %482 = vmatprep.subr.bf16.mxu0 0
        %483 = vmatpush1.bf16.msra.mxu0 %v400
        %484 = vmatprep.subr.bf16.mxu0 0
        %485 = vmatpush1.bf16.msra.mxu0 %v403
        %486 = vmatprep.subr.bf16.mxu0 0
        %487 = vmatpush1.bf16.msra.mxu0 %v406
        %488 = vmatprep.subr.bf16.mxu0 0
        %489 = vmatpush1.bf16.msra.mxu0 0
        %490 = vmatprep.subr.bf16.mxu0 0
        %491 = vmatpush1.bf16.msra.mxu0 0
        %492 = vmatprep.subr.bf16.mxu0 0
        %493 = vmatpush1.bf16.msra.mxu0 0
        %494 = vmatprep.subr.bf16.mxu0 0
        %495 = vmatpush1.bf16.msra.mxu0 0
        %496 = vmatprep.subr.bf16.mxu0 0
        %497 = vmatpush1.bf16.msra.mxu0 0
        %498 = vmatprep.subr.bf16.mxu0 0
        %499 = vmatpush1.bf16.msra.mxu0 0
        %500 = vmatprep.subr.bf16.mxu0 0
        %501 = vmatpush1.bf16.msra.mxu0 0
        %502 = vmatprep.subr.bf16.mxu0 0
        %503 = vmatpush1.bf16.msra.mxu0 0
        %504 = vmatprep.subr.bf16.mxu0 0
        %505 = vmatpush1.bf16.msra.mxu0 0
        %506 = vmatprep.subr.bf16.mxu0 0
        %507 = vmatpush1.bf16.msra.mxu0 0
        %508 = vmatprep.subr.bf16.mxu0 0
        %509 = vmatpush1.bf16.msra.mxu0 0
        %510 = vmatprep.subr.bf16.mxu0 0
        %511 = vmatpush1.bf16.msra.mxu0 0
        %512 = vmatprep.mubr.bf16.mxu0 0
        %513 = vmatmul.mubr.bf16.gmra.mrb[0].mxu0 %v437
        %v514 = vpop.f32.mrb[0].mxu0
        %v515 = vadd.f32 %v431, %v514
        %v516 = vpop.f32.mrb[0].mxu0
        %v517 = vpop.f32.mrb[0].mxu0
        %v518 = vpop.f32.mrb[0].mxu0
        %519 = vdwg.mxu0
        %v523 = vcombine.low %v474, %v476
        %v525 = vunpack.c.l.s4 1966171168
        %v526 = vunpack.c.0.s8 %v525
        %v527 = vlaneseq
        %v528 = vshrl.u32 %v527, 7
        %v529 = vsub.s32 %v526, %v528
        %v530 = vrot.slane %v523, %v529
        %v532 = vunpack.c.l.s4 1966171168
        %v533 = vunpack.c.0.s8 %v532
        %v534 = vlaneseq
        %v535 = vshrl.u32 %v534, 7
        %v536 = vsub.s32 %v533, %v535
        %v537 = vrot.slane %v515, %v536
        %v538 = vcombine.low %v530, %v537
        %v540 = vunpack.c.l.s4 1966171168
        %v541 = vunpack.c.0.s8 %v540
        %v542 = vlaneseq
        %v543 = vshrl.u32 %v542, 7
        %v544 = vsub.s32 %v541, %v543
        %v545 = vrot.slane %v538, %v544
        %v547 = vlaneseq
        %vm548 = vcmp.ge.s32.totalorder %v547, 0
        %vm549 = vcmp.lt.s32.totalorder %v547, 384
        %vm550 = vmand %vm548, %vm549
        %551 = vst.msk [vmem:[%s321] sm:$0x7] %vm550, %v545
        %v552 = vld [vmem:[#allocation8] sm:$0xf]
        %v553 = vld [vmem:[#allocation8 + $0x4] sm:$0xf]
        %v554 = vld [vmem:[#allocation8 + $0x8] sm:$0xf]
        %v555 = vld [vmem:[#allocation8 + $0xc] sm:$0xf]
        %v556 = vld [vmem:[#allocation8 + $0x10] sm:$0xf]
        %v557 = vld [vmem:[#allocation8 + $0x14] sm:$0xf]
        %v558 = vld [vmem:[#allocation8 + $0x18] sm:$0xf]
        %v559 = vld [vmem:[#allocation8 + $0x1c] sm:$0xf]
        %v560 = vld [vmem:[#allocation10] sm:$0x1]
        %v569 = vunpack.c.l.b16 %v552
        %v570 = vunpack.c.l.b16 %v553
        %v571 = vunpack.c.l.b16 %v554
        %v572 = vunpack.c.l.b16 %v555
        %v573 = vunpack.c.l.b16 %v556
        %v574 = vunpack.c.l.b16 %v557
        %v575 = vunpack.c.l.b16 %v558
        %v576 = vunpack.c.l.b16 %v559
        %v577 = vpack.c.b16 %v570, %v569
        %v578 = vpack.c.b16 %v572, %v571
        %v579 = vpack.c.b16 %v574, %v573
        %v580 = vpack.c.b16 %v576, %v575
        %585 = vmatprep.subr.bf16.mxu0 0
        %586 = vmatpush1.bf16.msra.mxu0 %v577
        %587 = vmatprep.subr.bf16.mxu0 0
        %588 = vmatpush1.bf16.msra.mxu0 %v578
        %589 = vmatprep.subr.bf16.mxu0 0
        %590 = vmatpush1.bf16.msra.mxu0 %v579
        %591 = vmatprep.subr.bf16.mxu0 0
        %592 = vmatpush1.bf16.msra.mxu0 %v580
        %593 = vmatprep.subr.bf16.mxu0 0
        %594 = vmatpush1.bf16.msra.mxu0 0
        %595 = vmatprep.subr.bf16.mxu0 0
        %596 = vmatpush1.bf16.msra.mxu0 0
        %597 = vmatprep.subr.bf16.mxu0 0
        %598 = vmatpush1.bf16.msra.mxu0 0
        %599 = vmatprep.subr.bf16.mxu0 0
        %600 = vmatpush1.bf16.msra.mxu0 0
        %601 = vmatprep.subr.bf16.mxu0 0
        %602 = vmatpush1.bf16.msra.mxu0 0
        %603 = vmatprep.subr.bf16.mxu0 0
        %604 = vmatpush1.bf16.msra.mxu0 0
        %605 = vmatprep.subr.bf16.mxu0 0
        %606 = vmatpush1.bf16.msra.mxu0 0
        %607 = vmatprep.subr.bf16.mxu0 0
        %608 = vmatpush1.bf16.msra.mxu0 0
        %609 = vmatprep.subr.bf16.mxu0 0
        %610 = vmatpush1.bf16.msra.mxu0 0
        %611 = vmatprep.subr.bf16.mxu0 0
        %612 = vmatpush1.bf16.msra.mxu0 0
        %613 = vmatprep.subr.bf16.mxu0 0
        %614 = vmatpush1.bf16.msra.mxu0 0
        %615 = vmatprep.subr.bf16.mxu0 0
        %616 = vmatpush1.bf16.msra.mxu0 0
        %617 = vmatprep.mubr.bf16.mxu0 0
        %618 = vmatmul.mubr.bf16.gmra.mrb[0].mxu0 %v437
        %v619 = vpop.f32.mrb[0].mxu0
        %v620 = vadd.f32 %v560, %v619
        %v621 = vpop.f32.mrb[0].mxu0
        %v622 = vpop.f32.mrb[0].mxu0
        %v623 = vpop.f32.mrb[0].mxu0
        %624 = vdwg.mxu0
        %625 = vst [vmem:[%s327] sm:$0x1] %v620
        %s626 = sand.u32 %s147, 1
        %s627 = scalar_lea.sflag [#allocation4], %s626
        %s628 = sand.u32 %s147, 1
        %s629 = smul.addr %s628, 3
        %s630 = scalar_lea.vmem [#allocation11], %s629
        %s631 = sand.u32 %s173, 1
        %s632 = scalar_lea.sflag [#allocation13], %s631
        %s633 = sand.u32 %s173, 1
        %s634 = scalar_lea.vmem [#allocation12], %s633
        // Predicated region
        $region61: #{joint_transformer_final_block.5} parent=39 // pred_check
          %p635 = pneg %p157
        $region62: #{joint_transformer_final_block.5} parent=39 // pred_check_branch
          %637 = sbr.rel (%p635) target = $region64
        $region63: #{joint_transformer_final_block.5} parent=39 // pred_region
          %s639 = ssub.s32 48, 48
          %640 = vsyncadd %s627, %s639
          %s641 = smul.addr %s29, 3
          %s642 = smul.addr %s641, 16
          %s643 = scalar_lea.hbm %s5, %s642
          %s645 = sshll.u32 %s630, 4
          %s646 = int_to_ptr.vmem [resolvable:$true] %s645
          %648 = dma.vmem_to_hbm [thread:$0]  %s646, 48, %s643, %s627
        $region64: #{joint_transformer_final_block.5} parent=39 // pred_fallthru
          _
        // Predicated region
        $region65: #{joint_transformer_final_block.5} parent=39 // pred_check
          %p649 = pneg %p183
        $region66: #{joint_transformer_final_block.5} parent=39 // pred_check_branch
          %651 = sbr.rel (%p649) target = $region68
        $region67: #{joint_transformer_final_block.5} parent=39 // pred_region
          %s653 = ssub.s32 16, 16
          %654 = vsyncadd %s632, %s653
          %s655 = smul.addr %s29, 16
          %s656 = scalar_lea.hbm %s6, %s655
          %s658 = sshll.u32 %s634, 4
          %s659 = int_to_ptr.vmem [resolvable:$true] %s658
          %661 = dma.vmem_to_hbm [thread:$0]  %s659, 16, %s656, %s632
        $region68: #{joint_transformer_final_block.5} parent=39 // pred_fallthru
          _
      $region40: #{joint_transformer_final_block.5} parent=5 // pred_fallthru
        _
      %p662 = scmp.le.s32.totalorder 2, %s24
      // Predicated region
      $region69: #{joint_transformer_final_block.5} parent=5 // pred_check
        %p663 = pneg %p662
      $region70: #{joint_transformer_final_block.5} parent=5 // pred_check_branch
        %665 = sbr.rel (%p663) target = $region72
      $region71: #{joint_transformer_final_block.5} parent=5 // pred_region
        %s666 = ssub.s32 %s24, 2
        // Predicated region
        $region73: #{joint_transformer_final_block.5} parent=71 // pred_check
          %p667 = pneg %p163
        $region74: #{joint_transformer_final_block.5} parent=71 // pred_check_branch
          %669 = sbr.rel (%p667) target = $region76
        $region75: #{joint_transformer_final_block.5} parent=71 // pred_region
          %s670 = sand.u32 %s148, 1
          %s671 = scalar_lea.sflag [#allocation4], %s670
          %s672 = sand.u32 %s148, 1
          %s673 = smul.addr %s672, 3
          %s674 = scalar_lea.vmem [#allocation11], %s673
          %675 = dma.done %s671, 48
        $region76: #{joint_transformer_final_block.5} parent=71 // pred_fallthru
          _
        // Predicated region
        $region77: #{joint_transformer_final_block.5} parent=71 // pred_check
          %p676 = pneg %p189
        $region78: #{joint_transformer_final_block.5} parent=71 // pred_check_branch
          %678 = sbr.rel (%p676) target = $region80
        $region79: #{joint_transformer_final_block.5} parent=71 // pred_region
          %s679 = sand.u32 %s174, 1
          %s680 = scalar_lea.sflag [#allocation13], %s679
          %s681 = sand.u32 %s174, 1
          %s682 = scalar_lea.vmem [#allocation12], %s681
          %683 = dma.done %s680, 16
        $region80: #{joint_transformer_final_block.5} parent=71 // pred_fallthru
          _
      $region72: #{joint_transformer_final_block.5} parent=5 // pred_fallthru
        _
    $region6: #{joint_transformer_final_block.5} parent=1 // loop_footer
      %s28 = sadd.s32 1, %s24
    $region7: #{joint_transformer_final_block.5} parent=1 // loop_footer_branch
      %23 = sbr.rel target = $region3
    $region8: #{joint_transformer_final_block.5} parent=1 // loop_exit
      _
    %684 = vsyncpa [#allocation3], 1
    %s685 = scalar_lea.sflag [#allocation3], 1
    %686 = vsyncpa %s685, 1
    %687 = vsyncpa [#allocation6], 1
    %688 = vsyncpa [#allocation9], 1
    %689 = vsyncpa [#allocation4], 1
    %s690 = scalar_lea.sflag [#allocation4], 1
    %691 = vsyncpa %s690, 1
    %692 = vsyncpa [#allocation13], 1
    %s693 = scalar_lea.sflag [#allocation13], 1
    %694 = vsyncpa %s693, 1

// kernel: joint_transformer_final_block.7
$region0: #{joint_transformer_final_block.7}
  #allocation0 [shape = 'u32[]', space=smem, size = 0x4, offset = 0x4, fixed_abs, tag = 'smem constant byte address 0x4 - core index']
  #allocation1 [shape = 'u32[144,128]{1,0:T(1,128)}', space=vmem, size = 0x12000, scoped, tag = 'internal scratch']
  %s0 = inlined_call_operand.hbm [shape: f32[2,16,64], index: 0, kind: input, shape index: {}]
  %s1 = inlined_call_operand.hbm [shape: f32[2,1,64], index: 1, kind: input, shape index: {}]
  %s2 = inlined_call_operand.hbm [shape: f32[2,1,64], index: 2, kind: input, shape index: {}]
  %s3 = inlined_call_operand.hbm [shape: bf16[64,128], index: 3, kind: input, shape index: {}]
  %s4 = inlined_call_operand.hbm [shape: f32[1,128], index: 4, kind: input, shape index: {}]
  %s5 = inlined_call_operand.hbm [shape: bf16[2,16,128], index: 5, kind: output, shape index: {}]
  %s6 = sld [smem:[#allocation0]]
  $region73: #{joint_transformer_final_block.7} parent=0
    _
  %s8 = ssub.s32 1, %s6
  %s9 = scalar_select 0, %s8, %s6
  $region1: #{joint_transformer_final_block.7} parent=0
    #allocation2 [shape = 'u8[8192]{0}', space=vmem, size = 0x2000, scoped, tag = 'input window, operand 0']
    #allocation3 [shape = 's32[2]{0}', space=sflag, size = 0x8, scoped, tag = 'scoped memory for joint_transformer_final_block.7']
    #allocation4 [shape = 's32[2]{0}', space=sflag, size = 0x8, scoped, tag = 'scoped memory for joint_transformer_final_block.7']
    #allocation5 [shape = 'u8[1024]{0}', space=vmem, size = 0x400, scoped, tag = 'input window, operand 1']
    #allocation6 [shape = 's32[2]{0}', space=sflag, size = 0x8, scoped, tag = 'scoped memory for joint_transformer_final_block.7']
    #allocation7 [shape = 'u8[1024]{0}', space=vmem, size = 0x400, scoped, tag = 'input window, operand 2']
    #allocation8 [shape = 'u8[16384]{0}', space=vmem, size = 0x4000, scoped, tag = 'input window, operand 3, single buffered']
    #allocation9 [shape = 's32[1]{0}', space=sflag, size = 0x4, scoped, tag = 'scoped memory for joint_transformer_final_block.7']
    #allocation10 [shape = 'u8[512]{0}', space=vmem, size = 0x400, scoped, tag = 'input window, operand 4, single buffered']
    #allocation11 [shape = 'u8[4096]{0}', space=vmem, size = 0x1000, scoped, tag = 'output window, operand 0']
    %10 = vsyncpa [#allocation3], 0
    %s11 = scalar_lea.sflag [#allocation3], 1
    %12 = vsyncpa %s11, 0
    %13 = vsyncpa [#allocation6], 0
    %s14 = scalar_lea.sflag [#allocation6], 1
    %15 = vsyncpa %s14, 0
    %16 = vsyncpa [#allocation9], 0
    %17 = vsyncpa [#allocation4], 0
    %s18 = scalar_lea.sflag [#allocation4], 1
    %19 = vsyncpa %s18, 0
    loop: start=0, step=1, limit=6
    $region2: #{joint_transformer_final_block.7} parent=1 // loop_pre_header
      _
    $region3: #{joint_transformer_final_block.7} parent=1 // loop_header
      %s21 = sphi 0, %s25
      %p22 = scmp.ge.s32.totalorder %s21, 6
      %s28 = sphi 0, %s40
      %s29 = sphi 0, %s36
      %s30 = sphi 0, %s28
      %s31 = sphi 0, %s29
      %s32 = sphi 0, %s30
      %s33 = sphi 0, %s31
      %s45 = sphi 0, %s47
      %s48 = sphi 0, %s45
      %s49 = sphi 0, %s48
      %s65 = sphi 0, %s49
      %s71 = sphi 0, %s73
      %s74 = sphi 0, %s71
      %s75 = sphi 0, %s74
      %s91 = sphi 0, %s75
      %s97 = sphi 0, %s99
      %s100 = sphi 0, %s97
      %s101 = sphi 0, %s100
      %s117 = sphi 0, %s101
      %s121 = sphi 0, %s121
      %s123 = sphi 0, %s121
      %s124 = sphi 0, %s123
      %s138 = sphi 0, %s124
      %s142 = sphi 0, %s142
      %s144 = sphi 0, %s142
      %s145 = sphi 0, %s144
      %s159 = sphi 0, %s145
      %s167 = sphi 0, %s169
      %s170 = sphi 0, %s167
      %s171 = sphi 0, %s170
      %s187 = sphi 0, %s171
    $region4: #{joint_transformer_final_block.7} parent=1 // loop_header_branch
      %24 = sbr.rel (%p22) target = $region8
    $region5: #{joint_transformer_final_block.7} parent=1 // loop_body
      %s26 = ssub.s32 %s21, 1
      %s27 = ssub.s32 %s21, 2
      %s34 = sadd.s32 1, %s29
      %p35 = scmp.ge.s32.totalorder %s34, 2
      %s36 = scalar_select %p35, 0, %s34
      %s37 = sadd.s32 1, %s28
      %s38 = scalar_select %p35, %s37, %s28
      %p39 = scmp.ge.s32.totalorder %s38, 2
      %s40 = scalar_select %p39, 0, %s38
      %s41 = ssub.s32 %s28, %s40
      %s42 = ssub.s32 %s29, %s36
      %s43 = sor.u32 %s41, %s42
      %p44 = scmp.eq.s32.totalorder %s43, 0
      %s46 = sadd.s32 %s45, 1
      %s47 = scalar_select %p44, %s45, %s46
      %p50 = pneg %p44
      %p51 = scmp.eq.s32.totalorder %s21, 3
      %p52 = por %p50, %p51
      %p53 = scmp.ne.s32.totalorder %s45, %s48
      %p54 = scmp.eq.s32.totalorder %s21, 0
      %p55 = por %p53, %p54
      %p56 = scmp.ne.s32.totalorder %s45, %s48
      %p57 = scmp.eq.s32.totalorder %s26, 3
      %p58 = por %p56, %p57
      %p59 = scmp.ne.s32.totalorder %s48, %s49
      %p60 = scmp.eq.s32.totalorder %s26, 0
      %p61 = por %p59, %p60
      %p62 = scmp.ne.s32.totalorder %s48, %s49
      %p63 = scmp.eq.s32.totalorder %s27, 3
      %p64 = por %p62, %p63
      %p66 = scmp.ne.s32.totalorder %s49, %s65
      %p67 = scmp.eq.s32.totalorder %s27, 0
      %p68 = por %p66, %p67
      %s69 = ssub.s32 %s28, %s40
      %p70 = scmp.eq.s32.totalorder %s69, 0
      %s72 = sadd.s32 %s71, 1
      %s73 = scalar_select %p70, %s71, %s72
      %p76 = pneg %p70
      %p77 = scmp.eq.s32.totalorder %s21, 3
      %p78 = por %p76, %p77
      %p79 = scmp.ne.s32.totalorder %s71, %s74
      %p80 = scmp.eq.s32.totalorder %s21, 0
      %p81 = por %p79, %p80
      %p82 = scmp.ne.s32.totalorder %s71, %s74
      %p83 = scmp.eq.s32.totalorder %s26, 3
      %p84 = por %p82, %p83
      %p85 = scmp.ne.s32.totalorder %s74, %s75
      %p86 = scmp.eq.s32.totalorder %s26, 0
      %p87 = por %p85, %p86
      %p88 = scmp.ne.s32.totalorder %s74, %s75
      %p89 = scmp.eq.s32.totalorder %s27, 3
      %p90 = por %p88, %p89
      %p92 = scmp.ne.s32.totalorder %s75, %s91
      %p93 = scmp.eq.s32.totalorder %s27, 0
      %p94 = por %p92, %p93
      %s95 = ssub.s32 %s28, %s40
      %p96 = scmp.eq.s32.totalorder %s95, 0
      %s98 = sadd.s32 %s97, 1
      %s99 = scalar_select %p96, %s97, %s98
      %p102 = pneg %p96
      %p103 = scmp.eq.s32.totalorder %s21, 3
      %p104 = por %p102, %p103
      %p105 = scmp.ne.s32.totalorder %s97, %s100
      %p106 = scmp.eq.s32.totalorder %s21, 0
      %p107 = por %p105, %p106
      %p108 = scmp.ne.s32.totalorder %s97, %s100
      %p109 = scmp.eq.s32.totalorder %s26, 3
      %p110 = por %p108, %p109
      %p111 = scmp.ne.s32.totalorder %s100, %s101
      %p112 = scmp.eq.s32.totalorder %s26, 0
      %p113 = por %p111, %p112
      %p114 = scmp.ne.s32.totalorder %s100, %s101
      %p115 = scmp.eq.s32.totalorder %s27, 3
      %p116 = por %p114, %p115
      %p118 = scmp.ne.s32.totalorder %s101, %s117
      %p119 = scmp.eq.s32.totalorder %s27, 0
      %p120 = por %p118, %p119
      %s122 = sadd.s32 %s121, 1
      %p125 = scmp.eq.s32.totalorder %s21, 3
      %p126 = scmp.ne.s32.totalorder %s121, %s123
      %p127 = scmp.eq.s32.totalorder %s21, 0
      %p128 = por %p126, %p127
      %p129 = scmp.ne.s32.totalorder %s121, %s123
      %p130 = scmp.eq.s32.totalorder %s26, 3
      %p131 = por %p129, %p130
      %p132 = scmp.ne.s32.totalorder %s123, %s124
      %p133 = scmp.eq.s32.totalorder %s26, 0
      %p134 = por %p132, %p133
      %p135 = scmp.ne.s32.totalorder %s123, %s124
      %p136 = scmp.eq.s32.totalorder %s27, 3
      %p137 = por %p135, %p136
      %p139 = scmp.ne.s32.totalorder %s124, %s138
      %p140 = scmp.eq.s32.totalorder %s27, 0
      %p141 = por %p139, %p140
      %s143 = sadd.s32 %s142, 1
      %p146 = scmp.eq.s32.totalorder %s21, 3
      %p147 = scmp.ne.s32.totalorder %s142, %s144
      %p148 = scmp.eq.s32.totalorder %s21, 0
      %p149 = por %p147, %p148
      %p150 = scmp.ne.s32.totalorder %s142, %s144
      %p151 = scmp.eq.s32.totalorder %s26, 3
      %p152 = por %p150, %p151
      %p153 = scmp.ne.s32.totalorder %s144, %s145
      %p154 = scmp.eq.s32.totalorder %s26, 0
      %p155 = por %p153, %p154
      %p156 = scmp.ne.s32.totalorder %s144, %s145
      %p157 = scmp.eq.s32.totalorder %s27, 3
      %p158 = por %p156, %p157
      %p160 = scmp.ne.s32.totalorder %s145, %s159
      %p161 = scmp.eq.s32.totalorder %s27, 0
      %p162 = por %p160, %p161
      %s163 = ssub.s32 %s28, %s40
      %s164 = ssub.s32 %s29, %s36
      %s165 = sor.u32 %s163, %s164
      %p166 = scmp.eq.s32.totalorder %s165, 0
      %s168 = sadd.s32 %s167, 1
      %s169 = scalar_select %p166, %s167, %s168
      %p172 = pneg %p166
      %p173 = scmp.eq.s32.totalorder %s21, 3
      %p174 = por %p172, %p173
      %p175 = scmp.ne.s32.totalorder %s167, %s170
      %p176 = scmp.eq.s32.totalorder %s21, 0
      %p177 = por %p175, %p176
      %p178 = scmp.ne.s32.totalorder %s167, %s170
      %p179 = scmp.eq.s32.totalorder %s26, 3
      %p180 = por %p178, %p179
      %p181 = scmp.ne.s32.totalorder %s170, %s171
      %p182 = scmp.eq.s32.totalorder %s26, 0
      %p183 = por %p181, %p182
      %p184 = scmp.ne.s32.totalorder %s170, %s171
      %p185 = scmp.eq.s32.totalorder %s27, 3
      %p186 = por %p184, %p185
      %p188 = scmp.ne.s32.totalorder %s171, %s187
      %p189 = scmp.eq.s32.totalorder %s27, 0
      %p190 = por %p188, %p189
      %p191 = scmp.le.s32.totalorder 1, %s21
      %p192 = scmp.lt.s32.totalorder %s21, 5
      %p193 = pnand %p191, %p192
      %p194 = pneg %p193
      // Predicated region
      $region9: #{joint_transformer_final_block.7} parent=5 // pred_check
        _
      $region10: #{joint_transformer_final_block.7} parent=5 // pred_check_branch
        %196 = sbr.rel (%p193) target = $region12
      $region11: #{joint_transformer_final_block.7} parent=5 // pred_region
        %s197 = ssub.s32 %s21, 1
        // Predicated region
        $region13: #{joint_transformer_final_block.7} parent=11 // pred_check
          %p198 = pneg %p134
        $region14: #{joint_transformer_final_block.7} parent=11 // pred_check_branch
          %200 = sbr.rel (%p198) target = $region16
        $region15: #{joint_transformer_final_block.7} parent=11 // pred_region
          %s202 = ssub.s32 512, 512
          %203 = vsyncadd [#allocation9], %s202
          %s204 = sshll.u32 [#allocation8], 4
          %s205 = int_to_ptr.vmem [resolvable:$true] %s204
          %210 = dma.hbm_to_vmem [thread:$0]  %s3, 512, %s205, [#allocation9], 64, 64, 4
        $region16: #{joint_transformer_final_block.7} parent=11 // pred_fallthru
          _
        // Predicated region
        $region17: #{joint_transformer_final_block.7} parent=11 // pred_check
          %p211 = pneg %p155
        $region18: #{joint_transformer_final_block.7} parent=11 // pred_check_branch
          %213 = sbr.rel (%p211) target = $region20
        $region19: #{joint_transformer_final_block.7} parent=11 // pred_region
          %s215 = ssub.s32 16, 16
          %216 = vsyncadd [#allocation9], %s215
          %s218 = sshll.u32 [#allocation10], 4
          %s219 = int_to_ptr.vmem [resolvable:$true] %s218
          %221 = dma.hbm_to_vmem [thread:$0]  %s4, 16, %s219, [#allocation9]
        $region20: #{joint_transformer_final_block.7} parent=11 // pred_fallthru
          _
      $region12: #{joint_transformer_final_block.7} parent=5 // pred_fallthru
        _
      %p222 = scmp.lt.s32.totalorder %s21, 4
      // Predicated region
      $region21: #{joint_transformer_final_block.7} parent=5 // pred_check
        %p223 = pneg %p222
      $region22: #{joint_transformer_final_block.7} parent=5 // pred_check_branch
        %225 = sbr.rel (%p223) target = $region24
      $region23: #{joint_transformer_final_block.7} parent=5 // pred_region
        // Predicated region
        $region25: #{joint_transformer_final_block.7} parent=23 // pred_check
          %p226 = pneg %p55
        $region26: #{joint_transformer_final_block.7} parent=23 // pred_check_branch
          %228 = sbr.rel (%p226) target = $region28
        $region27: #{joint_transformer_final_block.7} parent=23 // pred_region
          %s229 = sand.u32 %s45, 1
          %s230 = scalar_lea.sflag [#allocation3], %s229
          %s231 = sand.u32 %s45, 1
          %s232 = smul.addr %s231, 8
          %s233 = scalar_lea.vmem [#allocation2], %s232
          %s235 = ssub.s32 128, 128
          %236 = vsyncadd %s230, %s235
          %s237 = smul.addr %s28, 2
          %s238 = sadd.s32 %s29, %s237
          %s239 = smul.addr %s238, 128
          %s240 = scalar_lea.hbm %s0, %s239
          %s242 = sshll.u32 %s233, 4
          %s243 = int_to_ptr.vmem [resolvable:$true] %s242
          %245 = dma.hbm_to_vmem [thread:$0]  %s240, 128, %s243, %s230
        $region28: #{joint_transformer_final_block.7} parent=23 // pred_fallthru
          _
        // Predicated region
        $region29: #{joint_transformer_final_block.7} parent=23 // pred_check
          %p246 = pneg %p81
        $region30: #{joint_transformer_final_block.7} parent=23 // pred_check_branch
          %248 = sbr.rel (%p246) target = $region32
        $region31: #{joint_transformer_final_block.7} parent=23 // pred_region
          %s249 = sand.u32 %s21, 1
          %s250 = scalar_lea.sflag [#allocation6], %s249
          %s251 = sand.u32 %s71, 1
          %s252 = scalar_lea.vmem [#allocation5], %s251
          %s254 = ssub.s32 16, 16
          %255 = vsyncadd %s250, %s254
          %s256 = smul.addr %s28, 16
          %s257 = scalar_lea.hbm %s1, %s256
          %s259 = sshll.u32 %s252, 4
          %s260 = int_to_ptr.vmem [resolvable:$true] %s259
          %262 = dma.hbm_to_vmem [thread:$0]  %s257, 16, %s260, %s250
        $region32: #{joint_transformer_final_block.7} parent=23 // pred_fallthru
          _
        // Predicated region
        $region33: #{joint_transformer_final_block.7} parent=23 // pred_check
          %p263 = pneg %p107
        $region34: #{joint_transformer_final_block.7} parent=23 // pred_check_branch
          %265 = sbr.rel (%p263) target = $region36
        $region35: #{joint_transformer_final_block.7} parent=23 // pred_region
          %s266 = sand.u32 %s21, 1
          %s267 = scalar_lea.sflag [#allocation6], %s266
          %s268 = sand.u32 %s97, 1
          %s269 = scalar_lea.vmem [#allocation7], %s268
          %s271 = ssub.s32 16, 16
          %272 = vsyncadd %s267, %s271
          %s273 = smul.addr %s28, 16
          %s274 = scalar_lea.hbm %s2, %s273
          %s276 = sshll.u32 %s269, 4
          %s277 = int_to_ptr.vmem [resolvable:$true] %s276
          %279 = dma.hbm_to_vmem [thread:$0]  %s274, 16, %s277, %s267
        $region36: #{joint_transformer_final_block.7} parent=23 // pred_fallthru
          _
      $region24: #{joint_transformer_final_block.7} parent=5 // pred_fallthru
        _
      %p280 = scmp.le.s32.totalorder 1, %s21
      %p281 = scmp.lt.s32.totalorder %s21, 5
      %p282 = pnand %p280, %p281
      %p283 = pneg %p282
      // Predicated region
      $region37: #{joint_transformer_final_block.7} parent=5 // pred_check
        _
      $region38: #{joint_transformer_final_block.7} parent=5 // pred_check_branch
        %285 = sbr.rel (%p282) target = $region40
      $region39: #{joint_transformer_final_block.7} parent=5 // pred_region
        %s286 = ssub.s32 %s21, 1
        %s287 = sand.u32 %s48, 1
        %s288 = scalar_lea.sflag [#allocation3], %s287
        %s289 = sand.u32 %s48, 1
        %s290 = smul.addr %s289, 8
        %s291 = scalar_lea.vmem [#allocation2], %s290
        // Predicated region
        $region41: #{joint_transformer_final_block.7} parent=39 // pred_check
          %p292 = pneg %p61
        $region42: #{joint_transformer_final_block.7} parent=39 // pred_check_branch
          %294 = sbr.rel (%p292) target = $region44
        $region43: #{joint_transformer_final_block.7} parent=39 // pred_region
          %295 = dma.done %s288, 128
        $region44: #{joint_transformer_final_block.7} parent=39 // pred_fallthru
          _
        %s296 = sand.u32 %s26, 1
        %s297 = scalar_lea.sflag [#allocation6], %s296
        %s298 = sand.u32 %s74, 1
        %s299 = scalar_lea.vmem [#allocation5], %s298
        // Predicated region
        $region45: #{joint_transformer_final_block.7} parent=39 // pred_check
          %p300 = pneg %p87
        $region46: #{joint_transformer_final_block.7} parent=39 // pred_check_branch
          %302 = sbr.rel (%p300) target = $region48
        $region47: #{joint_transformer_final_block.7} parent=39 // pred_region
          %303 = dma.done %s297, 16
        $region48: #{joint_transformer_final_block.7} parent=39 // pred_fallthru
          _
        %s304 = sand.u32 %s26, 1
        %s305 = scalar_lea.sflag [#allocation6], %s304
        %s306 = sand.u32 %s100, 1
        %s307 = scalar_lea.vmem [#allocation7], %s306
        // Predicated region
        $region49: #{joint_transformer_final_block.7} parent=39 // pred_check
          %p308 = pneg %p113
        $region50: #{joint_transformer_final_block.7} parent=39 // pred_check_branch
          %310 = sbr.rel (%p308) target = $region52
        $region51: #{joint_transformer_final_block.7} parent=39 // pred_region
          %311 = dma.done %s305, 16
        $region52: #{joint_transformer_final_block.7} parent=39 // pred_fallthru
          _
        // Predicated region
        $region53: #{joint_transformer_final_block.7} parent=39 // pred_check
          %p312 = pneg %p134
        $region54: #{joint_transformer_final_block.7} parent=39 // pred_check_branch
          %314 = sbr.rel (%p312) target = $region56
        $region55: #{joint_transformer_final_block.7} parent=39 // pred_region
          %315 = dma.done [#allocation9], 512
        $region56: #{joint_transformer_final_block.7} parent=39 // pred_fallthru
          _
        // Predicated region
        $region57: #{joint_transformer_final_block.7} parent=39 // pred_check
          %p316 = pneg %p155
        $region58: #{joint_transformer_final_block.7} parent=39 // pred_check_branch
          %318 = sbr.rel (%p316) target = $region60
        $region59: #{joint_transformer_final_block.7} parent=39 // pred_region
          %319 = dma.done [#allocation9], 16
        $region60: #{joint_transformer_final_block.7} parent=39 // pred_fallthru
          _
        %s320 = sand.u32 %s48, 1
        %s321 = scalar_lea.sflag [#allocation3], %s320
        %s322 = sand.u32 %s48, 1
        %s323 = smul.addr %s322, 8
        %s324 = scalar_lea.vmem [#allocation2], %s323
        %p325 = pneg %p61
        %p326 = pneg %p58
        %s327 = sand.u32 %s26, 1
        %s328 = scalar_lea.sflag [#allocation6], %s327
        %s329 = sand.u32 %s74, 1
        %s330 = scalar_lea.vmem [#allocation5], %s329
        %p331 = pneg %p87
        %p332 = pneg %p84
        %s333 = sand.u32 %s26, 1
        %s334 = scalar_lea.sflag [#allocation6], %s333
        %s335 = sand.u32 %s100, 1
        %s336 = scalar_lea.vmem [#allocation7], %s335
        %p337 = pneg %p113
        %p338 = pneg %p110
        %p339 = pneg %p134
        %p340 = pneg %p131
        %p341 = pneg %p155
        %p342 = pneg %p152
        %p343 = pneg %p183
        %p344 = pneg %p180
        %s345 = sand.u32 %s170, 1
        %s346 = scalar_lea.sflag [#allocation4], %s345
        %s347 = sand.u32 %s170, 1
        %s348 = smul.addr %s347, 4
        %s349 = scalar_lea.vmem [#allocation11], %s348
        %v351 = vld [vmem:[%s291] sm:$0xff]
        %vm352 = vcmask 523264
        %v353 = vsel %vm352, %v351, 0.0
        %354 = vadd.xlane.f32.xlu0 %v353
        %v355 = vpop.xlane.xlu0 %354
        %v356 = vrcp.pop 64.0
        %v357 = vmul.f32 %v355, %v356
        %v358 = vsub.f32 %v351, %v357
        %v359 = vmul.f32 %v358, %v358
        %v360 = vsel %vm352, %v359, 0.0
        %361 = vadd.xlane.f32.xlu0 %v360
        %v362 = vpop.xlane.xlu0 %361
        %v363 = vmul.f32 %v362, %v356
        %v364 = vadd.f32 %v363, 1e-06
        %v365 = vrsqrt.pop %v364
        %v366 = vmul.f32 %v358, %v365
        %v367 = vld [vmem:[%s307] sm:$0x1]
        %v368 = vadd.f32 %v367, 1.0
        %v370 = vlaneseq
        %v371 = vshrl.u32 %v370, 7
        %v372 = vsub.s32 0, %v371
        %v373 = vrot.slane %v368, %v372
        %v375 = vmul.f32 %v366, %v373
        %v376 = vld [vmem:[%s299] sm:$0x1]
        %v378 = vlaneseq
        %v379 = vshrl.u32 %v378, 7
        %v380 = vsub.s32 0, %v379
        %v381 = vrot.slane %v376, %v380
        %v383 = vadd.f32 %v375, %v381
        %v384 = vpack.c.bf16 %v383, %v383
        %v385 = vld [vmem:[#allocation8] sm:$0xf]
        %v386 = vld [vmem:[#allocation8 + $0x4] sm:$0xf]
        %v387 = vld [vmem:[#allocation8 + $0x8] sm:$0xf]
        %v388 = vld [vmem:[#allocation8 + $0xc] sm:$0xf]
        %v389 = vld [vmem:[#allocation8 + $0x10] sm:$0xf]
        %v390 = vld [vmem:[#allocation8 + $0x14] sm:$0xf]
        %v391 = vld [vmem:[#allocation8 + $0x18] sm:$0xf]
        %v392 = vld [vmem:[#allocation8 + $0x1c] sm:$0xf]
        %v393 = vld [vmem:[#allocation10] sm:$0x1]
        %v395 = vlaneseq
        %v396 = vshrl.u32 %v395, 7
        %v397 = vsub.s32 0, %v396
        %v398 = vrot.slane %v393, %v397
        %v408 = vunpack.c.l.b16 %v385
        %v409 = vunpack.c.l.b16 %v386
        %v410 = vunpack.c.l.b16 %v387
        %v411 = vunpack.c.l.b16 %v388
        %v412 = vunpack.c.l.b16 %v389
        %v413 = vunpack.c.l.b16 %v390
        %v414 = vunpack.c.l.b16 %v391
        %v415 = vunpack.c.l.b16 %v392
        %v416 = vpack.c.b16 %v409, %v408
        %v417 = vpack.c.b16 %v411, %v410
        %v418 = vpack.c.b16 %v413, %v412
        %v419 = vpack.c.b16 %v415, %v414
        %v425 = vsel %vm352, %v384, 0
        %427 = vmatprep.subr.bf16.mxu0 0
        %428 = vmatpush1.bf16.msra.mxu0 %v416
        %429 = vmatprep.subr.bf16.mxu0 0
        %430 = vmatpush1.bf16.msra.mxu0 %v417
        %431 = vmatprep.subr.bf16.mxu0 0
        %432 = vmatpush1.bf16.msra.mxu0 %v418
        %433 = vmatprep.subr.bf16.mxu0 0
        %434 = vmatpush1.bf16.msra.mxu0 %v419
        %435 = vmatprep.subr.bf16.mxu0 0
        %436 = vmatpush1.bf16.msra.mxu0 0
        %437 = vmatprep.subr.bf16.mxu0 0
        %438 = vmatpush1.bf16.msra.mxu0 0
        %439 = vmatprep.subr.bf16.mxu0 0
        %440 = vmatpush1.bf16.msra.mxu0 0
        %441 = vmatprep.subr.bf16.mxu0 0
        %442 = vmatpush1.bf16.msra.mxu0 0
        %443 = vmatprep.subr.bf16.mxu0 0
        %444 = vmatpush1.bf16.msra.mxu0 0
        %445 = vmatprep.subr.bf16.mxu0 0
        %446 = vmatpush1.bf16.msra.mxu0 0
        %447 = vmatprep.subr.bf16.mxu0 0
        %448 = vmatpush1.bf16.msra.mxu0 0
        %449 = vmatprep.subr.bf16.mxu0 0
        %450 = vmatpush1.bf16.msra.mxu0 0
        %451 = vmatprep.subr.bf16.mxu0 0
        %452 = vmatpush1.bf16.msra.mxu0 0
        %453 = vmatprep.subr.bf16.mxu0 0
        %454 = vmatpush1.bf16.msra.mxu0 0
        %455 = vmatprep.subr.bf16.mxu0 0
        %456 = vmatpush1.bf16.msra.mxu0 0
        %457 = vmatprep.subr.bf16.mxu0 0
        %458 = vmatpush1.bf16.msra.mxu0 0
        %459 = vmatprep.mubr.bf16.mxu0 0
        %460 = vmatmul.mubr.bf16.gmra.mrb[0].mxu0 %v425
        %v461 = vpop.f32.mrb[0].mxu0
        %v462 = vadd.f32 %v398, %v461
        %v463 = vpop.f32.mrb[0].mxu0
        %v464 = vpop.f32.mrb[0].mxu0
        %v465 = vpop.f32.mrb[0].mxu0
        %466 = vdwg.mxu0
        %v467 = vpack.c.bf16 %v462, %v462
        %468 = vst [vmem:[%s349] sm:$0xf] %v467
        %s469 = sand.u32 %s170, 1
        %s470 = scalar_lea.sflag [#allocation4], %s469
        %s471 = sand.u32 %s170, 1
        %s472 = smul.addr %s471, 4
        %s473 = scalar_lea.vmem [#allocation11], %s472
        // Predicated region
        $region61: #{joint_transformer_final_block.7} parent=39 // pred_check
          %p474 = pneg %p180
        $region62: #{joint_transformer_final_block.7} parent=39 // pred_check_branch
          %476 = sbr.rel (%p474) target = $region64
        $region63: #{joint_transformer_final_block.7} parent=39 // pred_region
          %s478 = ssub.s32 64, 64
          %479 = vsyncadd %s470, %s478
          %s480 = smul.addr %s30, 2
          %s481 = sadd.s32 %s31, %s480
          %s482 = smul.addr %s481, 64
          %s483 = scalar_lea.hbm %s5, %s482
          %s485 = sshll.u32 %s473, 4
          %s486 = int_to_ptr.vmem [resolvable:$true] %s485
          %488 = dma.vmem_to_hbm [thread:$0]  %s486, 64, %s483, %s470
        $region64: #{joint_transformer_final_block.7} parent=39 // pred_fallthru
          _
      $region40: #{joint_transformer_final_block.7} parent=5 // pred_fallthru
        _
      %p489 = scmp.le.s32.totalorder 2, %s21
      // Predicated region
      $region65: #{joint_transformer_final_block.7} parent=5 // pred_check
        %p490 = pneg %p489
      $region66: #{joint_transformer_final_block.7} parent=5 // pred_check_branch
        %492 = sbr.rel (%p490) target = $region68
      $region67: #{joint_transformer_final_block.7} parent=5 // pred_region
        %s493 = ssub.s32 %s21, 2
        // Predicated region
        $region69: #{joint_transformer_final_block.7} parent=67 // pred_check
          %p494 = pneg %p186
        $region70: #{joint_transformer_final_block.7} parent=67 // pred_check_branch
          %496 = sbr.rel (%p494) target = $region72
        $region71: #{joint_transformer_final_block.7} parent=67 // pred_region
          %s497 = sand.u32 %s171, 1
          %s498 = scalar_lea.sflag [#allocation4], %s497
          %s499 = sand.u32 %s171, 1
          %s500 = smul.addr %s499, 4
          %s501 = scalar_lea.vmem [#allocation11], %s500
          %502 = dma.done %s498, 64
        $region72: #{joint_transformer_final_block.7} parent=67 // pred_fallthru
          _
      $region68: #{joint_transformer_final_block.7} parent=5 // pred_fallthru
        _
    $region6: #{joint_transformer_final_block.7} parent=1 // loop_footer
      %s25 = sadd.s32 1, %s21
    $region7: #{joint_transformer_final_block.7} parent=1 // loop_footer_branch
      %20 = sbr.rel target = $region3
    $region8: #{joint_transformer_final_block.7} parent=1 // loop_exit
      _
    %503 = vsyncpa [#allocation3], 1
    %s504 = scalar_lea.sflag [#allocation3], 1
    %505 = vsyncpa %s504, 1
    %506 = vsyncpa [#allocation6], 1
    %s507 = scalar_lea.sflag [#allocation6], 1
    %508 = vsyncpa %s507, 1
    %509 = vsyncpa [#allocation9], 1
    %510 = vsyncpa [#allocation4], 1
    %s511 = scalar_lea.sflag [#allocation4], 1
    %512 = vsyncpa %s511, 1

// kernel: joint_transformer_final_block.8
$region0: #{joint_transformer_final_block.8}
  #allocation0 [shape = 'u32[]', space=smem, size = 0x4, offset = 0x4, fixed_abs, tag = 'smem constant byte address 0x4 - core index']
  #allocation1 [shape = 'u32[144,128]{1,0:T(1,128)}', space=vmem, size = 0x12000, scoped, tag = 'internal scratch']
  #allocation2 [shape = 'f32[2,8,1]{2,1,0:T(8,128)}', space=vmem, size = 0x2000, scoped, tag = 'scratch operand']
  #allocation3 [shape = 'f32[2,8,1]{2,1,0:T(8,128)}', space=vmem, size = 0x2000, scoped, tag = 'scratch operand']
  #allocation4 [shape = 'f32[2,8,32]{2,1,0:T(8,128)}', space=vmem, size = 0x2000, scoped, tag = 'scratch operand']
  #allocation12 [shape = 's32[]', space=sflag, size = 0x4, offset = 0, fixed_abs, tag = 'sflag constant byte address 0x0 - dummy sync flag']
  #allocation14 [shape = 's32[]', space=sflag, size = 0x4, offset = 0, fixed_abs, tag = 'sflag constant byte address 0x0 - dummy sync flag']
  %s0 = inlined_call_operand.hbm [shape: bf16[2,2,16,32], index: 0, kind: input, shape index: {}]
  %s1 = inlined_call_operand.hbm [shape: bf16[2,2,32,32], index: 1, kind: input, shape index: {}]
  %s2 = inlined_call_operand.hbm [shape: bf16[2,2,32,32], index: 2, kind: input, shape index: {}]
  %s3 = inlined_call_operand.hbm [shape: bf16[2,16,64], index: 3, kind: output, shape index: {}]
  %s4 = sld [smem:[#allocation0]]
  $region65: #{joint_transformer_final_block.8} parent=0
    _
  %s6 = ssub.s32 1, %s4
  %s7 = scalar_select 0, %s6, %s4
  $region1: #{joint_transformer_final_block.8} parent=0
    #allocation5 [shape = 'u8[8192]{0}', space=vmem, size = 0x2000, scoped, tag = 'input window, operand 0']
    #allocation6 [shape = 's32[2]{0}', space=sflag, size = 0x8, scoped, tag = 'scoped memory for joint_transformer_final_block.8']
    #allocation7 [shape = 's32[2]{0}', space=sflag, size = 0x8, scoped, tag = 'scoped memory for joint_transformer_final_block.8']
    #allocation8 [shape = 'u8[16384]{0}', space=vmem, size = 0x4000, scoped, tag = 'input window, operand 1']
    #allocation9 [shape = 's32[2]{0}', space=sflag, size = 0x8, scoped, tag = 'scoped memory for joint_transformer_final_block.8']
    #allocation10 [shape = 'u8[16384]{0}', space=vmem, size = 0x4000, scoped, tag = 'input window, operand 2']
    #allocation11 [shape = 'u8[4096]{0}', space=vmem, size = 0x1000, scoped, tag = 'output window, operand 0']
    %8 = vsyncpa [#allocation6], 0
    %s9 = scalar_lea.sflag [#allocation6], 1
    %10 = vsyncpa %s9, 0
    %11 = vsyncpa [#allocation9], 0
    %s12 = scalar_lea.sflag [#allocation9], 1
    %13 = vsyncpa %s12, 0
    %14 = vsyncpa [#allocation7], 0
    %s15 = scalar_lea.sflag [#allocation7], 1
    %16 = vsyncpa %s15, 0
    loop: start=0, step=1, limit=10
    $region2: #{joint_transformer_final_block.8} parent=1 // loop_pre_header
      _
    $region3: #{joint_transformer_final_block.8} parent=1 // loop_header
      %s18 = sphi 0, %s22
      %p19 = scmp.ge.s32.totalorder %s18, 10
      %s25 = sphi 0, %s44
      %s26 = sphi 0, %s40
      %s27 = sphi 0, %s36
      %s28 = sphi 0, %s25
      %s29 = sphi 0, %s26
      %s30 = sphi 0, %s27
      %s31 = sphi 0, %s28
      %s32 = sphi 0, %s29
      %s33 = sphi 0, %s30
      %s49 = sphi 0, %s51
      %s52 = sphi 0, %s49
      %s53 = sphi 0, %s52
      %s69 = sphi 0, %s53
      %s77 = sphi 0, %s79
      %s80 = sphi 0, %s77
      %s81 = sphi 0, %s80
      %s97 = sphi 0, %s81
      %s105 = sphi 0, %s107
      %s108 = sphi 0, %s105
      %s109 = sphi 0, %s108
      %s125 = sphi 0, %s109
      %s133 = sphi 0, %s135
      %s136 = sphi 0, %s133
      %s137 = sphi 0, %s136
      %s153 = sphi 0, %s137
    $region4: #{joint_transformer_final_block.8} parent=1 // loop_header_branch
      %21 = sbr.rel (%p19) target = $region8
    $region5: #{joint_transformer_final_block.8} parent=1 // loop_body
      %s23 = ssub.s32 %s18, 1
      %s24 = ssub.s32 %s18, 2
      %s34 = sadd.s32 1, %s27
      %p35 = scmp.ge.s32.totalorder %s34, 2
      %s36 = scalar_select %p35, 0, %s34
      %s37 = sadd.s32 1, %s26
      %s38 = scalar_select %p35, %s37, %s26
      %p39 = scmp.ge.s32.totalorder %s38, 2
      %s40 = scalar_select %p39, 0, %s38
      %s41 = sadd.s32 1, %s25
      %s42 = scalar_select %p39, %s41, %s25
      %p43 = scmp.ge.s32.totalorder %s42, 2
      %s44 = scalar_select %p43, 0, %s42
      %s45 = ssub.s32 %s25, %s44
      %s46 = ssub.s32 %s26, %s40
      %s47 = sor.u32 %s45, %s46
      %p48 = scmp.eq.s32.totalorder %s47, 0
      %s50 = sadd.s32 %s49, 1
      %s51 = scalar_select %p48, %s49, %s50
      %p54 = pneg %p48
      %p55 = scmp.eq.s32.totalorder %s18, 7
      %p56 = por %p54, %p55
      %p57 = scmp.ne.s32.totalorder %s49, %s52
      %p58 = scmp.eq.s32.totalorder %s18, 0
      %p59 = por %p57, %p58
      %p60 = scmp.ne.s32.totalorder %s49, %s52
      %p61 = scmp.eq.s32.totalorder %s23, 7
      %p62 = por %p60, %p61
      %p63 = scmp.ne.s32.totalorder %s52, %s53
      %p64 = scmp.eq.s32.totalorder %s23, 0
      %p65 = por %p63, %p64
      %p66 = scmp.ne.s32.totalorder %s52, %s53
      %p67 = scmp.eq.s32.totalorder %s24, 7
      %p68 = por %p66, %p67
      %p70 = scmp.ne.s32.totalorder %s53, %s69
      %p71 = scmp.eq.s32.totalorder %s24, 0
      %p72 = por %p70, %p71
      %s73 = ssub.s32 %s25, %s44
      %s74 = ssub.s32 %s27, %s36
      %s75 = sor.u32 %s73, %s74
      %p76 = scmp.eq.s32.totalorder %s75, 0
      %s78 = sadd.s32 %s77, 1
      %s79 = scalar_select %p76, %s77, %s78
      %p82 = pneg %p76
      %p83 = scmp.eq.s32.totalorder %s18, 7
      %p84 = por %p82, %p83
      %p85 = scmp.ne.s32.totalorder %s77, %s80
      %p86 = scmp.eq.s32.totalorder %s18, 0
      %p87 = por %p85, %p86
      %p88 = scmp.ne.s32.totalorder %s77, %s80
      %p89 = scmp.eq.s32.totalorder %s23, 7
      %p90 = por %p88, %p89
      %p91 = scmp.ne.s32.totalorder %s80, %s81
      %p92 = scmp.eq.s32.totalorder %s23, 0
      %p93 = por %p91, %p92
      %p94 = scmp.ne.s32.totalorder %s80, %s81
      %p95 = scmp.eq.s32.totalorder %s24, 7
      %p96 = por %p94, %p95
      %p98 = scmp.ne.s32.totalorder %s81, %s97
      %p99 = scmp.eq.s32.totalorder %s24, 0
      %p100 = por %p98, %p99
      %s101 = ssub.s32 %s25, %s44
      %s102 = ssub.s32 %s27, %s36
      %s103 = sor.u32 %s101, %s102
      %p104 = scmp.eq.s32.totalorder %s103, 0
      %s106 = sadd.s32 %s105, 1
      %s107 = scalar_select %p104, %s105, %s106
      %p110 = pneg %p104
      %p111 = scmp.eq.s32.totalorder %s18, 7
      %p112 = por %p110, %p111
      %p113 = scmp.ne.s32.totalorder %s105, %s108
      %p114 = scmp.eq.s32.totalorder %s18, 0
      %p115 = por %p113, %p114
      %p116 = scmp.ne.s32.totalorder %s105, %s108
      %p117 = scmp.eq.s32.totalorder %s23, 7
      %p118 = por %p116, %p117
      %p119 = scmp.ne.s32.totalorder %s108, %s109
      %p120 = scmp.eq.s32.totalorder %s23, 0
      %p121 = por %p119, %p120
      %p122 = scmp.ne.s32.totalorder %s108, %s109
      %p123 = scmp.eq.s32.totalorder %s24, 7
      %p124 = por %p122, %p123
      %p126 = scmp.ne.s32.totalorder %s109, %s125
      %p127 = scmp.eq.s32.totalorder %s24, 0
      %p128 = por %p126, %p127
      %s129 = ssub.s32 %s25, %s44
      %s130 = ssub.s32 %s26, %s40
      %s131 = sor.u32 %s129, %s130
      %p132 = scmp.eq.s32.totalorder %s131, 0
      %s134 = sadd.s32 %s133, 1
      %s135 = scalar_select %p132, %s133, %s134
      %p138 = pneg %p132
      %p139 = scmp.eq.s32.totalorder %s18, 7
      %p140 = por %p138, %p139
      %p141 = scmp.ne.s32.totalorder %s133, %s136
      %p142 = scmp.eq.s32.totalorder %s18, 0
      %p143 = por %p141, %p142
      %p144 = scmp.ne.s32.totalorder %s133, %s136
      %p145 = scmp.eq.s32.totalorder %s23, 7
      %p146 = por %p144, %p145
      %p147 = scmp.ne.s32.totalorder %s136, %s137
      %p148 = scmp.eq.s32.totalorder %s23, 0
      %p149 = por %p147, %p148
      %p150 = scmp.ne.s32.totalorder %s136, %s137
      %p151 = scmp.eq.s32.totalorder %s24, 7
      %p152 = por %p150, %p151
      %p154 = scmp.ne.s32.totalorder %s137, %s153
      %p155 = scmp.eq.s32.totalorder %s24, 0
      %p156 = por %p154, %p155
      %p157 = scmp.le.s32.totalorder 1, %s18
      %p158 = scmp.lt.s32.totalorder %s18, 9
      %p159 = pnand %p157, %p158
      %p160 = pneg %p159
      // Predicated region
      $region9: #{joint_transformer_final_block.8} parent=5 // pred_check
        _
      $region10: #{joint_transformer_final_block.8} parent=5 // pred_check_branch
        %162 = sbr.rel (%p159) target = $region12
      $region11: #{joint_transformer_final_block.8} parent=5 // pred_region
        %s163 = ssub.s32 %s18, 1
      $region12: #{joint_transformer_final_block.8} parent=5 // pred_fallthru
        _
      %p164 = scmp.lt.s32.totalorder %s18, 8
      // Predicated region
      $region13: #{joint_transformer_final_block.8} parent=5 // pred_check
        %p165 = pneg %p164
      $region14: #{joint_transformer_final_block.8} parent=5 // pred_check_branch
        %167 = sbr.rel (%p165) target = $region16
      $region15: #{joint_transformer_final_block.8} parent=5 // pred_region
        // Predicated region
        $region17: #{joint_transformer_final_block.8} parent=15 // pred_check
          %p168 = pneg %p59
        $region18: #{joint_transformer_final_block.8} parent=15 // pred_check_branch
          %170 = sbr.rel (%p168) target = $region20
        $region19: #{joint_transformer_final_block.8} parent=15 // pred_region
          %s171 = sand.u32 %s49, 1
          %s172 = scalar_lea.sflag [#allocation6], %s171
          %s173 = sand.u32 %s49, 1
          %s174 = smul.addr %s173, 8
          %s175 = scalar_lea.vmem [#allocation5], %s174
          %s177 = ssub.s32 128, 128
          %178 = vsyncadd %s172, %s177
          %s179 = smul.addr %s25, 4
          %s180 = sadd.s32 %s26, %s179
          %s181 = smul.addr %s180, 64
          %s182 = scalar_lea.hbm %s0, %s181
          %s183 = sshll.u32 %s175, 4
          %s184 = int_to_ptr.vmem [resolvable:$true] %s183
          %189 = dma.hbm_to_vmem [thread:$0]  %s182, 128, %s184, %s172, 128, 64, 4
        $region20: #{joint_transformer_final_block.8} parent=15 // pred_fallthru
          _
        // Predicated region
        $region21: #{joint_transformer_final_block.8} parent=15 // pred_check
          %p190 = pneg %p87
        $region22: #{joint_transformer_final_block.8} parent=15 // pred_check_branch
          %192 = sbr.rel (%p190) target = $region24
        $region23: #{joint_transformer_final_block.8} parent=15 // pred_region
          #allocation13 [shape = 'u32[6]{0}', space=smem, size = 0x18, scoped, tag = 'DMA stride descriptor']
          %s193 = sand.u32 %s18, 1
          %s194 = scalar_lea.sflag [#allocation9], %s193
          %s195 = sand.u32 %s77, 1
          %s196 = smul.addr %s195, 16
          %s197 = scalar_lea.vmem [#allocation8], %s196
          %s198 = smul.u32 2, %s27
          %s200 = ssub.s32 256, 256
          %201 = vsyncadd %s194, %s200
          %s202 = smul.addr %s25, 8
          %s203 = sadd.s32 %s198, %s202
          %s204 = smul.addr %s203, 64
          %s205 = scalar_lea.hbm %s1, %s204
          %s207 = sshll.u32 1, 14
          %s208 = sxor.u32 4294967295, %s207
          %s210 = sld [smem:[#allocation0]]
          %s211 = sadd.s32 2, %s210
          %s213 = sshll.u32 7, 26
          %s214 = sxor.u32 4294967295, %s213
          %s215 = sand.u32 0, %s214
          %s216 = sshll.u32 %s211, 26
          %s217 = sor.u32 %s215, %s216
          %s218 = sshll.u32 %s197, 4
          %s219 = int_to_ptr.vmem [resolvable:$true] %s218
          %225 = sst [smem:[#allocation13]] 256
          %s226 = scalar_lea.smem [#allocation13], 1
          %227 = sst [smem:[%s226]] 128
          %s228 = scalar_lea.smem [#allocation13], 2
          %229 = sst [smem:[%s228]] 2
          %s230 = scalar_lea.smem [#allocation13], 3
          %231 = sst [smem:[%s230]] 64
          %s232 = scalar_lea.smem [#allocation13], 4
          %233 = sst [smem:[%s232]] 64
          %s234 = scalar_lea.smem [#allocation13], 5
          %235 = sst [smem:[%s234]] 4
          %237 = dma.general %s205, 256, %s219, %s194, [#allocation12], [#allocation13], %s217, 0
        $region24: #{joint_transformer_final_block.8} parent=15 // pred_fallthru
          _
        // Predicated region
        $region25: #{joint_transformer_final_block.8} parent=15 // pred_check
          %p238 = pneg %p115
        $region26: #{joint_transformer_final_block.8} parent=15 // pred_check_branch
          %240 = sbr.rel (%p238) target = $region28
        $region27: #{joint_transformer_final_block.8} parent=15 // pred_region
          #allocation15 [shape = 'u32[6]{0}', space=smem, size = 0x18, scoped, tag = 'DMA stride descriptor']
          %s241 = sand.u32 %s18, 1
          %s242 = scalar_lea.sflag [#allocation9], %s241
          %s243 = sand.u32 %s105, 1
          %s244 = smul.addr %s243, 16
          %s245 = scalar_lea.vmem [#allocation10], %s244
          %s246 = smul.u32 2, %s27
          %s248 = ssub.s32 256, 256
          %249 = vsyncadd %s242, %s248
          %s250 = smul.addr %s25, 8
          %s251 = sadd.s32 %s246, %s250
          %s252 = smul.addr %s251, 64
          %s253 = scalar_lea.hbm %s2, %s252
          %s255 = sshll.u32 1, 14
          %s256 = sxor.u32 4294967295, %s255
          %s258 = sld [smem:[#allocation0]]
          %s259 = sadd.s32 2, %s258
          %s261 = sshll.u32 7, 26
          %s262 = sxor.u32 4294967295, %s261
          %s263 = sand.u32 0, %s262
          %s264 = sshll.u32 %s259, 26
          %s265 = sor.u32 %s263, %s264
          %s266 = sshll.u32 %s245, 4
          %s267 = int_to_ptr.vmem [resolvable:$true] %s266
          %273 = sst [smem:[#allocation15]] 256
          %s274 = scalar_lea.smem [#allocation15], 1
          %275 = sst [smem:[%s274]] 128
          %s276 = scalar_lea.smem [#allocation15], 2
          %277 = sst [smem:[%s276]] 2
          %s278 = scalar_lea.smem [#allocation15], 3
          %279 = sst [smem:[%s278]] 64
          %s280 = scalar_lea.smem [#allocation15], 4
          %281 = sst [smem:[%s280]] 64
          %s282 = scalar_lea.smem [#allocation15], 5
          %283 = sst [smem:[%s282]] 4
          %285 = dma.general %s253, 256, %s267, %s242, [#allocation14], [#allocation15], %s265, 0
        $region28: #{joint_transformer_final_block.8} parent=15 // pred_fallthru
          _
      $region16: #{joint_transformer_final_block.8} parent=5 // pred_fallthru
        _
      %p286 = scmp.le.s32.totalorder 1, %s18
      %p287 = scmp.lt.s32.totalorder %s18, 9
      %p288 = pnand %p286, %p287
      %p289 = pneg %p288
      // Predicated region
      $region29: #{joint_transformer_final_block.8} parent=5 // pred_check
        _
      $region30: #{joint_transformer_final_block.8} parent=5 // pred_check_branch
        %291 = sbr.rel (%p288) target = $region32
      $region31: #{joint_transformer_final_block.8} parent=5 // pred_region
        %s292 = ssub.s32 %s18, 1
        %s293 = sand.u32 %s52, 1
        %s294 = scalar_lea.sflag [#allocation6], %s293
        %s295 = sand.u32 %s52, 1
        %s296 = smul.addr %s295, 8
        %s297 = scalar_lea.vmem [#allocation5], %s296
        // Predicated region
        $region33: #{joint_transformer_final_block.8} parent=31 // pred_check
          %p298 = pneg %p65
        $region34: #{joint_transformer_final_block.8} parent=31 // pred_check_branch
          %300 = sbr.rel (%p298) target = $region36
        $region35: #{joint_transformer_final_block.8} parent=31 // pred_region
          %301 = dma.done %s294, 128
        $region36: #{joint_transformer_final_block.8} parent=31 // pred_fallthru
          _
        %s302 = sand.u32 %s23, 1
        %s303 = scalar_lea.sflag [#allocation9], %s302
        %s304 = sand.u32 %s80, 1
        %s305 = smul.addr %s304, 16
        %s306 = scalar_lea.vmem [#allocation8], %s305
        // Predicated region
        $region37: #{joint_transformer_final_block.8} parent=31 // pred_check
          %p307 = pneg %p93
        $region38: #{joint_transformer_final_block.8} parent=31 // pred_check_branch
          %309 = sbr.rel (%p307) target = $region40
        $region39: #{joint_transformer_final_block.8} parent=31 // pred_region
          %310 = dma.done %s303, 256
        $region40: #{joint_transformer_final_block.8} parent=31 // pred_fallthru
          _
        %s311 = sand.u32 %s23, 1
        %s312 = scalar_lea.sflag [#allocation9], %s311
        %s313 = sand.u32 %s108, 1
        %s314 = smul.addr %s313, 16
        %s315 = scalar_lea.vmem [#allocation10], %s314
        // Predicated region
        $region41: #{joint_transformer_final_block.8} parent=31 // pred_check
          %p316 = pneg %p121
        $region42: #{joint_transformer_final_block.8} parent=31 // pred_check_branch
          %318 = sbr.rel (%p316) target = $region44
        $region43: #{joint_transformer_final_block.8} parent=31 // pred_region
          %319 = dma.done %s312, 256
        $region44: #{joint_transformer_final_block.8} parent=31 // pred_fallthru
          _
        %s320 = sand.u32 %s52, 1
        %s321 = scalar_lea.sflag [#allocation6], %s320
        %s322 = sand.u32 %s52, 1
        %s323 = smul.addr %s322, 8
        %s324 = scalar_lea.vmem [#allocation5], %s323
        %p325 = pneg %p65
        %p326 = pneg %p62
        %s327 = sand.u32 %s23, 1
        %s328 = scalar_lea.sflag [#allocation9], %s327
        %s329 = sand.u32 %s80, 1
        %s330 = smul.addr %s329, 16
        %s331 = scalar_lea.vmem [#allocation8], %s330
        %p332 = pneg %p93
        %p333 = pneg %p90
        %s334 = sand.u32 %s23, 1
        %s335 = scalar_lea.sflag [#allocation9], %s334
        %s336 = sand.u32 %s108, 1
        %s337 = smul.addr %s336, 16
        %s338 = scalar_lea.vmem [#allocation10], %s337
        %p339 = pneg %p121
        %p340 = pneg %p118
        %p341 = pneg %p149
        %p342 = pneg %p146
        %s343 = sand.u32 %s136, 1
        %s344 = scalar_lea.sflag [#allocation7], %s343
        %s345 = sand.u32 %s136, 1
        %s346 = smul.addr %s345, 4
        %s347 = scalar_lea.vmem [#allocation11], %s346
        %s348 = smul.u32 2, %s30
        %s349 = smul.u32 2, %s30
        %p352 = scmp.eq.s32.totalorder %s30, 0
        // Predicated region
        $region45: #{joint_transformer_final_block.8} parent=31 // pred_check
          %p353 = pneg %p352
        $region46: #{joint_transformer_final_block.8} parent=31 // pred_check_branch
          %355 = sbr.rel (%p353) target = $region48
        $region47: #{joint_transformer_final_block.8} parent=31 // pred_region
          %vm356 = vcmask 7168
          %357 = vst.msk [vmem:[#allocation2] sm:$0xff] %vm356, -inf
          %358 = vst.msk [vmem:[#allocation2 + $0x8] sm:$0xff] %vm356, -inf
          %359 = vst.msk [vmem:[#allocation3] sm:$0xff] %vm356, 0.0
          %360 = vst.msk [vmem:[#allocation3 + $0x8] sm:$0xff] %vm356, 0.0
          %vm361 = vcmask 261120
          %362 = vst.msk [vmem:[#allocation4] sm:$0xff] %vm361, 0.0
          %363 = vst.msk [vmem:[#allocation4 + $0x8] sm:$0xff] %vm361, 0.0
        $region48: #{joint_transformer_final_block.8} parent=31 // pred_fallthru
          _
        %v364 = vld [vmem:[%s297] sm:$0xf]
        %v365 = vld [vmem:[%s297 + $0x4] sm:$0xf]
        %v366 = vmul.bf16 %v364, 1043676725
        %v367 = vmul.bf16 %v365, 1043676725
        %v368 = vld [vmem:[%s306] sm:$0xf]
        %v369 = vld [vmem:[%s306 + $0x4] sm:$0xf]
        %v370 = vld [vmem:[%s306 + $0x8] sm:$0xf]
        %v371 = vld [vmem:[%s306 + $0xc] sm:$0xf]
        %v372 = vld [vmem:[%s315] sm:$0xf]
        %v373 = vld [vmem:[%s315 + $0x4] sm:$0xf]
        %v374 = vld [vmem:[%s315 + $0x8] sm:$0xf]
        %v375 = vld [vmem:[%s315 + $0xc] sm:$0xf]
        %v378 = vunpack.c.l.b16 %v368
        %v379 = vunpack.c.l.b16 %v369
        %v380 = vpack.c.b16 %v379, %v378
        %vm381 = vcmask 261120
        %v383 = vsel %vm381, %v366, 0
        %v386 = vsel %vm381, %v380, 0
        %388 = vmatprep.subr.bf16.mxu0 0
        %389 = vmatpush1.bf16.xpose.msra.mxu0 %v386
        %390 = vmatprep.subr.bf16.mxu0 0
        %391 = vmatpush1.bf16.xpose.msra.mxu0 0
        %392 = vmatprep.subr.bf16.mxu0 0
        %393 = vmatpush1.bf16.xpose.msra.mxu0 0
        %394 = vmatprep.subr.bf16.mxu0 0
        %395 = vmatpush1.bf16.xpose.msra.mxu0 0
        %396 = vmatprep.subr.bf16.mxu0 0
        %397 = vmatpush1.bf16.xpose.msra.mxu0 0
        %398 = vmatprep.subr.bf16.mxu0 0
        %399 = vmatpush1.bf16.xpose.msra.mxu0 0
        %400 = vmatprep.subr.bf16.mxu0 0
        %401 = vmatpush1.bf16.xpose.msra.mxu0 0
        %402 = vmatprep.subr.bf16.mxu0 0
        %403 = vmatpush1.bf16.xpose.msra.mxu0 0
        %404 = vmatprep.subr.bf16.mxu0 0
        %405 = vmatpush1.bf16.xpose.msra.mxu0 0
        %406 = vmatprep.subr.bf16.mxu0 0
        %407 = vmatpush1.bf16.xpose.msra.mxu0 0
        %408 = vmatprep.subr.bf16.mxu0 0
        %409 = vmatpush1.bf16.xpose.msra.mxu0 0
        %410 = vmatprep.subr.bf16.mxu0 0
        %411 = vmatpush1.bf16.xpose.msra.mxu0 0
        %412 = vmatprep.subr.bf16.mxu0 0
        %413 = vmatpush1.bf16.xpose.msra.mxu0 0
        %414 = vmatprep.subr.bf16.mxu0 0
        %415 = vmatpush1.bf16.xpose.msra.mxu0 0
        %416 = vmatprep.subr.bf16.mxu0 0
        %417 = vmatpush1.bf16.xpose.msra.mxu0 0
        %418 = vmatprep.subr.bf16.mxu0 0
        %419 = vmatpush1.bf16.xpose.msra.mxu0 0
        %420 = vmatprep.mubr.bf16.mxu0 0
        %421 = vmatmul.mubr.bf16.gmra.mrb[0].mxu0 %v383
        %v422 = vpop.f32.mrb[0].mxu0
        %v423 = vadd.f32 0.0, %v422
        %v424 = vpop.f32.mrb[0].mxu0
        %v425 = vpop.f32.mrb[0].mxu0
        %v426 = vpop.f32.mrb[0].mxu0
        %427 = vdwg.mxu0
        %v430 = vunpack.c.l.b16 %v370
        %v431 = vunpack.c.l.b16 %v371
        %v432 = vpack.c.b16 %v431, %v430
        %v434 = vsel %vm381, %v367, 0
        %v437 = vsel %vm381, %v432, 0
        %439 = vmatprep.subr.bf16.mxu0 0
        %440 = vmatpush1.bf16.xpose.msra.mxu0 %v437
        %441 = vmatprep.subr.bf16.mxu0 0
        %442 = vmatpush1.bf16.xpose.msra.mxu0 0
        %443 = vmatprep.subr.bf16.mxu0 0
        %444 = vmatpush1.bf16.xpose.msra.mxu0 0
        %445 = vmatprep.subr.bf16.mxu0 0
        %446 = vmatpush1.bf16.xpose.msra.mxu0 0
        %447 = vmatprep.subr.bf16.mxu0 0
        %448 = vmatpush1.bf16.xpose.msra.mxu0 0
        %449 = vmatprep.subr.bf16.mxu0 0
        %450 = vmatpush1.bf16.xpose.msra.mxu0 0
        %451 = vmatprep.subr.bf16.mxu0 0
        %452 = vmatpush1.bf16.xpose.msra.mxu0 0
        %453 = vmatprep.subr.bf16.mxu0 0
        %454 = vmatpush1.bf16.xpose.msra.mxu0 0
        %455 = vmatprep.subr.bf16.mxu0 0
        %456 = vmatpush1.bf16.xpose.msra.mxu0 0
        %457 = vmatprep.subr.bf16.mxu0 0
        %458 = vmatpush1.bf16.xpose.msra.mxu0 0
        %459 = vmatprep.subr.bf16.mxu0 0
        %460 = vmatpush1.bf16.xpose.msra.mxu0 0
        %461 = vmatprep.subr.bf16.mxu0 0
        %462 = vmatpush1.bf16.xpose.msra.mxu0 0
        %463 = vmatprep.subr.bf16.mxu0 0
        %464 = vmatpush1.bf16.xpose.msra.mxu0 0
        %465 = vmatprep.subr.bf16.mxu0 0
        %466 = vmatpush1.bf16.xpose.msra.mxu0 0
        %467 = vmatprep.subr.bf16.mxu0 0
        %468 = vmatpush1.bf16.xpose.msra.mxu0 0
        %469 = vmatprep.subr.bf16.mxu0 0
        %470 = vmatpush1.bf16.xpose.msra.mxu0 0
        %471 = vmatprep.mubr.bf16.mxu0 0
        %472 = vmatmul.mubr.bf16.gmra.mrb[0].mxu0 %v434
        %v473 = vpop.f32.mrb[0].mxu0
        %v474 = vadd.f32 0.0, %v473
        %v475 = vpop.f32.mrb[0].mxu0
        %v476 = vpop.f32.mrb[0].mxu0
        %v477 = vpop.f32.mrb[0].mxu0
        %478 = vdwg.mxu0
        %v479 = vld [vmem:[#allocation2] sm:$0xff]
        %v480 = vld [vmem:[#allocation2 + $0x8] sm:$0xff]
        %vm481 = vcmask 130048
        %v482 = vsel %vm481, %v423, -inf
        %483 = vmax.xlane.f32.xlu0 %v482
        %v484 = vpop.xlane.xlu0 %483
        %v485 = vsel %vm481, %v474, -inf
        %486 = vmax.xlane.f32.xlu0 %v485
        %v487 = vpop.xlane.xlu0 %486
        %v488 = vmax.f32 %v479, %v484
        %v489 = vmax.f32 %v480, %v487
        %v490 = vsub.f32 %v479, %v488
        %v491 = vsub.f32 %v480, %v489
        %v492 = vmul.f32 %v490, 1.442695
        %v493 = vpow.pop %v492
        %v494 = vmul.f32 %v491, 1.442695
        %v495 = vpow.pop %v494
        %497 = vset.pattern.permute.xlu0 0
        %498 = vperm.xlu0 %497, %v488
        %v499 = vpop.permute.xlu0 %498
        %502 = vset.pattern.permute.xlu0 0
        %503 = vperm.xlu0 %502, %v489
        %v504 = vpop.permute.xlu0 %503
        %v506 = vsub.f32 %v423, %v499
        %v507 = vsub.f32 %v474, %v504
        %v508 = vmul.f32 %v506, 1.442695
        %v509 = vpow.pop %v508
        %v510 = vmul.f32 %v507, 1.442695
        %v511 = vpow.pop %v510
        %v512 = vld [vmem:[#allocation3] sm:$0xff]
        %v513 = vld [vmem:[#allocation3 + $0x8] sm:$0xff]
        %v514 = vmul.f32 %v493, %v512
        %v515 = vmul.f32 %v495, %v513
        %v516 = vsel %vm481, %v509, 0.0
        %517 = vadd.xlane.f32.xlu0 %v516
        %v518 = vpop.xlane.xlu0 %517
        %v519 = vsel %vm481, %v511, 0.0
        %520 = vadd.xlane.f32.xlu0 %v519
        %v521 = vpop.xlane.xlu0 %520
        %v522 = vadd.f32 %v514, %v518
        %v523 = vadd.f32 %v515, %v521
        %vm524 = vcmask 7168
        %525 = vst.msk [vmem:[#allocation3] sm:$0xff] %vm524, %v522
        %526 = vst.msk [vmem:[#allocation3 + $0x8] sm:$0xff] %vm524, %v523
        %v527 = vld [vmem:[#allocation4] sm:$0xff]
        %v528 = vld [vmem:[#allocation4 + $0x8] sm:$0xff]
        %530 = vset.pattern.permute.xlu0 0
        %531 = vperm.xlu0 %530, %v493
        %v532 = vpop.permute.xlu0 %531
        %535 = vset.pattern.permute.xlu0 0
        %536 = vperm.xlu0 %535, %v495
        %v537 = vpop.permute.xlu0 %536
        %v539 = vmul.f32 %v532, %v527
        %v540 = vmul.f32 %v537, %v528
        %v541 = vpack.c.bf16 %v509, %v509
        %v542 = vpack.c.bf16 %v511, %v511
        %v545 = vunpack.c.l.b16 %v372
        %v546 = vunpack.c.l.b16 %v373
        %v547 = vpack.c.b16 %v546, %v545
        %v550 = vsel %vm481, %v541, 0
        %552 = vmatprep.subr.bf16.mxu0 0
        %553 = vmatpush1.bf16.msra.mxu0 %v547
        %554 = vmatprep.subr.bf16.mxu0 0
        %555 = vmatpush1.bf16.msra.mxu0 0
        %556 = vmatprep.subr.bf16.mxu0 0
        %557 = vmatpush1.bf16.msra.mxu0 0
        %558 = vmatprep.subr.bf16.mxu0 0
        %559 = vmatpush1.bf16.msra.mxu0 0
        %560 = vmatprep.subr.bf16.mxu0 0
        %561 = vmatpush1.bf16.msra.mxu0 0
        %562 = vmatprep.subr.bf16.mxu0 0
        %563 = vmatpush1.bf16.msra.mxu0 0
        %564 = vmatprep.subr.bf16.mxu0 0
        %565 = vmatpush1.bf16.msra.mxu0 0
        %566 = vmatprep.subr.bf16.mxu0 0
        %567 = vmatpush1.bf16.msra.mxu0 0
        %568 = vmatprep.subr.bf16.mxu0 0
        %569 = vmatpush1.bf16.msra.mxu0 0
        %570 = vmatprep.subr.bf16.mxu0 0
        %571 = vmatpush1.bf16.msra.mxu0 0
        %572 = vmatprep.subr.bf16.mxu0 0
        %573 = vmatpush1.bf16.msra.mxu0 0
        %574 = vmatprep.subr.bf16.mxu0 0
        %575 = vmatpush1.bf16.msra.mxu0 0
        %576 = vmatprep.subr.bf16.mxu0 0
        %577 = vmatpush1.bf16.msra.mxu0 0
        %578 = vmatprep.subr.bf16.mxu0 0
        %579 = vmatpush1.bf16.msra.mxu0 0
        %580 = vmatprep.subr.bf16.mxu0 0
        %581 = vmatpush1.bf16.msra.mxu0 0
        %582 = vmatprep.subr.bf16.mxu0 0
        %583 = vmatpush1.bf16.msra.mxu0 0
        %584 = vmatprep.mubr.bf16.mxu0 0
        %585 = vmatmul.mubr.bf16.gmra.mrb[0].mxu0 %v550
        %v586 = vpop.f32.mrb[0].mxu0
        %v587 = vadd.f32 0.0, %v586
        %v588 = vpop.f32.mrb[0].mxu0
        %v589 = vpop.f32.mrb[0].mxu0
        %v590 = vpop.f32.mrb[0].mxu0
        %591 = vdwg.mxu0
        %v594 = vunpack.c.l.b16 %v374
        %v595 = vunpack.c.l.b16 %v375
        %v596 = vpack.c.b16 %v595, %v594
        %v599 = vsel %vm481, %v542, 0
        %601 = vmatprep.subr.bf16.mxu0 0
        %602 = vmatpush1.bf16.msra.mxu0 %v596
        %603 = vmatprep.subr.bf16.mxu0 0
        %604 = vmatpush1.bf16.msra.mxu0 0
        %605 = vmatprep.subr.bf16.mxu0 0
        %606 = vmatpush1.bf16.msra.mxu0 0
        %607 = vmatprep.subr.bf16.mxu0 0
        %608 = vmatpush1.bf16.msra.mxu0 0
        %609 = vmatprep.subr.bf16.mxu0 0
        %610 = vmatpush1.bf16.msra.mxu0 0
        %611 = vmatprep.subr.bf16.mxu0 0
        %612 = vmatpush1.bf16.msra.mxu0 0
        %613 = vmatprep.subr.bf16.mxu0 0
        %614 = vmatpush1.bf16.msra.mxu0 0
        %615 = vmatprep.subr.bf16.mxu0 0
        %616 = vmatpush1.bf16.msra.mxu0 0
        %617 = vmatprep.subr.bf16.mxu0 0
        %618 = vmatpush1.bf16.msra.mxu0 0
        %619 = vmatprep.subr.bf16.mxu0 0
        %620 = vmatpush1.bf16.msra.mxu0 0
        %621 = vmatprep.subr.bf16.mxu0 0
        %622 = vmatpush1.bf16.msra.mxu0 0
        %623 = vmatprep.subr.bf16.mxu0 0
        %624 = vmatpush1.bf16.msra.mxu0 0
        %625 = vmatprep.subr.bf16.mxu0 0
        %626 = vmatpush1.bf16.msra.mxu0 0
        %627 = vmatprep.subr.bf16.mxu0 0
        %628 = vmatpush1.bf16.msra.mxu0 0
        %629 = vmatprep.subr.bf16.mxu0 0
        %630 = vmatpush1.bf16.msra.mxu0 0
        %631 = vmatprep.subr.bf16.mxu0 0
        %632 = vmatpush1.bf16.msra.mxu0 0
        %633 = vmatprep.mubr.bf16.mxu0 0
        %634 = vmatmul.mubr.bf16.gmra.mrb[0].mxu0 %v599
        %v635 = vpop.f32.mrb[0].mxu0
        %v636 = vadd.f32 0.0, %v635
        %v637 = vpop.f32.mrb[0].mxu0
        %v638 = vpop.f32.mrb[0].mxu0
        %v639 = vpop.f32.mrb[0].mxu0
        %640 = vdwg.mxu0
        %v641 = vadd.f32 %v539, %v587
        %v642 = vadd.f32 %v540, %v636
        %643 = vst.msk [vmem:[#allocation4] sm:$0xff] %vm381, %v641
        %644 = vst.msk [vmem:[#allocation4 + $0x8] sm:$0xff] %vm381, %v642
        %645 = vst.msk [vmem:[#allocation2] sm:$0xff] %vm524, %v488
        %646 = vst.msk [vmem:[#allocation2 + $0x8] sm:$0xff] %vm524, %v489
        %p647 = scmp.eq.s32.totalorder %s30, 1
        // Predicated region
        $region49: #{joint_transformer_final_block.8} parent=31 // pred_check
          %p648 = pneg %p647
        $region50: #{joint_transformer_final_block.8} parent=31 // pred_check_branch
          %650 = sbr.rel (%p648) target = $region52
        $region51: #{joint_transformer_final_block.8} parent=31 // pred_region
          %v651 = vld [vmem:[#allocation4] sm:$0xff]
          %v652 = vld [vmem:[#allocation4 + $0x8] sm:$0xff]
          %v653 = vld [vmem:[#allocation3] sm:$0xff]
          %v654 = vld [vmem:[#allocation3 + $0x8] sm:$0xff]
          %v655 = vrcp.pop %v653
          %v656 = vrcp.pop %v654
          %658 = vset.pattern.permute.xlu0 0
          %659 = vperm.xlu0 %658, %v655
          %v660 = vpop.permute.xlu0 %659
          %663 = vset.pattern.permute.xlu0 0
          %664 = vperm.xlu0 %663, %v656
          %v665 = vpop.permute.xlu0 %664
          %v667 = vmul.f32 %v651, %v660
          %v668 = vmul.f32 %v652, %v665
          %v669 = vpack.c.bf16 %v667, %v667
          %vm670 = vcmask 257024
          %671 = vst.msk [vmem:[%s347] sm:$0xf] %vm670, %v669
          %v672 = vpack.c.bf16 %v668, %v668
          %v674 = vunpack.c.l.b16 %v672
          %v675 = vpack.c.b16 %v674, %v674
          %676 = vrot.lane.b32.xlu0 %v675, 32
          %v677 = vpop.permute.xlu0 %676
          %vm679 = vcmask 519424
          %680 = vst.msk [vmem:[%s347] sm:$0xf] %vm679, %v677
        $region52: #{joint_transformer_final_block.8} parent=31 // pred_fallthru
          _
        %s681 = sand.u32 %s136, 1
        %s682 = scalar_lea.sflag [#allocation7], %s681
        %s683 = sand.u32 %s136, 1
        %s684 = smul.addr %s683, 4
        %s685 = scalar_lea.vmem [#allocation11], %s684
        // Predicated region
        $region53: #{joint_transformer_final_block.8} parent=31 // pred_check
          %p686 = pneg %p146
        $region54: #{joint_transformer_final_block.8} parent=31 // pred_check_branch
          %688 = sbr.rel (%p686) target = $region56
        $region55: #{joint_transformer_final_block.8} parent=31 // pred_region
          %s690 = ssub.s32 64, 64
          %691 = vsyncadd %s682, %s690
          %s692 = smul.addr %s28, 2
          %s693 = sadd.s32 %s29, %s692
          %s694 = smul.addr %s693, 64
          %s695 = scalar_lea.hbm %s3, %s694
          %s697 = sshll.u32 %s685, 4
          %s698 = int_to_ptr.vmem [resolvable:$true] %s697
          %700 = dma.vmem_to_hbm [thread:$0]  %s698, 64, %s695, %s682
        $region56: #{joint_transformer_final_block.8} parent=31 // pred_fallthru
          _
      $region32: #{joint_transformer_final_block.8} parent=5 // pred_fallthru
        _
      %p701 = scmp.le.s32.totalorder 2, %s18
      // Predicated region
      $region57: #{joint_transformer_final_block.8} parent=5 // pred_check
        %p702 = pneg %p701
      $region58: #{joint_transformer_final_block.8} parent=5 // pred_check_branch
        %704 = sbr.rel (%p702) target = $region60
      $region59: #{joint_transformer_final_block.8} parent=5 // pred_region
        %s705 = ssub.s32 %s18, 2
        // Predicated region
        $region61: #{joint_transformer_final_block.8} parent=59 // pred_check
          %p706 = pneg %p152
        $region62: #{joint_transformer_final_block.8} parent=59 // pred_check_branch
          %708 = sbr.rel (%p706) target = $region64
        $region63: #{joint_transformer_final_block.8} parent=59 // pred_region
          %s709 = sand.u32 %s137, 1
          %s710 = scalar_lea.sflag [#allocation7], %s709
          %s711 = sand.u32 %s137, 1
          %s712 = smul.addr %s711, 4
          %s713 = scalar_lea.vmem [#allocation11], %s712
          %714 = dma.done %s710, 64
        $region64: #{joint_transformer_final_block.8} parent=59 // pred_fallthru
          _
      $region60: #{joint_transformer_final_block.8} parent=5 // pred_fallthru
        _
    $region6: #{joint_transformer_final_block.8} parent=1 // loop_footer
      %s22 = sadd.s32 1, %s18
    $region7: #{joint_transformer_final_block.8} parent=1 // loop_footer_branch
      %17 = sbr.rel target = $region3
    $region8: #{joint_transformer_final_block.8} parent=1 // loop_exit
      _
    %715 = vsyncpa [#allocation6], 1
    %s716 = scalar_lea.sflag [#allocation6], 1
    %717 = vsyncpa %s716, 1
    %718 = vsyncpa [#allocation9], 1
    %s719 = scalar_lea.sflag [#allocation9], 1
    %720 = vsyncpa %s719, 1
    %721 = vsyncpa [#allocation7], 1
    %s722 = scalar_lea.sflag [#allocation7], 1
    %723 = vsyncpa %s722, 1

// kernel: joint_transformer_final_block.9
$region0: #{joint_transformer_final_block.9}
  #allocation0 [shape = 'u32[]', space=smem, size = 0x4, offset = 0x4, fixed_abs, tag = 'smem constant byte address 0x4 - core index']
  #allocation1 [shape = 'u32[144,128]{1,0:T(1,128)}', space=vmem, size = 0x12000, scoped, tag = 'internal scratch']
  #allocation2 [shape = 'f32[8,64]{1,0:T(8,128)}', space=vmem, size = 0x1000, scoped, tag = 'scratch operand']
  #allocation3 [shape = 'bf16[8,64]{1,0:T(8,128)(2,1)}', space=vmem, size = 0x800, scoped, tag = 'scratch operand']
  #allocation4 [shape = 'f32[8,64]{1,0:T(8,128)}', space=vmem, size = 0x1000, scoped, tag = 'scratch operand']
  %s0 = inlined_call_operand.hbm [shape: bf16[2,16,64], index: 0, kind: input, shape index: {}]
  %s1 = inlined_call_operand.hbm [shape: f32[2,16,64], index: 1, kind: input, shape index: {}]
  %s2 = inlined_call_operand.hbm [shape: f32[2,1,64], index: 2, kind: input, shape index: {}]
  %s3 = inlined_call_operand.hbm [shape: f32[2,1,64], index: 3, kind: input, shape index: {}]
  %s4 = inlined_call_operand.hbm [shape: f32[2,1,64], index: 4, kind: input, shape index: {}]
  %s5 = inlined_call_operand.hbm [shape: f32[2,1,64], index: 5, kind: input, shape index: {}]
  %s6 = inlined_call_operand.hbm [shape: bf16[64,64], index: 6, kind: input, shape index: {}]
  %s7 = inlined_call_operand.hbm [shape: f32[1,64], index: 7, kind: input, shape index: {}]
  %s8 = inlined_call_operand.hbm [shape: bf16[64,256], index: 8, kind: input, shape index: {}]
  %s9 = inlined_call_operand.hbm [shape: f32[1,256], index: 9, kind: input, shape index: {}]
  %s10 = inlined_call_operand.hbm [shape: bf16[256,64], index: 10, kind: input, shape index: {}]
  %s11 = inlined_call_operand.hbm [shape: f32[1,64], index: 11, kind: input, shape index: {}]
  %s12 = inlined_call_operand.hbm [shape: f32[2,16,64], index: 12, kind: output, shape index: {}]
  %s13 = sld [smem:[#allocation0]]
  $region137: #{joint_transformer_final_block.9} parent=0
    _
  %s15 = ssub.s32 1, %s13
  %s16 = scalar_select 0, %s15, %s13
  $region1: #{joint_transformer_final_block.9} parent=0
    #allocation5 [shape = 'u8[4096]{0}', space=vmem, size = 0x1000, scoped, tag = 'input window, operand 0']
    #allocation6 [shape = 's32[2]{0}', space=sflag, size = 0x8, scoped, tag = 'scoped memory for joint_transformer_final_block.9']
    #allocation7 [shape = 's32[2]{0}', space=sflag, size = 0x8, scoped, tag = 'scoped memory for joint_transformer_final_block.9']
    #allocation8 [shape = 'u8[8192]{0}', space=vmem, size = 0x2000, scoped, tag = 'input window, operand 1']
    #allocation9 [shape = 's32[2]{0}', space=sflag, size = 0x8, scoped, tag = 'scoped memory for joint_transformer_final_block.9']
    #allocation10 [shape = 'u8[1024]{0}', space=vmem, size = 0x400, scoped, tag = 'input window, operand 2']
    #allocation11 [shape = 'u8[1024]{0}', space=vmem, size = 0x400, scoped, tag = 'input window, operand 3']
    #allocation12 [shape = 's32[2]{0}', space=sflag, size = 0x8, scoped, tag = 'scoped memory for joint_transformer_final_block.9']
    #allocation13 [shape = 'u8[1024]{0}', space=vmem, size = 0x400, scoped, tag = 'input window, operand 4']
    #allocation14 [shape = 'u8[1024]{0}', space=vmem, size = 0x400, scoped, tag = 'input window, operand 5']
    #allocation15 [shape = 's32[2]{0}', space=sflag, size = 0x8, scoped, tag = 'scoped memory for joint_transformer_final_block.9']
    #allocation16 [shape = 'u8[16384]{0}', space=vmem, size = 0x4000, scoped, tag = 'input window, operand 6, single buffered']
    #allocation17 [shape = 'u8[512]{0}', space=vmem, size = 0x400, scoped, tag = 'input window, operand 7, single buffered']
    #allocation18 [shape = 's32[1]{0}', space=sflag, size = 0x4, scoped, tag = 'scoped memory for joint_transformer_final_block.9']
    #allocation19 [shape = 'u8[32768]{0}', space=vmem, size = 0x8000, scoped, tag = 'input window, operand 8']
    #allocation20 [shape = 'u8[1024]{0}', space=vmem, size = 0x400, scoped, tag = 'input window, operand 9']
    #allocation21 [shape = 'u8[65536]{0}', space=vmem, size = 0x10000, scoped, tag = 'input window, operand 10']
    #allocation22 [shape = 'u8[512]{0}', space=vmem, size = 0x400, scoped, tag = 'input window, operand 11, single buffered']
    #allocation23 [shape = 'u8[8192]{0}', space=vmem, size = 0x2000, scoped, tag = 'output window, operand 0']
    %17 = vsyncpa [#allocation6], 0
    %s18 = scalar_lea.sflag [#allocation6], 1
    %19 = vsyncpa %s18, 0
    %20 = vsyncpa [#allocation9], 0
    %s21 = scalar_lea.sflag [#allocation9], 1
    %22 = vsyncpa %s21, 0
    %23 = vsyncpa [#allocation12], 0
    %s24 = scalar_lea.sflag [#allocation12], 1
    %25 = vsyncpa %s24, 0
    %26 = vsyncpa [#allocation15], 0
    %s27 = scalar_lea.sflag [#allocation15], 1
    %28 = vsyncpa %s27, 0
    %29 = vsyncpa [#allocation18], 0
    %30 = vsyncpa [#allocation7], 0
    %s31 = scalar_lea.sflag [#allocation7], 1
    %32 = vsyncpa %s31, 0
    loop: start=0, step=1, limit=10
    $region2: #{joint_transformer_final_block.9} parent=1 // loop_pre_header
      _
    $region3: #{joint_transformer_final_block.9} parent=1 // loop_header
      %s34 = sphi 0, %s38
      %p35 = scmp.ge.s32.totalorder %s34, 10
      %s41 = sphi 0, %s60
      %s42 = sphi 0, %s56
      %s43 = sphi 0, %s52
      %s44 = sphi 0, %s41
      %s45 = sphi 0, %s42
      %s46 = sphi 0, %s43
      %s47 = sphi 0, %s44
      %s48 = sphi 0, %s45
      %s49 = sphi 0, %s46
      %s65 = sphi 0, %s67
      %s68 = sphi 0, %s65
      %s69 = sphi 0, %s68
      %s85 = sphi 0, %s69
      %s93 = sphi 0, %s95
      %s96 = sphi 0, %s93
      %s97 = sphi 0, %s96
      %s113 = sphi 0, %s97
      %s119 = sphi 0, %s121
      %s122 = sphi 0, %s119
      %s123 = sphi 0, %s122
      %s139 = sphi 0, %s123
      %s145 = sphi 0, %s147
      %s148 = sphi 0, %s145
      %s149 = sphi 0, %s148
      %s165 = sphi 0, %s149
      %s171 = sphi 0, %s173
      %s174 = sphi 0, %s171
      %s175 = sphi 0, %s174
      %s191 = sphi 0, %s175
      %s197 = sphi 0, %s199
      %s200 = sphi 0, %s197
      %s201 = sphi 0, %s200
      %s217 = sphi 0, %s201
      %s221 = sphi 0, %s221
      %s223 = sphi 0, %s221
      %s224 = sphi 0, %s223
      %s238 = sphi 0, %s224
      %s242 = sphi 0, %s242
      %s244 = sphi 0, %s242
      %s245 = sphi 0, %s244
      %s259 = sphi 0, %s245
      %s265 = sphi 0, %s267
      %s268 = sphi 0, %s265
      %s269 = sphi 0, %s268
      %s285 = sphi 0, %s269
      %s291 = sphi 0, %s293
      %s294 = sphi 0, %s291
      %s295 = sphi 0, %s294
      %s311 = sphi 0, %s295
      %s317 = sphi 0, %s319
      %s320 = sphi 0, %s317
      %s321 = sphi 0, %s320
      %s337 = sphi 0, %s321
      %s341 = sphi 0, %s341
      %s343 = sphi 0, %s341
      %s344 = sphi 0, %s343
      %s358 = sphi 0, %s344
      %s366 = sphi 0, %s368
      %s369 = sphi 0, %s366
      %s370 = sphi 0, %s369
      %s386 = sphi 0, %s370
    $region4: #{joint_transformer_final_block.9} parent=1 // loop_header_branch
      %37 = sbr.rel (%p35) target = $region8
    $region5: #{joint_transformer_final_block.9} parent=1 // loop_body
      %s39 = ssub.s32 %s34, 1
      %s40 = ssub.s32 %s34, 2
      %s50 = sadd.s32 1, %s43
      %p51 = scmp.ge.s32.totalorder %s50, 2
      %s52 = scalar_select %p51, 0, %s50
      %s53 = sadd.s32 1, %s42
      %s54 = scalar_select %p51, %s53, %s42
      %p55 = scmp.ge.s32.totalorder %s54, 2
      %s56 = scalar_select %p55, 0, %s54
      %s57 = sadd.s32 1, %s41
      %s58 = scalar_select %p55, %s57, %s41
      %p59 = scmp.ge.s32.totalorder %s58, 2
      %s60 = scalar_select %p59, 0, %s58
      %s61 = ssub.s32 %s41, %s60
      %s62 = ssub.s32 %s42, %s56
      %s63 = sor.u32 %s61, %s62
      %p64 = scmp.eq.s32.totalorder %s63, 0
      %s66 = sadd.s32 %s65, 1
      %s67 = scalar_select %p64, %s65, %s66
      %p70 = pneg %p64
      %p71 = scmp.eq.s32.totalorder %s34, 7
      %p72 = por %p70, %p71
      %p73 = scmp.ne.s32.totalorder %s65, %s68
      %p74 = scmp.eq.s32.totalorder %s34, 0
      %p75 = por %p73, %p74
      %p76 = scmp.ne.s32.totalorder %s65, %s68
      %p77 = scmp.eq.s32.totalorder %s39, 7
      %p78 = por %p76, %p77
      %p79 = scmp.ne.s32.totalorder %s68, %s69
      %p80 = scmp.eq.s32.totalorder %s39, 0
      %p81 = por %p79, %p80
      %p82 = scmp.ne.s32.totalorder %s68, %s69
      %p83 = scmp.eq.s32.totalorder %s40, 7
      %p84 = por %p82, %p83
      %p86 = scmp.ne.s32.totalorder %s69, %s85
      %p87 = scmp.eq.s32.totalorder %s40, 0
      %p88 = por %p86, %p87
      %s89 = ssub.s32 %s41, %s60
      %s90 = ssub.s32 %s42, %s56
      %s91 = sor.u32 %s89, %s90
      %p92 = scmp.eq.s32.totalorder %s91, 0
      %s94 = sadd.s32 %s93, 1
      %s95 = scalar_select %p92, %s93, %s94
      %p98 = pneg %p92
      %p99 = scmp.eq.s32.totalorder %s34, 7
      %p100 = por %p98, %p99
      %p101 = scmp.ne.s32.totalorder %s93, %s96
      %p102 = scmp.eq.s32.totalorder %s34, 0
      %p103 = por %p101, %p102
      %p104 = scmp.ne.s32.totalorder %s93, %s96
      %p105 = scmp.eq.s32.totalorder %s39, 7
      %p106 = por %p104, %p105
      %p107 = scmp.ne.s32.totalorder %s96, %s97
      %p108 = scmp.eq.s32.totalorder %s39, 0
      %p109 = por %p107, %p108
      %p110 = scmp.ne.s32.totalorder %s96, %s97
      %p111 = scmp.eq.s32.totalorder %s40, 7
      %p112 = por %p110, %p111
      %p114 = scmp.ne.s32.totalorder %s97, %s113
      %p115 = scmp.eq.s32.totalorder %s40, 0
      %p116 = por %p114, %p115
      %s117 = ssub.s32 %s41, %s60
      %p118 = scmp.eq.s32.totalorder %s117, 0
      %s120 = sadd.s32 %s119, 1
      %s121 = scalar_select %p118, %s119, %s120
      %p124 = pneg %p118
      %p125 = scmp.eq.s32.totalorder %s34, 7
      %p126 = por %p124, %p125
      %p127 = scmp.ne.s32.totalorder %s119, %s122
      %p128 = scmp.eq.s32.totalorder %s34, 0
      %p129 = por %p127, %p128
      %p130 = scmp.ne.s32.totalorder %s119, %s122
      %p131 = scmp.eq.s32.totalorder %s39, 7
      %p132 = por %p130, %p131
      %p133 = scmp.ne.s32.totalorder %s122, %s123
      %p134 = scmp.eq.s32.totalorder %s39, 0
      %p135 = por %p133, %p134
      %p136 = scmp.ne.s32.totalorder %s122, %s123
      %p137 = scmp.eq.s32.totalorder %s40, 7
      %p138 = por %p136, %p137
      %p140 = scmp.ne.s32.totalorder %s123, %s139
      %p141 = scmp.eq.s32.totalorder %s40, 0
      %p142 = por %p140, %p141
      %s143 = ssub.s32 %s41, %s60
      %p144 = scmp.eq.s32.totalorder %s143, 0
      %s146 = sadd.s32 %s145, 1
      %s147 = scalar_select %p144, %s145, %s146
      %p150 = pneg %p144
      %p151 = scmp.eq.s32.totalorder %s34, 7
      %p152 = por %p150, %p151
      %p153 = scmp.ne.s32.totalorder %s145, %s148
      %p154 = scmp.eq.s32.totalorder %s34, 0
      %p155 = por %p153, %p154
      %p156 = scmp.ne.s32.totalorder %s145, %s148
      %p157 = scmp.eq.s32.totalorder %s39, 7
      %p158 = por %p156, %p157
      %p159 = scmp.ne.s32.totalorder %s148, %s149
      %p160 = scmp.eq.s32.totalorder %s39, 0
      %p161 = por %p159, %p160
      %p162 = scmp.ne.s32.totalorder %s148, %s149
      %p163 = scmp.eq.s32.totalorder %s40, 7
      %p164 = por %p162, %p163
      %p166 = scmp.ne.s32.totalorder %s149, %s165
      %p167 = scmp.eq.s32.totalorder %s40, 0
      %p168 = por %p166, %p167
      %s169 = ssub.s32 %s41, %s60
      %p170 = scmp.eq.s32.totalorder %s169, 0
      %s172 = sadd.s32 %s171, 1
      %s173 = scalar_select %p170, %s171, %s172
      %p176 = pneg %p170
      %p177 = scmp.eq.s32.totalorder %s34, 7
      %p178 = por %p176, %p177
      %p179 = scmp.ne.s32.totalorder %s171, %s174
      %p180 = scmp.eq.s32.totalorder %s34, 0
      %p181 = por %p179, %p180
      %p182 = scmp.ne.s32.totalorder %s171, %s174
      %p183 = scmp.eq.s32.totalorder %s39, 7
      %p184 = por %p182, %p183
      %p185 = scmp.ne.s32.totalorder %s174, %s175
      %p186 = scmp.eq.s32.totalorder %s39, 0
      %p187 = por %p185, %p186
      %p188 = scmp.ne.s32.totalorder %s174, %s175
      %p189 = scmp.eq.s32.totalorder %s40, 7
      %p190 = por %p188, %p189
      %p192 = scmp.ne.s32.totalorder %s175, %s191
      %p193 = scmp.eq.s32.totalorder %s40, 0
      %p194 = por %p192, %p193
      %s195 = ssub.s32 %s41, %s60
      %p196 = scmp.eq.s32.totalorder %s195, 0
      %s198 = sadd.s32 %s197, 1
      %s199 = scalar_select %p196, %s197, %s198
      %p202 = pneg %p196
      %p203 = scmp.eq.s32.totalorder %s34, 7
      %p204 = por %p202, %p203
      %p205 = scmp.ne.s32.totalorder %s197, %s200
      %p206 = scmp.eq.s32.totalorder %s34, 0
      %p207 = por %p205, %p206
      %p208 = scmp.ne.s32.totalorder %s197, %s200
      %p209 = scmp.eq.s32.totalorder %s39, 7
      %p210 = por %p208, %p209
      %p211 = scmp.ne.s32.totalorder %s200, %s201
      %p212 = scmp.eq.s32.totalorder %s39, 0
      %p213 = por %p211, %p212
      %p214 = scmp.ne.s32.totalorder %s200, %s201
      %p215 = scmp.eq.s32.totalorder %s40, 7
      %p216 = por %p214, %p215
      %p218 = scmp.ne.s32.totalorder %s201, %s217
      %p219 = scmp.eq.s32.totalorder %s40, 0
      %p220 = por %p218, %p219
      %s222 = sadd.s32 %s221, 1
      %p225 = scmp.eq.s32.totalorder %s34, 7
      %p226 = scmp.ne.s32.totalorder %s221, %s223
      %p227 = scmp.eq.s32.totalorder %s34, 0
      %p228 = por %p226, %p227
      %p229 = scmp.ne.s32.totalorder %s221, %s223
      %p230 = scmp.eq.s32.totalorder %s39, 7
      %p231 = por %p229, %p230
      %p232 = scmp.ne.s32.totalorder %s223, %s224
      %p233 = scmp.eq.s32.totalorder %s39, 0
      %p234 = por %p232, %p233
      %p235 = scmp.ne.s32.totalorder %s223, %s224
      %p236 = scmp.eq.s32.totalorder %s40, 7
      %p237 = por %p235, %p236
      %p239 = scmp.ne.s32.totalorder %s224, %s238
      %p240 = scmp.eq.s32.totalorder %s40, 0
      %p241 = por %p239, %p240
      %s243 = sadd.s32 %s242, 1
      %p246 = scmp.eq.s32.totalorder %s34, 7
      %p247 = scmp.ne.s32.totalorder %s242, %s244
      %p248 = scmp.eq.s32.totalorder %s34, 0
      %p249 = por %p247, %p248
      %p250 = scmp.ne.s32.totalorder %s242, %s244
      %p251 = scmp.eq.s32.totalorder %s39, 7
      %p252 = por %p250, %p251
      %p253 = scmp.ne.s32.totalorder %s244, %s245
      %p254 = scmp.eq.s32.totalorder %s39, 0
      %p255 = por %p253, %p254
      %p256 = scmp.ne.s32.totalorder %s244, %s245
      %p257 = scmp.eq.s32.totalorder %s40, 7
      %p258 = por %p256, %p257
      %p260 = scmp.ne.s32.totalorder %s245, %s259
      %p261 = scmp.eq.s32.totalorder %s40, 0
      %p262 = por %p260, %p261
      %s263 = ssub.s32 %s43, %s52
      %p264 = scmp.eq.s32.totalorder %s263, 0
      %s266 = sadd.s32 %s265, 1
      %s267 = scalar_select %p264, %s265, %s266
      %p270 = pneg %p264
      %p271 = scmp.eq.s32.totalorder %s34, 7
      %p272 = por %p270, %p271
      %p273 = scmp.ne.s32.totalorder %s265, %s268
      %p274 = scmp.eq.s32.totalorder %s34, 0
      %p275 = por %p273, %p274
      %p276 = scmp.ne.s32.totalorder %s265, %s268
      %p277 = scmp.eq.s32.totalorder %s39, 7
      %p278 = por %p276, %p277
      %p279 = scmp.ne.s32.totalorder %s268, %s269
      %p280 = scmp.eq.s32.totalorder %s39, 0
      %p281 = por %p279, %p280
      %p282 = scmp.ne.s32.totalorder %s268, %s269
      %p283 = scmp.eq.s32.totalorder %s40, 7
      %p284 = por %p282, %p283
      %p286 = scmp.ne.s32.totalorder %s269, %s285
      %p287 = scmp.eq.s32.totalorder %s40, 0
      %p288 = por %p286, %p287
      %s289 = ssub.s32 %s43, %s52
      %p290 = scmp.eq.s32.totalorder %s289, 0
      %s292 = sadd.s32 %s291, 1
      %s293 = scalar_select %p290, %s291, %s292
      %p296 = pneg %p290
      %p297 = scmp.eq.s32.totalorder %s34, 7
      %p298 = por %p296, %p297
      %p299 = scmp.ne.s32.totalorder %s291, %s294
      %p300 = scmp.eq.s32.totalorder %s34, 0
      %p301 = por %p299, %p300
      %p302 = scmp.ne.s32.totalorder %s291, %s294
      %p303 = scmp.eq.s32.totalorder %s39, 7
      %p304 = por %p302, %p303
      %p305 = scmp.ne.s32.totalorder %s294, %s295
      %p306 = scmp.eq.s32.totalorder %s39, 0
      %p307 = por %p305, %p306
      %p308 = scmp.ne.s32.totalorder %s294, %s295
      %p309 = scmp.eq.s32.totalorder %s40, 7
      %p310 = por %p308, %p309
      %p312 = scmp.ne.s32.totalorder %s295, %s311
      %p313 = scmp.eq.s32.totalorder %s40, 0
      %p314 = por %p312, %p313
      %s315 = ssub.s32 %s43, %s52
      %p316 = scmp.eq.s32.totalorder %s315, 0
      %s318 = sadd.s32 %s317, 1
      %s319 = scalar_select %p316, %s317, %s318
      %p322 = pneg %p316
      %p323 = scmp.eq.s32.totalorder %s34, 7
      %p324 = por %p322, %p323
      %p325 = scmp.ne.s32.totalorder %s317, %s320
      %p326 = scmp.eq.s32.totalorder %s34, 0
      %p327 = por %p325, %p326
      %p328 = scmp.ne.s32.totalorder %s317, %s320
      %p329 = scmp.eq.s32.totalorder %s39, 7
      %p330 = por %p328, %p329
      %p331 = scmp.ne.s32.totalorder %s320, %s321
      %p332 = scmp.eq.s32.totalorder %s39, 0
      %p333 = por %p331, %p332
      %p334 = scmp.ne.s32.totalorder %s320, %s321
      %p335 = scmp.eq.s32.totalorder %s40, 7
      %p336 = por %p334, %p335
      %p338 = scmp.ne.s32.totalorder %s321, %s337
      %p339 = scmp.eq.s32.totalorder %s40, 0
      %p340 = por %p338, %p339
      %s342 = sadd.s32 %s341, 1
      %p345 = scmp.eq.s32.totalorder %s34, 7
      %p346 = scmp.ne.s32.totalorder %s341, %s343
      %p347 = scmp.eq.s32.totalorder %s34, 0
      %p348 = por %p346, %p347
      %p349 = scmp.ne.s32.totalorder %s341, %s343
      %p350 = scmp.eq.s32.totalorder %s39, 7
      %p351 = por %p349, %p350
      %p352 = scmp.ne.s32.totalorder %s343, %s344
      %p353 = scmp.eq.s32.totalorder %s39, 0
      %p354 = por %p352, %p353
      %p355 = scmp.ne.s32.totalorder %s343, %s344
      %p356 = scmp.eq.s32.totalorder %s40, 7
      %p357 = por %p355, %p356
      %p359 = scmp.ne.s32.totalorder %s344, %s358
      %p360 = scmp.eq.s32.totalorder %s40, 0
      %p361 = por %p359, %p360
      %s362 = ssub.s32 %s41, %s60
      %s363 = ssub.s32 %s42, %s56
      %s364 = sor.u32 %s362, %s363
      %p365 = scmp.eq.s32.totalorder %s364, 0
      %s367 = sadd.s32 %s366, 1
      %s368 = scalar_select %p365, %s366, %s367
      %p371 = pneg %p365
      %p372 = scmp.eq.s32.totalorder %s34, 7
      %p373 = por %p371, %p372
      %p374 = scmp.ne.s32.totalorder %s366, %s369
      %p375 = scmp.eq.s32.totalorder %s34, 0
      %p376 = por %p374, %p375
      %p377 = scmp.ne.s32.totalorder %s366, %s369
      %p378 = scmp.eq.s32.totalorder %s39, 7
      %p379 = por %p377, %p378
      %p380 = scmp.ne.s32.totalorder %s369, %s370
      %p381 = scmp.eq.s32.totalorder %s39, 0
      %p382 = por %p380, %p381
      %p383 = scmp.ne.s32.totalorder %s369, %s370
      %p384 = scmp.eq.s32.totalorder %s40, 7
      %p385 = por %p383, %p384
      %p387 = scmp.ne.s32.totalorder %s370, %s386
      %p388 = scmp.eq.s32.totalorder %s40, 0
      %p389 = por %p387, %p388
      %p390 = scmp.le.s32.totalorder 1, %s34
      %p391 = scmp.lt.s32.totalorder %s34, 9
      %p392 = pnand %p390, %p391
      %p393 = pneg %p392
      // Predicated region
      $region9: #{joint_transformer_final_block.9} parent=5 // pred_check
        _
      $region10: #{joint_transformer_final_block.9} parent=5 // pred_check_branch
        %395 = sbr.rel (%p392) target = $region12
      $region11: #{joint_transformer_final_block.9} parent=5 // pred_region
        %s396 = ssub.s32 %s34, 1
        // Predicated region
        $region13: #{joint_transformer_final_block.9} parent=11 // pred_check
          %p397 = pneg %p234
        $region14: #{joint_transformer_final_block.9} parent=11 // pred_check_branch
          %399 = sbr.rel (%p397) target = $region16
        $region15: #{joint_transformer_final_block.9} parent=11 // pred_region
          %s401 = ssub.s32 512, 512
          %402 = vsyncadd [#allocation15], %s401
          %s403 = sshll.u32 [#allocation16], 4
          %s404 = int_to_ptr.vmem [resolvable:$true] %s403
          %409 = dma.hbm_to_vmem [thread:$0]  %s6, 512, %s404, [#allocation15], 64, 64, 4
        $region16: #{joint_transformer_final_block.9} parent=11 // pred_fallthru
          _
        // Predicated region
        $region17: #{joint_transformer_final_block.9} parent=11 // pred_check
          %p410 = pneg %p255
        $region18: #{joint_transformer_final_block.9} parent=11 // pred_check_branch
          %412 = sbr.rel (%p410) target = $region20
        $region19: #{joint_transformer_final_block.9} parent=11 // pred_region
          %s414 = ssub.s32 16, 16
          %415 = vsyncadd [#allocation18], %s414
          %s417 = sshll.u32 [#allocation17], 4
          %s418 = int_to_ptr.vmem [resolvable:$true] %s417
          %420 = dma.hbm_to_vmem [thread:$0]  %s7, 16, %s418, [#allocation18]
        $region20: #{joint_transformer_final_block.9} parent=11 // pred_fallthru
          _
        // Predicated region
        $region21: #{joint_transformer_final_block.9} parent=11 // pred_check
          %p421 = pneg %p354
        $region22: #{joint_transformer_final_block.9} parent=11 // pred_check_branch
          %423 = sbr.rel (%p421) target = $region24
        $region23: #{joint_transformer_final_block.9} parent=11 // pred_region
          %s425 = ssub.s32 16, 16
          %426 = vsyncadd [#allocation15], %s425
          %s428 = sshll.u32 [#allocation22], 4
          %s429 = int_to_ptr.vmem [resolvable:$true] %s428
          %431 = dma.hbm_to_vmem [thread:$0]  %s11, 16, %s429, [#allocation15]
        $region24: #{joint_transformer_final_block.9} parent=11 // pred_fallthru
          _
      $region12: #{joint_transformer_final_block.9} parent=5 // pred_fallthru
        _
      %p432 = scmp.lt.s32.totalorder %s34, 8
      // Predicated region
      $region25: #{joint_transformer_final_block.9} parent=5 // pred_check
        %p433 = pneg %p432
      $region26: #{joint_transformer_final_block.9} parent=5 // pred_check_branch
        %435 = sbr.rel (%p433) target = $region28
      $region27: #{joint_transformer_final_block.9} parent=5 // pred_region
        // Predicated region
        $region29: #{joint_transformer_final_block.9} parent=27 // pred_check
          %p436 = pneg %p75
        $region30: #{joint_transformer_final_block.9} parent=27 // pred_check_branch
          %438 = sbr.rel (%p436) target = $region32
        $region31: #{joint_transformer_final_block.9} parent=27 // pred_region
          %s439 = sand.u32 %s34, 1
          %s440 = scalar_lea.sflag [#allocation6], %s439
          %s441 = sand.u32 %s65, 1
          %s442 = smul.addr %s441, 4
          %s443 = scalar_lea.vmem [#allocation5], %s442
          %s445 = ssub.s32 64, 64
          %446 = vsyncadd %s440, %s445
          %s447 = smul.addr %s41, 2
          %s448 = sadd.s32 %s42, %s447
          %s449 = smul.addr %s448, 64
          %s450 = scalar_lea.hbm %s0, %s449
          %s452 = sshll.u32 %s443, 4
          %s453 = int_to_ptr.vmem [resolvable:$true] %s452
          %455 = dma.hbm_to_vmem [thread:$0]  %s450, 64, %s453, %s440
        $region32: #{joint_transformer_final_block.9} parent=27 // pred_fallthru
          _
        // Predicated region
        $region33: #{joint_transformer_final_block.9} parent=27 // pred_check
          %p456 = pneg %p103
        $region34: #{joint_transformer_final_block.9} parent=27 // pred_check_branch
          %458 = sbr.rel (%p456) target = $region36
        $region35: #{joint_transformer_final_block.9} parent=27 // pred_region
          %s459 = sand.u32 %s34, 1
          %s460 = scalar_lea.sflag [#allocation9], %s459
          %s461 = sand.u32 %s93, 1
          %s462 = smul.addr %s461, 8
          %s463 = scalar_lea.vmem [#allocation8], %s462
          %s465 = ssub.s32 128, 128
          %466 = vsyncadd %s460, %s465
          %s467 = smul.addr %s41, 2
          %s468 = sadd.s32 %s42, %s467
          %s469 = smul.addr %s468, 128
          %s470 = scalar_lea.hbm %s1, %s469
          %s472 = sshll.u32 %s463, 4
          %s473 = int_to_ptr.vmem [resolvable:$true] %s472
          %475 = dma.hbm_to_vmem [thread:$0]  %s470, 128, %s473, %s460
        $region36: #{joint_transformer_final_block.9} parent=27 // pred_fallthru
          _
        // Predicated region
        $region37: #{joint_transformer_final_block.9} parent=27 // pred_check
          %p476 = pneg %p129
        $region38: #{joint_transformer_final_block.9} parent=27 // pred_check_branch
          %478 = sbr.rel (%p476) target = $region40
        $region39: #{joint_transformer_final_block.9} parent=27 // pred_region
          %s479 = sand.u32 %s34, 1
          %s480 = scalar_lea.sflag [#allocation9], %s479
          %s481 = sand.u32 %s119, 1
          %s482 = scalar_lea.vmem [#allocation10], %s481
          %s484 = ssub.s32 16, 16
          %485 = vsyncadd %s480, %s484
          %s486 = smul.addr %s41, 16
          %s487 = scalar_lea.hbm %s2, %s486
          %s489 = sshll.u32 %s482, 4
          %s490 = int_to_ptr.vmem [resolvable:$true] %s489
          %492 = dma.hbm_to_vmem [thread:$0]  %s487, 16, %s490, %s480
        $region40: #{joint_transformer_final_block.9} parent=27 // pred_fallthru
          _
        // Predicated region
        $region41: #{joint_transformer_final_block.9} parent=27 // pred_check
          %p493 = pneg %p155
        $region42: #{joint_transformer_final_block.9} parent=27 // pred_check_branch
          %495 = sbr.rel (%p493) target = $region44
        $region43: #{joint_transformer_final_block.9} parent=27 // pred_region
          %s496 = sand.u32 %s34, 1
          %s497 = scalar_lea.sflag [#allocation12], %s496
          %s498 = sand.u32 %s145, 1
          %s499 = scalar_lea.vmem [#allocation11], %s498
          %s501 = ssub.s32 16, 16
          %502 = vsyncadd %s497, %s501
          %s503 = smul.addr %s41, 16
          %s504 = scalar_lea.hbm %s3, %s503
          %s506 = sshll.u32 %s499, 4
          %s507 = int_to_ptr.vmem [resolvable:$true] %s506
          %509 = dma.hbm_to_vmem [thread:$0]  %s504, 16, %s507, %s497
        $region44: #{joint_transformer_final_block.9} parent=27 // pred_fallthru
          _
        // Predicated region
        $region45: #{joint_transformer_final_block.9} parent=27 // pred_check
          %p510 = pneg %p181
        $region46: #{joint_transformer_final_block.9} parent=27 // pred_check_branch
          %512 = sbr.rel (%p510) target = $region48
        $region47: #{joint_transformer_final_block.9} parent=27 // pred_region
          %s513 = sand.u32 %s34, 1
          %s514 = scalar_lea.sflag [#allocation12], %s513
          %s515 = sand.u32 %s171, 1
          %s516 = scalar_lea.vmem [#allocation13], %s515
          %s518 = ssub.s32 16, 16
          %519 = vsyncadd %s514, %s518
          %s520 = smul.addr %s41, 16
          %s521 = scalar_lea.hbm %s4, %s520
          %s523 = sshll.u32 %s516, 4
          %s524 = int_to_ptr.vmem [resolvable:$true] %s523
          %526 = dma.hbm_to_vmem [thread:$0]  %s521, 16, %s524, %s514
        $region48: #{joint_transformer_final_block.9} parent=27 // pred_fallthru
          _
        // Predicated region
        $region49: #{joint_transformer_final_block.9} parent=27 // pred_check
          %p527 = pneg %p207
        $region50: #{joint_transformer_final_block.9} parent=27 // pred_check_branch
          %529 = sbr.rel (%p527) target = $region52
        $region51: #{joint_transformer_final_block.9} parent=27 // pred_region
          %s530 = sand.u32 %s34, 1
          %s531 = scalar_lea.sflag [#allocation15], %s530
          %s532 = sand.u32 %s197, 1
          %s533 = scalar_lea.vmem [#allocation14], %s532
          %s535 = ssub.s32 16, 16
          %536 = vsyncadd %s531, %s535
          %s537 = smul.addr %s41, 16
          %s538 = scalar_lea.hbm %s5, %s537
          %s540 = sshll.u32 %s533, 4
          %s541 = int_to_ptr.vmem [resolvable:$true] %s540
          %543 = dma.hbm_to_vmem [thread:$0]  %s538, 16, %s541, %s531
        $region52: #{joint_transformer_final_block.9} parent=27 // pred_fallthru
          _
        // Predicated region
        $region53: #{joint_transformer_final_block.9} parent=27 // pred_check
          %p544 = pneg %p275
        $region54: #{joint_transformer_final_block.9} parent=27 // pred_check_branch
          %546 = sbr.rel (%p544) target = $region56
        $region55: #{joint_transformer_final_block.9} parent=27 // pred_region
          %s547 = sand.u32 %s34, 1
          %s548 = scalar_lea.sflag [#allocation6], %s547
          %s549 = sand.u32 %s265, 1
          %s550 = smul.addr %s549, 32
          %s551 = scalar_lea.vmem [#allocation19], %s550
          %s553 = ssub.s32 512, 512
          %554 = vsyncadd %s548, %s553
          %s555 = smul.addr %s43, 64
          %s556 = scalar_lea.hbm %s8, %s555
          %s557 = sshll.u32 %s551, 4
          %s558 = int_to_ptr.vmem [resolvable:$true] %s557
          %563 = dma.hbm_to_vmem [thread:$0]  %s556, 512, %s558, %s548, 128, 64, 4
        $region56: #{joint_transformer_final_block.9} parent=27 // pred_fallthru
          _
        // Predicated region
        $region57: #{joint_transformer_final_block.9} parent=27 // pred_check
          %p564 = pneg %p301
        $region58: #{joint_transformer_final_block.9} parent=27 // pred_check_branch
          %566 = sbr.rel (%p564) target = $region60
        $region59: #{joint_transformer_final_block.9} parent=27 // pred_region
          %s567 = sand.u32 %s34, 1
          %s568 = scalar_lea.sflag [#allocation9], %s567
          %s569 = sand.u32 %s291, 1
          %s570 = scalar_lea.vmem [#allocation20], %s569
          %s572 = ssub.s32 16, 16
          %573 = vsyncadd %s568, %s572
          %s574 = smul.addr %s43, 16
          %s575 = scalar_lea.hbm %s9, %s574
          %s577 = sshll.u32 %s570, 4
          %s578 = int_to_ptr.vmem [resolvable:$true] %s577
          %580 = dma.hbm_to_vmem [thread:$0]  %s575, 16, %s578, %s568
        $region60: #{joint_transformer_final_block.9} parent=27 // pred_fallthru
          _
        // Predicated region
        $region61: #{joint_transformer_final_block.9} parent=27 // pred_check
          %p581 = pneg %p327
        $region62: #{joint_transformer_final_block.9} parent=27 // pred_check_branch
          %583 = sbr.rel (%p581) target = $region64
        $region63: #{joint_transformer_final_block.9} parent=27 // pred_region
          %s584 = sand.u32 %s34, 1
          %s585 = scalar_lea.sflag [#allocation12], %s584
          %s586 = sand.u32 %s317, 1
          %s587 = smul.addr %s586, 64
          %s588 = scalar_lea.vmem [#allocation21], %s587
          %s589 = smul.u32 16, %s43
          %s591 = ssub.s32 1024, 1024
          %592 = vsyncadd %s585, %s591
          %s593 = smul.addr %s589, 64
          %s594 = scalar_lea.hbm %s10, %s593
          %s595 = sshll.u32 %s588, 4
          %s596 = int_to_ptr.vmem [resolvable:$true] %s595
          %601 = dma.hbm_to_vmem [thread:$0]  %s594, 1024, %s596, %s585, 64, 64, 4
        $region64: #{joint_transformer_final_block.9} parent=27 // pred_fallthru
          _
      $region28: #{joint_transformer_final_block.9} parent=5 // pred_fallthru
        _
      %p602 = scmp.le.s32.totalorder 1, %s34
      %p603 = scmp.lt.s32.totalorder %s34, 9
      %p604 = pnand %p602, %p603
      %p605 = pneg %p604
      // Predicated region
      $region65: #{joint_transformer_final_block.9} parent=5 // pred_check
        _
      $region66: #{joint_transformer_final_block.9} parent=5 // pred_check_branch
        %607 = sbr.rel (%p604) target = $region68
      $region67: #{joint_transformer_final_block.9} parent=5 // pred_region
        %s608 = ssub.s32 %s34, 1
        %s609 = sand.u32 %s39, 1
        %s610 = scalar_lea.sflag [#allocation6], %s609
        %s611 = sand.u32 %s68, 1
        %s612 = smul.addr %s611, 4
        %s613 = scalar_lea.vmem [#allocation5], %s612
        // Predicated region
        $region69: #{joint_transformer_final_block.9} parent=67 // pred_check
          %p614 = pneg %p81
        $region70: #{joint_transformer_final_block.9} parent=67 // pred_check_branch
          %616 = sbr.rel (%p614) target = $region72
        $region71: #{joint_transformer_final_block.9} parent=67 // pred_region
          %617 = dma.done %s610, 64
        $region72: #{joint_transformer_final_block.9} parent=67 // pred_fallthru
          _
        %s618 = sand.u32 %s39, 1
        %s619 = scalar_lea.sflag [#allocation9], %s618
        %s620 = sand.u32 %s96, 1
        %s621 = smul.addr %s620, 8
        %s622 = scalar_lea.vmem [#allocation8], %s621
        // Predicated region
        $region73: #{joint_transformer_final_block.9} parent=67 // pred_check
          %p623 = pneg %p109
        $region74: #{joint_transformer_final_block.9} parent=67 // pred_check_branch
          %625 = sbr.rel (%p623) target = $region76
        $region75: #{joint_transformer_final_block.9} parent=67 // pred_region
          %626 = dma.done %s619, 128
        $region76: #{joint_transformer_final_block.9} parent=67 // pred_fallthru
          _
        %s627 = sand.u32 %s39, 1
        %s628 = scalar_lea.sflag [#allocation9], %s627
        %s629 = sand.u32 %s122, 1
        %s630 = scalar_lea.vmem [#allocation10], %s629
        // Predicated region
        $region77: #{joint_transformer_final_block.9} parent=67 // pred_check
          %p631 = pneg %p135
        $region78: #{joint_transformer_final_block.9} parent=67 // pred_check_branch
          %633 = sbr.rel (%p631) target = $region80
        $region79: #{joint_transformer_final_block.9} parent=67 // pred_region
          %634 = dma.done %s628, 16
        $region80: #{joint_transformer_final_block.9} parent=67 // pred_fallthru
          _
        %s635 = sand.u32 %s39, 1
        %s636 = scalar_lea.sflag [#allocation12], %s635
        %s637 = sand.u32 %s148, 1
        %s638 = scalar_lea.vmem [#allocation11], %s637
        // Predicated region
        $region81: #{joint_transformer_final_block.9} parent=67 // pred_check
          %p639 = pneg %p161
        $region82: #{joint_transformer_final_block.9} parent=67 // pred_check_branch
          %641 = sbr.rel (%p639) target = $region84
        $region83: #{joint_transformer_final_block.9} parent=67 // pred_region
          %642 = dma.done %s636, 16
        $region84: #{joint_transformer_final_block.9} parent=67 // pred_fallthru
          _
        %s643 = sand.u32 %s39, 1
        %s644 = scalar_lea.sflag [#allocation12], %s643
        %s645 = sand.u32 %s174, 1
        %s646 = scalar_lea.vmem [#allocation13], %s645
        // Predicated region
        $region85: #{joint_transformer_final_block.9} parent=67 // pred_check
          %p647 = pneg %p187
        $region86: #{joint_transformer_final_block.9} parent=67 // pred_check_branch
          %649 = sbr.rel (%p647) target = $region88
        $region87: #{joint_transformer_final_block.9} parent=67 // pred_region
          %650 = dma.done %s644, 16
        $region88: #{joint_transformer_final_block.9} parent=67 // pred_fallthru
          _
        %s651 = sand.u32 %s39, 1
        %s652 = scalar_lea.sflag [#allocation15], %s651
        %s653 = sand.u32 %s200, 1
        %s654 = scalar_lea.vmem [#allocation14], %s653
        // Predicated region
        $region89: #{joint_transformer_final_block.9} parent=67 // pred_check
          %p655 = pneg %p213
        $region90: #{joint_transformer_final_block.9} parent=67 // pred_check_branch
          %657 = sbr.rel (%p655) target = $region92
        $region91: #{joint_transformer_final_block.9} parent=67 // pred_region
          %658 = dma.done %s652, 16
        $region92: #{joint_transformer_final_block.9} parent=67 // pred_fallthru
          _
        // Predicated region
        $region93: #{joint_transformer_final_block.9} parent=67 // pred_check
          %p659 = pneg %p234
        $region94: #{joint_transformer_final_block.9} parent=67 // pred_check_branch
          %661 = sbr.rel (%p659) target = $region96
        $region95: #{joint_transformer_final_block.9} parent=67 // pred_region
          %662 = dma.done [#allocation15], 512
        $region96: #{joint_transformer_final_block.9} parent=67 // pred_fallthru
          _
        // Predicated region
        $region97: #{joint_transformer_final_block.9} parent=67 // pred_check
          %p663 = pneg %p255
        $region98: #{joint_transformer_final_block.9} parent=67 // pred_check_branch
          %665 = sbr.rel (%p663) target = $region100
        $region99: #{joint_transformer_final_block.9} parent=67 // pred_region
          %666 = dma.done [#allocation18], 16
        $region100: #{joint_transformer_final_block.9} parent=67 // pred_fallthru
          _
        %s667 = sand.u32 %s39, 1
        %s668 = scalar_lea.sflag [#allocation6], %s667
        %s669 = sand.u32 %s268, 1
        %s670 = smul.addr %s669, 32
        %s671 = scalar_lea.vmem [#allocation19], %s670
        // Predicated region
        $region101: #{joint_transformer_final_block.9} parent=67 // pred_check
          %p672 = pneg %p281
        $region102: #{joint_transformer_final_block.9} parent=67 // pred_check_branch
          %674 = sbr.rel (%p672) target = $region104
        $region103: #{joint_transformer_final_block.9} parent=67 // pred_region
          %675 = dma.done %s668, 512
        $region104: #{joint_transformer_final_block.9} parent=67 // pred_fallthru
          _
        %s676 = sand.u32 %s39, 1
        %s677 = scalar_lea.sflag [#allocation9], %s676
        %s678 = sand.u32 %s294, 1
        %s679 = scalar_lea.vmem [#allocation20], %s678
        // Predicated region
        $region105: #{joint_transformer_final_block.9} parent=67 // pred_check
          %p680 = pneg %p307
        $region106: #{joint_transformer_final_block.9} parent=67 // pred_check_branch
          %682 = sbr.rel (%p680) target = $region108
        $region107: #{joint_transformer_final_block.9} parent=67 // pred_region
          %683 = dma.done %s677, 16
        $region108: #{joint_transformer_final_block.9} parent=67 // pred_fallthru
          _
        %s684 = sand.u32 %s39, 1
        %s685 = scalar_lea.sflag [#allocation12], %s684
        %s686 = sand.u32 %s320, 1
        %s687 = smul.addr %s686, 64
        %s688 = scalar_lea.vmem [#allocation21], %s687
        // Predicated region
        $region109: #{joint_transformer_final_block.9} parent=67 // pred_check
          %p689 = pneg %p333
        $region110: #{joint_transformer_final_block.9} parent=67 // pred_check_branch
          %691 = sbr.rel (%p689) target = $region112
        $region111: #{joint_transformer_final_block.9} parent=67 // pred_region
          %692 = dma.done %s685, 1024
        $region112: #{joint_transformer_final_block.9} parent=67 // pred_fallthru
          _
        // Predicated region
        $region113: #{joint_transformer_final_block.9} parent=67 // pred_check
          %p693 = pneg %p354
        $region114: #{joint_transformer_final_block.9} parent=67 // pred_check_branch
          %695 = sbr.rel (%p693) target = $region116
        $region115: #{joint_transformer_final_block.9} parent=67 // pred_region
          %696 = dma.done [#allocation15], 16
        $region116: #{joint_transformer_final_block.9} parent=67 // pred_fallthru
          _
        %s697 = sand.u32 %s39, 1
        %s698 = scalar_lea.sflag [#allocation6], %s697
        %s699 = sand.u32 %s68, 1
        %s700 = smul.addr %s699, 4
        %s701 = scalar_lea.vmem [#allocation5], %s700
        %p702 = pneg %p81
        %p703 = pneg %p78
        %s704 = sand.u32 %s39, 1
        %s705 = scalar_lea.sflag [#allocation9], %s704
        %s706 = sand.u32 %s96, 1
        %s707 = smul.addr %s706, 8
        %s708 = scalar_lea.vmem [#allocation8], %s707
        %p709 = pneg %p109
        %p710 = pneg %p106
        %s711 = sand.u32 %s39, 1
        %s712 = scalar_lea.sflag [#allocation9], %s711
        %s713 = sand.u32 %s122, 1
        %s714 = scalar_lea.vmem [#allocation10], %s713
        %p715 = pneg %p135
        %p716 = pneg %p132
        %s717 = sand.u32 %s39, 1
        %s718 = scalar_lea.sflag [#allocation12], %s717
        %s719 = sand.u32 %s148, 1
        %s720 = scalar_lea.vmem [#allocation11], %s719
        %p721 = pneg %p161
        %p722 = pneg %p158
        %s723 = sand.u32 %s39, 1
        %s724 = scalar_lea.sflag [#allocation12], %s723
        %s725 = sand.u32 %s174, 1
        %s726 = scalar_lea.vmem [#allocation13], %s725
        %p727 = pneg %p187
        %p728 = pneg %p184
        %s729 = sand.u32 %s39, 1
        %s730 = scalar_lea.sflag [#allocation15], %s729
        %s731 = sand.u32 %s200, 1
        %s732 = scalar_lea.vmem [#allocation14], %s731
        %p733 = pneg %p213
        %p734 = pneg %p210
        %p735 = pneg %p234
        %p736 = pneg %p231
        %p737 = pneg %p255
        %p738 = pneg %p252
        %s739 = sand.u32 %s39, 1
        %s740 = scalar_lea.sflag [#allocation6], %s739
        %s741 = sand.u32 %s268, 1
        %s742 = smul.addr %s741, 32
        %s743 = scalar_lea.vmem [#allocation19], %s742
        %p744 = pneg %p281
        %p745 = pneg %p278
        %s746 = sand.u32 %s39, 1
        %s747 = scalar_lea.sflag [#allocation9], %s746
        %s748 = sand.u32 %s294, 1
        %s749 = scalar_lea.vmem [#allocation20], %s748
        %p750 = pneg %p307
        %p751 = pneg %p304
        %s752 = sand.u32 %s39, 1
        %s753 = scalar_lea.sflag [#allocation12], %s752
        %s754 = sand.u32 %s320, 1
        %s755 = smul.addr %s754, 64
        %s756 = scalar_lea.vmem [#allocation21], %s755
        %p757 = pneg %p333
        %p758 = pneg %p330
        %p759 = pneg %p354
        %p760 = pneg %p351
        %p761 = pneg %p382
        %p762 = pneg %p379
        %s763 = sand.u32 %s369, 1
        %s764 = scalar_lea.sflag [#allocation7], %s763
        %s765 = sand.u32 %s369, 1
        %s766 = smul.addr %s765, 8
        %s767 = scalar_lea.vmem [#allocation23], %s766
        %s768 = smul.u32 16, %s46
        %p770 = scmp.eq.s32.totalorder %s46, 0
        // Predicated region
        $region117: #{joint_transformer_final_block.9} parent=67 // pred_check
          %p771 = pneg %p770
        $region118: #{joint_transformer_final_block.9} parent=67 // pred_check_branch
          %773 = sbr.rel (%p771) target = $region120
        $region119: #{joint_transformer_final_block.9} parent=67 // pred_region
          %v774 = vld [vmem:[%s613] sm:$0xf]
          %v775 = vld [vmem:[#allocation16] sm:$0xf]
          %v776 = vld [vmem:[#allocation16 + $0x4] sm:$0xf]
          %v777 = vld [vmem:[#allocation16 + $0x8] sm:$0xf]
          %v778 = vld [vmem:[#allocation16 + $0xc] sm:$0xf]
          %v779 = vld [vmem:[#allocation16 + $0x10] sm:$0xf]
          %v780 = vld [vmem:[#allocation16 + $0x14] sm:$0xf]
          %v781 = vld [vmem:[#allocation16 + $0x18] sm:$0xf]
          %v782 = vld [vmem:[#allocation16 + $0x1c] sm:$0xf]
          %v783 = vld [vmem:[#allocation17] sm:$0x1]
          %v785 = vlaneseq
          %v786 = vshrl.u32 %v785, 7
          %v787 = vsub.s32 0, %v786
          %v788 = vrot.slane %v783, %v787
          %v798 = vunpack.c.l.b16 %v775
          %v799 = vunpack.c.l.b16 %v776
          %v800 = vunpack.c.l.b16 %v777
          %v801 = vunpack.c.l.b16 %v778
          %v802 = vunpack.c.l.b16 %v779
          %v803 = vunpack.c.l.b16 %v780
          %v804 = vunpack.c.l.b16 %v781
          %v805 = vunpack.c.l.b16 %v782
          %v806 = vpack.c.b16 %v799, %v798
          %v807 = vpack.c.b16 %v801, %v800
          %v808 = vpack.c.b16 %v803, %v802
          %v809 = vpack.c.b16 %v805, %v804
          %vm814 = vcmask 523264
          %v816 = vsel %vm814, %v774, 0
          %818 = vmatprep.subr.bf16.mxu0 0
          %819 = vmatpush1.bf16.msra.mxu0 %v806
          %820 = vmatprep.subr.bf16.mxu0 0
          %821 = vmatpush1.bf16.msra.mxu0 %v807
          %822 = vmatprep.subr.bf16.mxu0 0
          %823 = vmatpush1.bf16.msra.mxu0 %v808
          %824 = vmatprep.subr.bf16.mxu0 0
          %825 = vmatpush1.bf16.msra.mxu0 %v809
          %826 = vmatprep.subr.bf16.mxu0 0
          %827 = vmatpush1.bf16.msra.mxu0 0
          %828 = vmatprep.subr.bf16.mxu0 0
          %829 = vmatpush1.bf16.msra.mxu0 0
          %830 = vmatprep.subr.bf16.mxu0 0
          %831 = vmatpush1.bf16.msra.mxu0 0
          %832 = vmatprep.subr.bf16.mxu0 0
          %833 = vmatpush1.bf16.msra.mxu0 0
          %834 = vmatprep.subr.bf16.mxu0 0
          %835 = vmatpush1.bf16.msra.mxu0 0
          %836 = vmatprep.subr.bf16.mxu0 0
          %837 = vmatpush1.bf16.msra.mxu0 0
          %838 = vmatprep.subr.bf16.mxu0 0
          %839 = vmatpush1.bf16.msra.mxu0 0
          %840 = vmatprep.subr.bf16.mxu0 0
          %841 = vmatpush1.bf16.msra.mxu0 0
          %842 = vmatprep.subr.bf16.mxu0 0
          %843 = vmatpush1.bf16.msra.mxu0 0
          %844 = vmatprep.subr.bf16.mxu0 0
          %845 = vmatpush1.bf16.msra.mxu0 0
          %846 = vmatprep.subr.bf16.mxu0 0
          %847 = vmatpush1.bf16.msra.mxu0 0
          %848 = vmatprep.subr.bf16.mxu0 0
          %849 = vmatpush1.bf16.msra.mxu0 0
          %850 = vmatprep.mubr.bf16.mxu0 0
          %851 = vmatmul.mubr.bf16.gmra.mrb[0].mxu0 %v816
          %v852 = vpop.f32.mrb[0].mxu0
          %v853 = vadd.f32 %v788, %v852
          %v854 = vpop.f32.mrb[0].mxu0
          %v855 = vpop.f32.mrb[0].mxu0
          %v856 = vpop.f32.mrb[0].mxu0
          %857 = vdwg.mxu0
          %v858 = vld [vmem:[%s622] sm:$0xff]
          %v859 = vld [vmem:[%s630] sm:$0x1]
          %v861 = vlaneseq
          %v862 = vshrl.u32 %v861, 7
          %v863 = vsub.s32 0, %v862
          %v864 = vrot.slane %v859, %v863
          %v866 = vmul.f32 %v864, %v853
          %v867 = vadd.f32 %v858, %v866
          %868 = vst.msk [vmem:[#allocation2] sm:$0xff] %vm814, %v867
          %v869 = vsel %vm814, %v867, 0.0
          %870 = vadd.xlane.f32.xlu0 %v869
          %v871 = vpop.xlane.xlu0 %870
          %v872 = vrcp.pop 64.0
          %v873 = vmul.f32 %v871, %v872
          %v874 = vsub.f32 %v867, %v873
          %v875 = vmul.f32 %v874, %v874
          %v876 = vsel %vm814, %v875, 0.0
          %877 = vadd.xlane.f32.xlu0 %v876
          %v878 = vpop.xlane.xlu0 %877
          %v879 = vmul.f32 %v878, %v872
          %v880 = vadd.f32 %v879, 1e-06
          %v881 = vrsqrt.pop %v880
          %v882 = vmul.f32 %v874, %v881
          %v883 = vld [vmem:[%s646] sm:$0x1]
          %v884 = vadd.f32 %v883, 1.0
          %v886 = vlaneseq
          %v887 = vshrl.u32 %v886, 7
          %v888 = vsub.s32 0, %v887
          %v889 = vrot.slane %v884, %v888
          %v891 = vmul.f32 %v882, %v889
          %v892 = vld [vmem:[%s638] sm:$0x1]
          %v894 = vlaneseq
          %v895 = vshrl.u32 %v894, 7
          %v896 = vsub.s32 0, %v895
          %v897 = vrot.slane %v892, %v896
          %v899 = vadd.f32 %v891, %v897
          %v900 = vpack.c.bf16 %v899, %v899
          %vm901 = vcmask 519168
          %902 = vst.msk [vmem:[#allocation3] sm:$0xf] %vm901, %v900
          %903 = vst.msk [vmem:[#allocation4] sm:$0xff] %vm814, 0.0
        $region120: #{joint_transformer_final_block.9} parent=67 // pred_fallthru
          _
        %v904 = vld [vmem:[#allocation3] sm:$0xf]
        %v905 = vld [vmem:[%s671] sm:$0xf]
        %v906 = vld [vmem:[%s671 + $0x4] sm:$0xf]
        %v907 = vld [vmem:[%s671 + $0x8] sm:$0xf]
        %v908 = vld [vmem:[%s671 + $0xc] sm:$0xf]
        %v909 = vld [vmem:[%s671 + $0x10] sm:$0xf]
        %v910 = vld [vmem:[%s671 + $0x14] sm:$0xf]
        %v911 = vld [vmem:[%s671 + $0x18] sm:$0xf]
        %v912 = vld [vmem:[%s671 + $0x1c] sm:$0xf]
        %v913 = vld [vmem:[%s679] sm:$0x1]
        %v915 = vlaneseq
        %v916 = vshrl.u32 %v915, 7
        %v917 = vsub.s32 0, %v916
        %v918 = vrot.slane %v913, %v917
        %v928 = vunpack.c.l.b16 %v905
        %v929 = vunpack.c.l.b16 %v906
        %v930 = vunpack.c.l.b16 %v907
        %v931 = vunpack.c.l.b16 %v908
        %v932 = vunpack.c.l.b16 %v909
        %v933 = vunpack.c.l.b16 %v910
        %v934 = vunpack.c.l.b16 %v911
        %v935 = vunpack.c.l.b16 %v912
        %v936 = vpack.c.b16 %v929, %v928
        %v937 = vpack.c.b16 %v931, %v930
        %v938 = vpack.c.b16 %v933, %v932
        %v939 = vpack.c.b16 %v935, %v934
        %vm944 = vcmask 523264
        %v946 = vsel %vm944, %v904, 0
        %948 = vmatprep.subr.bf16.mxu0 0
        %949 = vmatpush1.bf16.msra.mxu0 %v936
        %950 = vmatprep.subr.bf16.mxu0 0
        %951 = vmatpush1.bf16.msra.mxu0 %v937
        %952 = vmatprep.subr.bf16.mxu0 0
        %953 = vmatpush1.bf16.msra.mxu0 %v938
        %954 = vmatprep.subr.bf16.mxu0 0
        %955 = vmatpush1.bf16.msra.mxu0 %v939
        %956 = vmatprep.subr.bf16.mxu0 0
        %957 = vmatpush1.bf16.msra.mxu0 0
        %958 = vmatprep.subr.bf16.mxu0 0
        %959 = vmatpush1.bf16.msra.mxu0 0
        %960 = vmatprep.subr.bf16.mxu0 0
        %961 = vmatpush1.bf16.msra.mxu0 0
        %962 = vmatprep.subr.bf16.mxu0 0
        %963 = vmatpush1.bf16.msra.mxu0 0
        %964 = vmatprep.subr.bf16.mxu0 0
        %965 = vmatpush1.bf16.msra.mxu0 0
        %966 = vmatprep.subr.bf16.mxu0 0
        %967 = vmatpush1.bf16.msra.mxu0 0
        %968 = vmatprep.subr.bf16.mxu0 0
        %969 = vmatpush1.bf16.msra.mxu0 0
        %970 = vmatprep.subr.bf16.mxu0 0
        %971 = vmatpush1.bf16.msra.mxu0 0
        %972 = vmatprep.subr.bf16.mxu0 0
        %973 = vmatpush1.bf16.msra.mxu0 0
        %974 = vmatprep.subr.bf16.mxu0 0
        %975 = vmatpush1.bf16.msra.mxu0 0
        %976 = vmatprep.subr.bf16.mxu0 0
        %977 = vmatpush1.bf16.msra.mxu0 0
        %978 = vmatprep.subr.bf16.mxu0 0
        %979 = vmatpush1.bf16.msra.mxu0 0
        %980 = vmatprep.mubr.bf16.mxu0 0
        %981 = vmatmul.mubr.bf16.gmra.mrb[0].mxu0 %v946
        %v982 = vpop.f32.mrb[0].mxu0
        %v983 = vadd.f32 %v918, %v982
        %v984 = vpop.f32.mrb[0].mxu0
        %v985 = vpop.f32.mrb[0].mxu0
        %v986 = vpop.f32.mrb[0].mxu0
        %987 = vdwg.mxu0
        %v988 = vld [vmem:[#allocation4] sm:$0xff]
        %v989 = vmul.f32 %v983, 0.5
        %v990 = vmul.f32 %v983, 0.044715
        %v991 = vmul.f32 %v990, %v983
        %v992 = vmul.f32 %v991, %v983
        %v993 = vadd.f32 %v983, %v992
        %v994 = vmul.f32 %v993, 0.7978846
        %v995 = vtanh.pop %v994
        %v996 = vadd.f32 %v995, 1.0
        %v997 = vmul.f32 %v989, %v996
        %v998 = vpack.c.bf16 %v997, %v997
        %v999 = vld [vmem:[%s688] sm:$0xf]
        %v1000 = vld [vmem:[%s688 + $0x4] sm:$0xf]
        %v1001 = vld [vmem:[%s688 + $0x8] sm:$0xf]
        %v1002 = vld [vmem:[%s688 + $0xc] sm:$0xf]
        %v1003 = vld [vmem:[%s688 + $0x10] sm:$0xf]
        %v1004 = vld [vmem:[%s688 + $0x14] sm:$0xf]
        %v1005 = vld [vmem:[%s688 + $0x18] sm:$0xf]
        %v1006 = vld [vmem:[%s688 + $0x1c] sm:$0xf]
        %v1007 = vld [vmem:[%s688 + $0x20] sm:$0xf]
        %v1008 = vld [vmem:[%s688 + $0x24] sm:$0xf]
        %v1009 = vld [vmem:[%s688 + $0x28] sm:$0xf]
        %v1010 = vld [vmem:[%s688 + $0x2c] sm:$0xf]
        %v1011 = vld [vmem:[%s688 + $0x30] sm:$0xf]
        %v1012 = vld [vmem:[%s688 + $0x34] sm:$0xf]
        %v1013 = vld [vmem:[%s688 + $0x38] sm:$0xf]
        %v1014 = vld [vmem:[%s688 + $0x3c] sm:$0xf]
        %v1031 = vunpack.c.l.b16 %v999
        %v1032 = vunpack.c.l.b16 %v1000
        %v1033 = vunpack.c.l.b16 %v1001
        %v1034 = vunpack.c.l.b16 %v1002
        %v1035 = vunpack.c.l.b16 %v1003
        %v1036 = vunpack.c.l.b16 %v1004
        %v1037 = vunpack.c.l.b16 %v1005
        %v1038 = vunpack.c.l.b16 %v1006
        %v1039 = vunpack.c.l.b16 %v1007
        %v1040 = vunpack.c.l.b16 %v1008
        %v1041 = vunpack.c.l.b16 %v1009
        %v1042 = vunpack.c.l.b16 %v1010
        %v1043 = vunpack.c.l.b16 %v1011
        %v1044 = vunpack.c.l.b16 %v1012
        %v1045 = vunpack.c.l.b16 %v1013
        %v1046 = vunpack.c.l.b16 %v1014
        %v1047 = vpack.c.b16 %v1032, %v1031
        %v1048 = vpack.c.b16 %v1034, %v1033
        %v1049 = vpack.c.b16 %v1036, %v1035
        %v1050 = vpack.c.b16 %v1038, %v1037
        %v1051 = vpack.c.b16 %v1040, %v1039
        %v1052 = vpack.c.b16 %v1042, %v1041
        %v1053 = vpack.c.b16 %v1044, %v1043
        %v1054 = vpack.c.b16 %v1046, %v1045
        %1063 = vmatprep.subr.bf16.mxu0 0
        %1064 = vmatpush1.bf16.msra.mxu0 %v1047
        %1065 = vmatprep.subr.bf16.mxu0 0
        %1066 = vmatpush1.bf16.msra.mxu0 %v1048
        %1067 = vmatprep.subr.bf16.mxu0 0
        %1068 = vmatpush1.bf16.msra.mxu0 %v1049
        %1069 = vmatprep.subr.bf16.mxu0 0
        %1070 = vmatpush1.bf16.msra.mxu0 %v1050
        %1071 = vmatprep.subr.bf16.mxu0 0
        %1072 = vmatpush1.bf16.msra.mxu0 %v1051
        %1073 = vmatprep.subr.bf16.mxu0 0
        %1074 = vmatpush1.bf16.msra.mxu0 %v1052
        %1075 = vmatprep.subr.bf16.mxu0 0
        %1076 = vmatpush1.bf16.msra.mxu0 %v1053
        %1077 = vmatprep.subr.bf16.mxu0 0
        %1078 = vmatpush1.bf16.msra.mxu0 %v1054
        %1079 = vmatprep.subr.bf16.mxu0 0
        %1080 = vmatpush1.bf16.msra.mxu0 0
        %1081 = vmatprep.subr.bf16.mxu0 0
        %1082 = vmatpush1.bf16.msra.mxu0 0
        %1083 = vmatprep.subr.bf16.mxu0 0
        %1084 = vmatpush1.bf16.msra.mxu0 0
        %1085 = vmatprep.subr.bf16.mxu0 0
        %1086 = vmatpush1.bf16.msra.mxu0 0
        %1087 = vmatprep.subr.bf16.mxu0 0
        %1088 = vmatpush1.bf16.msra.mxu0 0
        %1089 = vmatprep.subr.bf16.mxu0 0
        %1090 = vmatpush1.bf16.msra.mxu0 0
        %1091 = vmatprep.subr.bf16.mxu0 0
        %1092 = vmatpush1.bf16.msra.mxu0 0
        %1093 = vmatprep.subr.bf16.mxu0 0
        %1094 = vmatpush1.bf16.msra.mxu0 0
        %1095 = vmatprep.mubr.bf16.mxu0 0
        %1096 = vmatmul.mubr.bf16.gmra.mrb[0].mxu0 %v998
        %v1097 = vpop.f32.mrb[0].mxu0
        %v1098 = vadd.f32 0.0, %v1097
        %v1099 = vpop.f32.mrb[0].mxu0
        %v1100 = vpop.f32.mrb[0].mxu0
        %v1101 = vpop.f32.mrb[0].mxu0
        %1102 = vdwg.mxu0
        %v1103 = vadd.f32 %v988, %v1098
        %1104 = vst.msk [vmem:[#allocation4] sm:$0xff] %vm944, %v1103
        %p1105 = scmp.eq.s32.totalorder %s46, 1
        // Predicated region
        $region121: #{joint_transformer_final_block.9} parent=67 // pred_check
          %p1106 = pneg %p1105
        $region122: #{joint_transformer_final_block.9} parent=67 // pred_check_branch
          %1108 = sbr.rel (%p1106) target = $region124
        $region123: #{joint_transformer_final_block.9} parent=67 // pred_region
          %v1109 = vld [vmem:[#allocation4] sm:$0xff]
          %v1110 = vld [vmem:[#allocation22] sm:$0x1]
          %v1112 = vlaneseq
          %v1113 = vshrl.u32 %v1112, 7
          %v1114 = vsub.s32 0, %v1113
          %v1115 = vrot.slane %v1110, %v1114
          %v1117 = vadd.f32 %v1109, %v1115
          %v1118 = vld [vmem:[#allocation2] sm:$0xff]
          %v1119 = vld [vmem:[%s654] sm:$0x1]
          %v1121 = vlaneseq
          %v1122 = vshrl.u32 %v1121, 7
          %v1123 = vsub.s32 0, %v1122
          %v1124 = vrot.slane %v1119, %v1123
          %v1126 = vmul.f32 %v1124, %v1117
          %v1127 = vadd.f32 %v1118, %v1126
          %1128 = vst.msk [vmem:[%s767] sm:$0xff] %vm944, %v1127
        $region124: #{joint_transformer_final_block.9} parent=67 // pred_fallthru
          _
        %s1129 = sand.u32 %s369, 1
        %s1130 = scalar_lea.sflag [#allocation7], %s1129
        %s1131 = sand.u32 %s369, 1
        %s1132 = smul.addr %s1131, 8
        %s1133 = scalar_lea.vmem [#allocation23], %s1132
        // Predicated region
        $region125: #{joint_transformer_final_block.9} parent=67 // pred_check
          %p1134 = pneg %p379
        $region126: #{joint_transformer_final_block.9} parent=67 // pred_check_branch
          %1136 = sbr.rel (%p1134) target = $region128
        $region127: #{joint_transformer_final_block.9} parent=67 // pred_region
          %s1138 = ssub.s32 128, 128
          %1139 = vsyncadd %s1130, %s1138
          %s1140 = smul.addr %s44, 2
          %s1141 = sadd.s32 %s45, %s1140
          %s1142 = smul.addr %s1141, 128
          %s1143 = scalar_lea.hbm %s12, %s1142
          %s1145 = sshll.u32 %s1133, 4
          %s1146 = int_to_ptr.vmem [resolvable:$true] %s1145
          %1148 = dma.vmem_to_hbm [thread:$0]  %s1146, 128, %s1143, %s1130
        $region128: #{joint_transformer_final_block.9} parent=67 // pred_fallthru
          _
      $region68: #{joint_transformer_final_block.9} parent=5 // pred_fallthru
        _
      %p1149 = scmp.le.s32.totalorder 2, %s34
      // Predicated region
      $region129: #{joint_transformer_final_block.9} parent=5 // pred_check
        %p1150 = pneg %p1149
      $region130: #{joint_transformer_final_block.9} parent=5 // pred_check_branch
        %1152 = sbr.rel (%p1150) target = $region132
      $region131: #{joint_transformer_final_block.9} parent=5 // pred_region
        %s1153 = ssub.s32 %s34, 2
        // Predicated region
        $region133: #{joint_transformer_final_block.9} parent=131 // pred_check
          %p1154 = pneg %p385
        $region134: #{joint_transformer_final_block.9} parent=131 // pred_check_branch
          %1156 = sbr.rel (%p1154) target = $region136
        $region135: #{joint_transformer_final_block.9} parent=131 // pred_region
          %s1157 = sand.u32 %s370, 1
          %s1158 = scalar_lea.sflag [#allocation7], %s1157
          %s1159 = sand.u32 %s370, 1
          %s1160 = smul.addr %s1159, 8
          %s1161 = scalar_lea.vmem [#allocation23], %s1160
          %1162 = dma.done %s1158, 128
        $region136: #{joint_transformer_final_block.9} parent=131 // pred_fallthru
          _
      $region132: #{joint_transformer_final_block.9} parent=5 // pred_fallthru
        _
    $region6: #{joint_transformer_final_block.9} parent=1 // loop_footer
      %s38 = sadd.s32 1, %s34
    $region7: #{joint_transformer_final_block.9} parent=1 // loop_footer_branch
      %33 = sbr.rel target = $region3
    $region8: #{joint_transformer_final_block.9} parent=1 // loop_exit
      _
    %1163 = vsyncpa [#allocation6], 1
    %s1164 = scalar_lea.sflag [#allocation6], 1
    %1165 = vsyncpa %s1164, 1
    %1166 = vsyncpa [#allocation9], 1
    %s1167 = scalar_lea.sflag [#allocation9], 1
    %1168 = vsyncpa %s1167, 1
    %1169 = vsyncpa [#allocation12], 1
    %s1170 = scalar_lea.sflag [#allocation12], 1
    %1171 = vsyncpa %s1170, 1
    %1172 = vsyncpa [#allocation15], 1
    %s1173 = scalar_lea.sflag [#allocation15], 1
    %1174 = vsyncpa %s1173, 1
    %1175 = vsyncpa [#allocation18], 1
    %1176 = vsyncpa [#allocation7], 1
    %s1177 = scalar_lea.sflag [#allocation7], 1
    %1178 = vsyncpa %s1177, 1

</llo_original>
